<compile_context>
chip_gen: v6e
topology: v6e:2x2x1
jax: 0.10.0
libtpu: 0.0.40
codegen_flags: <defaults>
</compile_context>

<pallas_src>
import numpy as np
import jax
import jax.numpy as jnp
from jax.experimental import pallas as pl
from jax.experimental.pallas import tpu as pltpu


def _padding(downsample, kernel_size):
    """Compute required padding (same formula as the PyTorch reference)."""
    return max(0, int(np.floor((kernel_size - downsample + 1) / 2)))


def _round_up(x, m):
    return ((x + m - 1) // m) * m


# --------------------------------------------------------------------------
# pallas_call helper: single invocation, whole (tiny) arrays resident in VMEM
# --------------------------------------------------------------------------

def _vmem_call(kernel, out_shape, args, scratch_shapes=()):
    def spec(shape):
        nd = len(shape)
        return pl.BlockSpec(shape, lambda i, _nd=nd: (0,) * _nd)

    return pl.pallas_call(
        kernel,
        out_shape=out_shape,
        grid=(1,),
        in_specs=[spec(a.shape) for a in args],
        out_specs=spec(out_shape.shape),
        scratch_shapes=list(scratch_shapes),
    )(*args)


# --------------------------------------------------------------------------
# glue: parameter preprocessing (weight-sized, negligible XLA ops)
# --------------------------------------------------------------------------

def _fold_bn(bn, eps=1e-5):
    inv = bn['gamma'] / jnp.sqrt(bn['var'] + eps)
    scale = inv.reshape(-1, 1)
    shift = (bn['beta'] - bn['mean'] * inv).reshape(-1, 1)
    return scale, shift


def _flatten_conv_w(w, cpad):
    """(Cout, Cin, K) -> (Cout, K*cpad) matching im2col row layout k*cpad + c."""
    cout, cin, k = w.shape
    wt = jnp.transpose(w, (0, 2, 1))                       # (Cout, K, Cin)
    if cpad > cin:
        wt = jnp.pad(wt, ((0, 0), (0, 0), (0, cpad - cin)))
    return wt.reshape(cout, k * cpad)


def _sel_matrix(batch, l_full, l_out, ds, phase):
    """0/1 matrix S (batch*l_full, batch*l_out): column b*l_out+t selects row
    b*l_full + t*ds + phase.  Used for strided subsampling / maxpool phases."""
    s = np.zeros((batch * l_full, batch * l_out), np.float32)
    for b in range(batch):
        for t in range(l_out):
            s[b * l_full + t * ds + phase, b * l_out + t] = 1.0
    return jnp.asarray(s)


# --------------------------------------------------------------------------
# in-kernel im2col (zero padding done here, in VMEM scratch)
# --------------------------------------------------------------------------

def _im2col_to_scratch(col_ref, h, c, cpad, l_in, l_out, k_taps, pad, batch):
    """col[k*cpad + ch, b*l_out + t] = h[ch, b*l_in + t + k - pad] (0 outside).
    All offsets are static; row blocks are sublane aligned (cpad % 8 == 0)."""
    col_ref[...] = jnp.zeros(col_ref.shape, col_ref.dtype)
    for k in range(k_taps):
        lo = max(0, pad - k)
        hi = min(l_out, l_in + pad - k)
        if hi <= lo:
            continue
        n = hi - lo
        src = lo + k - pad
        for b in range(batch):
            col_ref[k * cpad:k * cpad + c,
                    b * l_out + lo:b * l_out + lo + n] = (
                h[:, b * l_in + src:b * l_in + src + n])


# --------------------------------------------------------------------------
# Fused Pallas kernels
# --------------------------------------------------------------------------

def stem_fused(x2d, conv_w, bn, *, batch, length, ksize, stride):
    """Fused stem: Conv1d(stride, no bias) + BatchNorm1d(eval) + ReLU.
    x2d: (Cin, B*L) packed activations."""
    cout, cin, _ = conv_w.shape
    pad = _padding(stride, ksize)
    lf = length + 2 * pad - ksize + 1                 # stride-1 output length
    lo = (length + 2 * pad - ksize) // stride + 1     # strided output length
    cp = _round_up(cin, 8)
    bn_s, bn_t = _fold_bn(bn)

    args = [x2d, _flatten_conv_w(conv_w, cp), bn_s, bn_t]
    if stride > 1:
        args.append(_sel_matrix(batch, lf, lo, stride, 0))

    def kernel(*refs):
        it = iter(refs)
        x_ref, w_ref, s_ref, t_ref = (next(it) for _ in range(4))
        if stride > 1:
            sel_ref = next(it)
        o_ref = next(it)
        col_ref = next(it)

        _im2col_to_scratch(col_ref, x_ref[...], cin, cp, length, lf, ksize, pad, batch)
        y = jnp.dot(w_ref[...], col_ref[...], preferred_element_type=jnp.float32)
        if stride > 1:
            y = jnp.dot(y, sel_ref[...], preferred_element_type=jnp.float32)
        o_ref[...] = jnp.maximum(y * s_ref[...] + t_ref[...], 0.0)

    out_shape = jax.ShapeDtypeStruct((cout, batch * lo), jnp.float32)
    return _vmem_call(kernel, out_shape, args,
                      [pltpu.VMEM((ksize * cp, batch * lf), jnp.float32)])


def res_block_fused(x2d, p, *, batch, length, ksize, ds):
    """One fused Pallas kernel for a full ResBlock1d (eval mode).
    x2d: (Cin, B*L) packed activations -> returns (Cout, B*Lo)."""
    cout, cin, _ = p['conv1_w'].shape
    p1 = _padding(1, ksize)
    p2 = _padding(ds, ksize)
    l1 = length + 2 * p1 - ksize + 1              # conv1 out (== length, odd K)
    l2f = l1 + 2 * p2 - ksize + 1                 # stride-1 conv2 out
    lo = (l1 + 2 * p2 - ksize) // ds + 1          # strided conv2 out
    assert l1 == length, "conv1 must preserve length (odd kernel size required)"
    assert length // ds == lo, "skip (maxpool) and main path lengths must match"
    cp1 = _round_up(cin, 8)
    cp2 = _round_up(cout, 8)

    has_bn1 = 'bn1' in p
    has_skip_conv = 'skip_w' in p

    bn2_s, bn2_t = _fold_bn(p['bn2'])
    args = [x2d]
    if has_bn1:
        bn1_s, bn1_t = _fold_bn(p['bn1'])
        args += [bn1_s, bn1_t]
    args += [_flatten_conv_w(p['conv1_w'], cp1), bn2_s, bn2_t,
             _flatten_conv_w(p['conv2_w'], cp2), p['conv2_b'].reshape(-1, 1),
             p['se_w1'], p['se_w2']]
    if ds > 1:
        sel_pool = jnp.stack([_sel_matrix(batch, length, lo, ds, j) for j in range(ds)], 0)
        sel_str = _sel_matrix(batch, l2f, lo, ds, 0)
        args += [sel_pool, sel_str]
    if has_skip_conv:
        args += [p['skip_w'][:, :, 0], p['skip_b'].reshape(-1, 1)]

    def kernel(*refs):
        it = iter(refs)
        x_ref = next(it)
        if has_bn1:
            b1s_ref, b1t_ref = next(it), next(it)
        w1_ref = next(it)
        b2s_ref, b2t_ref = next(it), next(it)
        w2_ref, bias2_ref = next(it), next(it)
        sew1_ref, sew2_ref = next(it), next(it)
        if ds > 1:
            selp_ref, sels_ref = next(it), next(it)
        if has_skip_conv:
            skw_ref, skb_ref = next(it), next(it)
        o_ref = next(it)
        col1_ref, col2_ref = next(it), next(it)

        xv = x_ref[...]                                        # (Cin, B*L)

        # ---- skip path: MaxPool1d(ds) [+ 1x1 conv] -----------------------
        if ds > 1:
            skip = jnp.dot(xv, selp_ref[0], preferred_element_type=jnp.float32)
            for j in range(1, ds):
                skip = jnp.maximum(
                    skip, jnp.dot(xv, selp_ref[j], preferred_element_type=jnp.float32))
        else:
            skip = xv
        if has_skip_conv:
            skip = (jnp.dot(skw_ref[...], skip, preferred_element_type=jnp.float32)
                    + skb_ref[...])

        # ---- main path ---------------------------------------------------
        h = xv
        if has_bn1:                              # bn1 + relu (dropout1 = identity)
            h = jnp.maximum(h * b1s_ref[...] + b1t_ref[...], 0.0)
        # conv1 (stride 1, no bias): single im2col matmul
        _im2col_to_scratch(col1_ref, h, cin, cp1, length, l1, ksize, p1, batch)
        y1 = jnp.dot(w1_ref[...], col1_ref[...], preferred_element_type=jnp.float32)
        # bn2 + relu (dropout2 = identity)
        h2 = jnp.maximum(y1 * b2s_ref[...] + b2t_ref[...], 0.0)
        # conv2 (+bias, stride ds): stride-1 im2col matmul, strided column select
        _im2col_to_scratch(col2_ref, h2, cout, cp2, l1, l2f, ksize, p2, batch)
        y2 = jnp.dot(w2_ref[...], col2_ref[...], preferred_element_type=jnp.float32)
        if ds > 1:
            y2 = jnp.dot(y2, sels_ref[...], preferred_element_type=jnp.float32)
        y2 = y2 + bias2_ref[...]

        # ---- SE gate + residual add (per sample; batch is static) --------
        w_se1 = sew1_ref[...]
        w_se2 = sew2_ref[...]
        for b in range(batch):
            seg = y2[:, b * lo:(b + 1) * lo]                   # (Cout, Lo)
            pooled = jnp.mean(seg, axis=-1, keepdims=True)     # (Cout, 1)
            hse = jnp.maximum(
                jnp.dot(w_se1, pooled, preferred_element_type=jnp.float32), 0.0)
            gate = jax.nn.sigmoid(
                jnp.dot(w_se2, hse, preferred_element_type=jnp.float32))
            o_ref[:, b * lo:(b + 1) * lo] = seg * gate + skip[:, b * lo:(b + 1) * lo]

    out_shape = jax.ShapeDtypeStruct((cout, batch * lo), jnp.float32)
    scratch = [pltpu.VMEM((ksize * cp1, batch * l1), jnp.float32),
               pltpu.VMEM((ksize * cp2, batch * l2f), jnp.float32)]
    return _vmem_call(kernel, out_shape, args, scratch)


def bn_relu_2d(x2d, bn):
    """Final eval-mode BatchNorm1d + ReLU on packed (C, B*L) activations."""
    scale, shift = _fold_bn(bn)

    def kernel(x_ref, s_ref, t_ref, o_ref):
        o_ref[...] = jnp.maximum(x_ref[...] * s_ref[...] + t_ref[...], 0.0)

    return _vmem_call(kernel, jax.ShapeDtypeStruct(x2d.shape, jnp.float32),
                      [x2d, scale, shift])


# --------------------------------------------------------------------------
# Model assembly
# --------------------------------------------------------------------------

def resnet1d_forward(x, params, downsampling, ksize):
    """ResNet1d forward (eval mode). x: (B, Cin, L) -> (B, Cf, Lf)."""
    batch, cin, length = x.shape
    # Lane-dense packed layout: (C, B*L); batch folded into the lane axis.
    x2d = jnp.transpose(x, (1, 0, 2)).reshape(cin, batch * length)

    x2d = stem_fused(x2d, params['conv1_w'], params['bn1'],
                     batch=batch, length=length, ksize=ksize,
                     stride=downsampling[0])
    pad0 = _padding(downsampling[0], ksize)
    length = (length + 2 * pad0 - ksize) // downsampling[0] + 1

    for i, p in enumerate(params['blocks']):
        ds = downsampling[i + 1]
        x2d = res_block_fused(x2d, p, batch=batch, length=length, ksize=ksize, ds=ds)
        length = length // ds

    x2d = bn_relu_2d(x2d, params['bn2'])          # final dropout: identity
    cf = x2d.shape[0]
    return jnp.transpose(x2d.reshape(cf, batch, length), (1, 0, 2))


# --------------------------------------------------------------------------
# Deterministic parameter initialization
# --------------------------------------------------------------------------

def _init_bn(key, c):
    k1, k2, k3, k4 = jax.random.split(key, 4)
    return dict(
        gamma=1.0 + 0.1 * jax.random.normal(k1, (c,), jnp.float32),
        beta=0.1 * jax.random.normal(k2, (c,), jnp.float32),
        mean=0.1 * jax.random.normal(k3, (c,), jnp.float32),
        var=1.0 + 0.1 * jnp.abs(jax.random.normal(k4, (c,), jnp.float32)),
    )


def init_params(key, c_in, filter_size, downsampling, ksize, se_reduction):
    keys = iter(jax.random.split(key, 64))

    def nk():
        return next(keys)

    def w(shape):
        return 0.1 * jax.random.normal(nk(), shape, jnp.float32)

    params = {}
    c0 = filter_size[0]
    params['conv1_w'] = w((c0, c_in, ksize))
    params['bn1'] = _init_bn(nk(), c0)

    blocks = []
    n_in = c0
    for i, (fs, ds) in enumerate(zip(filter_size[1:], downsampling[1:])):
        n_out = fs
        p = {}
        if i != 0:
            p['bn1'] = _init_bn(nk(), n_in)
        p['conv1_w'] = w((n_out, n_in, ksize))
        p['bn2'] = _init_bn(nk(), n_out)
        p['conv2_w'] = w((n_out, n_out, ksize))
        p['conv2_b'] = w((n_out,))
        cr = n_out // se_reduction
        p['se_w1'] = w((cr, n_out))
        p['se_w2'] = w((n_out, cr))
        if n_in != n_out:
            p['skip_w'] = w((n_out, n_in, 1))
            p['skip_b'] = w((n_out,))
        blocks.append(p)
        n_in = n_out
    params['blocks'] = blocks
    params['bn2'] = _init_bn(nk(), n_in)
    return params


# --------------------------------------------------------------------------

if __name__ == "__main__":
    # Small deterministic config: input_dim=(4, 64), filter_size=[8, 8, 16],
    # downsampling=[1, 2, 2], kernel_size=7 (odd), se_reduction=4.
    B, C_IN, L = 2, 4, 64
    FILTER_SIZE = [8, 8, 16]
    DOWNSAMPLING = [1, 2, 2]
    KSIZE = 7
    SE_REDUCTION = 4

    root = jax.random.PRNGKey(0)
    k_x, k_p = jax.random.split(root)
    params = init_params(k_p, C_IN, FILTER_SIZE, DOWNSAMPLING, KSIZE, SE_REDUCTION)
    x = jax.random.normal(k_x, (B, C_IN, L), jnp.float32)

    fwd = jax.jit(lambda xx, pp: resnet1d_forward(xx, pp, DOWNSAMPLING, KSIZE))
    out = jax.block_until_ready(fwd(x, params))

    expected_len = L
    for ds in DOWNSAMPLING:
        expected_len //= ds
    assert out.shape == (B, FILTER_SIZE[-1], expected_len), out.shape
    assert jnp.all(jnp.isfinite(out))
    print("KERNEL_OK")
</pallas_src>

<mosaic_0001>
module attributes {stable_mosaic.version = 11 : i64} {
  func.func @kernel(%arg0: i32, %arg1: memref<4x128xf32, #tpu.memory_space<vmem>>, %arg2: memref<8x56xf32, #tpu.memory_space<vmem>>, %arg3: memref<8x1xf32, #tpu.memory_space<vmem>>, %arg4: memref<8x1xf32, #tpu.memory_space<vmem>>, %arg5: memref<8x128xf32, #tpu.memory_space<vmem>>, %arg6: memref<56x128xf32, #tpu.memory_space<vmem>>) attributes {dimension_semantics = [#tpu.dimension_semantics<arbitrary>], iteration_bounds = array<i64: 1>, scalar_prefetch = 0 : i64, scratch_operands = 1 : i64, tpu.core_type = #tpu.core_type<tc>, window_params = [{pipeline_mode = #tpu.pipeline_mode<synchronous>, transform_indices = @transform_0, window_bounds = array<i64: 4, 128>}, {pipeline_mode = #tpu.pipeline_mode<synchronous>, transform_indices = @transform_1, window_bounds = array<i64: 8, 56>}, {pipeline_mode = #tpu.pipeline_mode<synchronous>, transform_indices = @transform_2, window_bounds = array<i64: 8, 1>}, {pipeline_mode = #tpu.pipeline_mode<synchronous>, transform_indices = @transform_3, window_bounds = array<i64: 8, 1>}, {pipeline_mode = #tpu.pipeline_mode<synchronous>, transform_indices = @transform_4, window_bounds = array<i64: 8, 128>}]} {
    %c0 = arith.constant 0 : index
    %c0_0 = arith.constant 0 : index
    %0 = vector.load %arg1[%c0, %c0_0] : memref<4x128xf32, #tpu.memory_space<vmem>>, vector<4x128xf32>
    %cst = arith.constant 0.000000e+00 : f32
    %1 = vector.broadcast %cst : f32 to vector<56x128xf32>
    %c0_1 = arith.constant 0 : index
    %c0_2 = arith.constant 0 : index
    %2 = vector.load %arg6[%c0_1, %c0_2] : memref<56x128xf32, #tpu.memory_space<vmem>>, vector<56x128xf32>
    tpu.vector_store %arg6[%c0_1, %c0_2], %1 {strides = array<i32>} : memref<56x128xf32, #tpu.memory_space<vmem>>, vector<56x128xf32>,
    %3 = vector.extract_strided_slice %0 {offsets = [0, 0], sizes = [4, 61], strides = [1, 1]} : vector<4x128xf32> to vector<4x61xf32>
    %c0_3 = arith.constant 0 : index
    %c3 = arith.constant 3 : index
    %4 = vector.load %arg6[%c0_3, %c3] : memref<56x128xf32, #tpu.memory_space<vmem>>, vector<4x61xf32>
    tpu.vector_store %arg6[%c0_3, %c3], %3 {strides = array<i32>} : memref<56x128xf32, #tpu.memory_space<vmem>>, vector<4x61xf32>,
    %5 = vector.extract_strided_slice %0 {offsets = [0, 64], sizes = [4, 61], strides = [1, 1]} : vector<4x128xf32> to vector<4x61xf32>
    %c0_4 = arith.constant 0 : index
    %c67 = arith.constant 67 : index
    %6 = vector.load %arg6[%c0_4, %c67] : memref<56x128xf32, #tpu.memory_space<vmem>>, vector<4x61xf32>
    tpu.vector_store %arg6[%c0_4, %c67], %5 {strides = array<i32>} : memref<56x128xf32, #tpu.memory_space<vmem>>, vector<4x61xf32>,
    %7 = vector.extract_strided_slice %0 {offsets = [0, 0], sizes = [4, 62], strides = [1, 1]} : vector<4x128xf32> to vector<4x62xf32>
    %c8 = arith.constant 8 : index
    %c2 = arith.constant 2 : index
    %8 = vector.load %arg6[%c8, %c2] : memref<56x128xf32, #tpu.memory_space<vmem>>, vector<4x62xf32>
    tpu.vector_store %arg6[%c8, %c2], %7 {strides = array<i32>} : memref<56x128xf32, #tpu.memory_space<vmem>>, vector<4x62xf32>,
    %9 = vector.extract_strided_slice %0 {offsets = [0, 64], sizes = [4, 62], strides = [1, 1]} : vector<4x128xf32> to vector<4x62xf32>
    %c8_5 = arith.constant 8 : index
    %c66 = arith.constant 66 : index
    %10 = vector.load %arg6[%c8_5, %c66] : memref<56x128xf32, #tpu.memory_space<vmem>>, vector<4x62xf32>
    tpu.vector_store %arg6[%c8_5, %c66], %9 {strides = array<i32>} : memref<56x128xf32, #tpu.memory_space<vmem>>, vector<4x62xf32>,
    %11 = vector.extract_strided_slice %0 {offsets = [0, 0], sizes = [4, 63], strides = [1, 1]} : vector<4x128xf32> to vector<4x63xf32>
    %c16 = arith.constant 16 : index
    %c1 = arith.constant 1 : index
    %12 = vector.load %arg6[%c16, %c1] : memref<56x128xf32, #tpu.memory_space<vmem>>, vector<4x63xf32>
    tpu.vector_store %arg6[%c16, %c1], %11 {strides = array<i32>} : memref<56x128xf32, #tpu.memory_space<vmem>>, vector<4x63xf32>,
    %13 = vector.extract_strided_slice %0 {offsets = [0, 64], sizes = [4, 63], strides = [1, 1]} : vector<4x128xf32> to vector<4x63xf32>
    %c16_6 = arith.constant 16 : index
    %c65 = arith.constant 65 : index
    %14 = vector.load %arg6[%c16_6, %c65] : memref<56x128xf32, #tpu.memory_space<vmem>>, vector<4x63xf32>
    tpu.vector_store %arg6[%c16_6, %c65], %13 {strides = array<i32>} : memref<56x128xf32, #tpu.memory_space<vmem>>, vector<4x63xf32>,
    %15 = vector.extract_strided_slice %0 {offsets = [0, 0], sizes = [4, 64], strides = [1, 1]} : vector<4x128xf32> to vector<4x64xf32>
    %c24 = arith.constant 24 : index
    %c0_7 = arith.constant 0 : index
    %16 = vector.load %arg6[%c24, %c0_7] : memref<56x128xf32, #tpu.memory_space<vmem>>, vector<4x64xf32>
    tpu.vector_store %arg6[%c24, %c0_7], %15 {strides = array<i32>} : memref<56x128xf32, #tpu.memory_space<vmem>>, vector<4x64xf32>,
    %17 = vector.extract_strided_slice %0 {offsets = [0, 64], sizes = [4, 64], strides = [1, 1]} : vector<4x128xf32> to vector<4x64xf32>
    %c24_8 = arith.constant 24 : index
    %c64 = arith.constant 64 : index
    %18 = vector.load %arg6[%c24_8, %c64] : memref<56x128xf32, #tpu.memory_space<vmem>>, vector<4x64xf32>
    tpu.vector_store %arg6[%c24_8, %c64], %17 {strides = array<i32>} : memref<56x128xf32, #tpu.memory_space<vmem>>, vector<4x64xf32>,
    %19 = vector.extract_strided_slice %0 {offsets = [0, 1], sizes = [4, 63], strides = [1, 1]} : vector<4x128xf32> to vector<4x63xf32>
    %c32 = arith.constant 32 : index
    %c0_9 = arith.constant 0 : index
    %20 = vector.load %arg6[%c32, %c0_9] : memref<56x128xf32, #tpu.memory_space<vmem>>, vector<4x63xf32>
    tpu.vector_store %arg6[%c32, %c0_9], %19 {strides = array<i32>} : memref<56x128xf32, #tpu.memory_space<vmem>>, vector<4x63xf32>,
    %21 = vector.extract_strided_slice %0 {offsets = [0, 65], sizes = [4, 63], strides = [1, 1]} : vector<4x128xf32> to vector<4x63xf32>
    %c32_10 = arith.constant 32 : index
    %c64_11 = arith.constant 64 : index
    %22 = vector.load %arg6[%c32_10, %c64_11] : memref<56x128xf32, #tpu.memory_space<vmem>>, vector<4x63xf32>
    tpu.vector_store %arg6[%c32_10, %c64_11], %21 {strides = array<i32>} : memref<56x128xf32, #tpu.memory_space<vmem>>, vector<4x63xf32>,
    %23 = vector.extract_strided_slice %0 {offsets = [0, 2], sizes = [4, 62], strides = [1, 1]} : vector<4x128xf32> to vector<4x62xf32>
    %c40 = arith.constant 40 : index
    %c0_12 = arith.constant 0 : index
    %24 = vector.load %arg6[%c40, %c0_12] : memref<56x128xf32, #tpu.memory_space<vmem>>, vector<4x62xf32>
    tpu.vector_store %arg6[%c40, %c0_12], %23 {strides = array<i32>} : memref<56x128xf32, #tpu.memory_space<vmem>>, vector<4x62xf32>,
    %25 = vector.extract_strided_slice %0 {offsets = [0, 66], sizes = [4, 62], strides = [1, 1]} : vector<4x128xf32> to vector<4x62xf32>
    %c40_13 = arith.constant 40 : index
    %c64_14 = arith.constant 64 : index
    %26 = vector.load %arg6[%c40_13, %c64_14] : memref<56x128xf32, #tpu.memory_space<vmem>>, vector<4x62xf32>
    tpu.vector_store %arg6[%c40_13, %c64_14], %25 {strides = array<i32>} : memref<56x128xf32, #tpu.memory_space<vmem>>, vector<4x62xf32>,
    %27 = vector.extract_strided_slice %0 {offsets = [0, 3], sizes = [4, 61], strides = [1, 1]} : vector<4x128xf32> to vector<4x61xf32>
    %c48 = arith.constant 48 : index
    %c0_15 = arith.constant 0 : index
    %28 = vector.load %arg6[%c48, %c0_15] : memref<56x128xf32, #tpu.memory_space<vmem>>, vector<4x61xf32>
    tpu.vector_store %arg6[%c48, %c0_15], %27 {strides = array<i32>} : memref<56x128xf32, #tpu.memory_space<vmem>>, vector<4x61xf32>,
    %29 = vector.extract_strided_slice %0 {offsets = [0, 67], sizes = [4, 61], strides = [1, 1]} : vector<4x128xf32> to vector<4x61xf32>
    %c48_16 = arith.constant 48 : index
    %c64_17 = arith.constant 64 : index
    %30 = vector.load %arg6[%c48_16, %c64_17] : memref<56x128xf32, #tpu.memory_space<vmem>>, vector<4x61xf32>
    tpu.vector_store %arg6[%c48_16, %c64_17], %29 {strides = array<i32>} : memref<56x128xf32, #tpu.memory_space<vmem>>, vector<4x61xf32>,
    %c0_18 = arith.constant 0 : index
    %c0_19 = arith.constant 0 : index
    %31 = vector.load %arg2[%c0_18, %c0_19] : memref<8x56xf32, #tpu.memory_space<vmem>>, vector<8x56xf32>
    %c0_20 = arith.constant 0 : index
    %c0_21 = arith.constant 0 : index
    %32 = vector.load %arg6[%c0_20, %c0_21] : memref<56x128xf32, #tpu.memory_space<vmem>>, vector<56x128xf32>
    %cst_22 = arith.constant dense<0.000000e+00> : vector<8x128xf32>
    %33 = tpu.matmul %31, %32, %cst_22 {dimension_numbers = #tpu.dot_dimension_numbers<[1], [0], [0], [1], [0, 0, 1, 1], [], []>} : vector<8x56xf32>, vector<56x128xf32>, vector<8x128xf32> -> vector<8x128xf32>
    %c0_23 = arith.constant 0 : index
    %c0_24 = arith.constant 0 : index
    %34 = vector.load %arg3[%c0_23, %c0_24] : memref<8x1xf32, #tpu.memory_space<vmem>>, vector<8x1xf32>
    %35 = vector.broadcast %34 : vector<8x1xf32> to vector<8x128xf32>
    %36 = arith.mulf %33, %35 : vector<8x128xf32>
    %c0_25 = arith.constant 0 : index
    %c0_26 = arith.constant 0 : index
    %37 = vector.load %arg4[%c0_25, %c0_26] : memref<8x1xf32, #tpu.memory_space<vmem>>, vector<8x1xf32>
    %38 = vector.broadcast %37 : vector<8x1xf32> to vector<8x128xf32>
    %39 = arith.addf %36, %38 : vector<8x128xf32>
    %cst_27 = arith.constant 0.000000e+00 : f32
    %40 = vector.broadcast %cst_27 : f32 to vector<8x128xf32>
    %41 = arith.maximumf %39, %40 : vector<8x128xf32>
    %c0_28 = arith.constant 0 : index
    %c0_29 = arith.constant 0 : index
    %42 = vector.load %arg5[%c0_28, %c0_29] : memref<8x128xf32, #tpu.memory_space<vmem>>, vector<8x128xf32>
    tpu.vector_store %arg5[%c0_28, %c0_29], %41 {strides = array<i32>} : memref<8x128xf32, #tpu.memory_space<vmem>>, vector<8x128xf32>,
    return
  }
  func.func @transform_0(%arg0: i32) -> (i32, i32) {
    %c0_i32 = arith.constant 0 : i32
    %c0_i32_0 = arith.constant 0 : i32
    %c0_i32_1 = arith.constant 0 : i32
    return %c0_i32, %c0_i32_0 : i32, i32
  }
  func.func @transform_1(%arg0: i32) -> (i32, i32) {
    %c0_i32 = arith.constant 0 : i32
    %c0_i32_0 = arith.constant 0 : i32
    %c0_i32_1 = arith.constant 0 : i32
    return %c0_i32, %c0_i32_0 : i32, i32
  }
  func.func @transform_2(%arg0: i32) -> (i32, i32) {
    %c0_i32 = arith.constant 0 : i32
    %c0_i32_0 = arith.constant 0 : i32
    %c0_i32_1 = arith.constant 0 : i32
    return %c0_i32, %c0_i32_0 : i32, i32
  }
  func.func @transform_3(%arg0: i32) -> (i32, i32) {
    %c0_i32 = arith.constant 0 : i32
    %c0_i32_0 = arith.constant 0 : i32
    %c0_i32_1 = arith.constant 0 : i32
    return %c0_i32, %c0_i32_0 : i32, i32
  }
  func.func @transform_4(%arg0: i32) -> (i32, i32) {
    %c0_i32 = arith.constant 0 : i32
    %c0_i32_0 = arith.constant 0 : i32
    %c0_i32_1 = arith.constant 0 : i32
    return %c0_i32, %c0_i32_0 : i32, i32
  }
}

module attributes {stable_mosaic.version = 11 : i64} {
  func.func @kernel(%arg0: i32, %arg1: memref<8x128xf32, #tpu.memory_space<vmem>>, %arg2: memref<8x56xf32, #tpu.memory_space<vmem>>, %arg3: memref<8x1xf32, #tpu.memory_space<vmem>>, %arg4: memref<8x1xf32, #tpu.memory_space<vmem>>, %arg5: memref<8x56xf32, #tpu.memory_space<vmem>>, %arg6: memref<8x1xf32, #tpu.memory_space<vmem>>, %arg7: memref<2x8xf32, #tpu.memory_space<vmem>>, %arg8: memref<8x2xf32, #tpu.memory_space<vmem>>, %arg9: memref<2x128x64xf32, #tpu.memory_space<vmem>>, %arg10: memref<128x64xf32, #tpu.memory_space<vmem>>, %arg11: memref<8x64xf32, #tpu.memory_space<vmem>>, %arg12: memref<56x128xf32, #tpu.memory_space<vmem>>, %arg13: memref<56x128xf32, #tpu.memory_space<vmem>>) attributes {dimension_semantics = [#tpu.dimension_semantics<arbitrary>], iteration_bounds = array<i64: 1>, scalar_prefetch = 0 : i64, scratch_operands = 2 : i64, tpu.core_type = #tpu.core_type<tc>, window_params = [{pipeline_mode = #tpu.pipeline_mode<synchronous>, transform_indices = @transform_0, window_bounds = array<i64: 8, 128>}, {pipeline_mode = #tpu.pipeline_mode<synchronous>, transform_indices = @transform_1, window_bounds = array<i64: 8, 56>}, {pipeline_mode = #tpu.pipeline_mode<synchronous>, transform_indices = @transform_2, window_bounds = array<i64: 8, 1>}, {pipeline_mode = #tpu.pipeline_mode<synchronous>, transform_indices = @transform_3, window_bounds = array<i64: 8, 1>}, {pipeline_mode = #tpu.pipeline_mode<synchronous>, transform_indices = @transform_4, window_bounds = array<i64: 8, 56>}, {pipeline_mode = #tpu.pipeline_mode<synchronous>, transform_indices = @transform_5, window_bounds = array<i64: 8, 1>}, {pipeline_mode = #tpu.pipeline_mode<synchronous>, transform_indices = @transform_6, window_bounds = array<i64: 2, 8>}, {pipeline_mode = #tpu.pipeline_mode<synchronous>, transform_indices = @transform_7, window_bounds = array<i64: 8, 2>}, {pipeline_mode = #tpu.pipeline_mode<synchronous>, transform_indices = @transform_8, window_bounds = array<i64: 2, 128, 64>}, {pipeline_mode = #tpu.pipeline_mode<synchronous>, transform_indices = @transform_9, window_bounds = array<i64: 128, 64>}, {pipeline_mode = #tpu.pipeline_mode<synchronous>, transform_indices = @transform_10, window_bounds = array<i64: 8, 64>}]} {
    %c0 = arith.constant 0 : index
    %c0_0 = arith.constant 0 : index
    %0 = vector.load %arg1[%c0, %c0_0] : memref<8x128xf32, #tpu.memory_space<vmem>>, vector<8x128xf32>
    %c0_1 = arith.constant 0 : index
    %c0_2 = arith.constant 0 : index
    %c0_3 = arith.constant 0 : index
    %1 = vector.load %arg9[%c0_1, %c0_2, %c0_3] : memref<2x128x64xf32, #tpu.memory_space<vmem>>, vector<1x128x64xf32>
    %2 = vector.shape_cast %1 : vector<1x128x64xf32> to vector<128x64xf32>
    %cst = arith.constant dense<0.000000e+00> : vector<8x64xf32>
    %3 = tpu.matmul %0, %2, %cst {dimension_numbers = #tpu.dot_dimension_numbers<[1], [0], [0], [1], [0, 0, 1, 1], [], []>} : vector<8x128xf32>, vector<128x64xf32>, vector<8x64xf32> -> vector<8x64xf32>
    %c1 = arith.constant 1 : index
    %c0_4 = arith.constant 0 : index
    %c0_5 = arith.constant 0 : index
    %4 = vector.load %arg9[%c1, %c0_4, %c0_5] : memref<2x128x64xf32, #tpu.memory_space<vmem>>, vector<1x128x64xf32>
    %5 = vector.shape_cast %4 : vector<1x128x64xf32> to vector<128x64xf32>
    %cst_6 = arith.constant dense<0.000000e+00> : vector<8x64xf32>
    %6 = tpu.matmul %0, %5, %cst_6 {dimension_numbers = #tpu.dot_dimension_numbers<[1], [0], [0], [1], [0, 0, 1, 1], [], []>} : vector<8x128xf32>, vector<128x64xf32>, vector<8x64xf32> -> vector<8x64xf32>
    %7 = arith.maximumf %3, %6 : vector<8x64xf32>
    %cst_7 = arith.constant 0.000000e+00 : f32
    %8 = vector.broadcast %cst_7 : f32 to vector<56x128xf32>
    %c0_8 = arith.constant 0 : index
    %c0_9 = arith.constant 0 : index
    %9 = vector.load %arg12[%c0_8, %c0_9] : memref<56x128xf32, #tpu.memory_space<vmem>>, vector<56x128xf32>
    tpu.vector_store %arg12[%c0_8, %c0_9], %8 {strides = array<i32>} : memref<56x128xf32, #tpu.memory_space<vmem>>, vector<56x128xf32>,
    %10 = vector.extract_strided_slice %0 {offsets = [0, 0], sizes = [8, 61], strides = [1, 1]} : vector<8x128xf32> to vector<8x61xf32>
    %c0_10 = arith.constant 0 : index
    %c3 = arith.constant 3 : index
    %11 = vector.load %arg12[%c0_10, %c3] : memref<56x128xf32, #tpu.memory_space<vmem>>, vector<8x61xf32>
    tpu.vector_store %arg12[%c0_10, %c3], %10 {strides = array<i32>} : memref<56x128xf32, #tpu.memory_space<vmem>>, vector<8x61xf32>,
    %12 = vector.extract_strided_slice %0 {offsets = [0, 64], sizes = [8, 61], strides = [1, 1]} : vector<8x128xf32> to vector<8x61xf32>
    %c0_11 = arith.constant 0 : index
    %c67 = arith.constant 67 : index
    %13 = vector.load %arg12[%c0_11, %c67] : memref<56x128xf32, #tpu.memory_space<vmem>>, vector<8x61xf32>
    tpu.vector_store %arg12[%c0_11, %c67], %12 {strides = array<i32>} : memref<56x128xf32, #tpu.memory_space<vmem>>, vector<8x61xf32>,
    %14 = vector.extract_strided_slice %0 {offsets = [0, 0], sizes = [8, 62], strides = [1, 1]} : vector<8x128xf32> to vector<8x62xf32>
    %c8 = arith.constant 8 : index
    %c2 = arith.constant 2 : index
    %15 = vector.load %arg12[%c8, %c2] : memref<56x128xf32, #tpu.memory_space<vmem>>, vector<8x62xf32>
    tpu.vector_store %arg12[%c8, %c2], %14 {strides = array<i32>} : memref<56x128xf32, #tpu.memory_space<vmem>>, vector<8x62xf32>,
    %16 = vector.extract_strided_slice %0 {offsets = [0, 64], sizes = [8, 62], strides = [1, 1]} : vector<8x128xf32> to vector<8x62xf32>
    %c8_12 = arith.constant 8 : index
    %c66 = arith.constant 66 : index
    %17 = vector.load %arg12[%c8_12, %c66] : memref<56x128xf32, #tpu.memory_space<vmem>>, vector<8x62xf32>
    tpu.vector_store %arg12[%c8_12, %c66], %16 {strides = array<i32>} : memref<56x128xf32, #tpu.memory_space<vmem>>, vector<8x62xf32>,
    %18 = vector.extract_strided_slice %0 {offsets = [0, 0], sizes = [8, 63], strides = [1, 1]} : vector<8x128xf32> to vector<8x63xf32>
    %c16 = arith.constant 16 : index
    %c1_13 = arith.constant 1 : index
    %19 = vector.load %arg12[%c16, %c1_13] : memref<56x128xf32, #tpu.memory_space<vmem>>, vector<8x63xf32>
    tpu.vector_store %arg12[%c16, %c1_13], %18 {strides = array<i32>} : memref<56x128xf32, #tpu.memory_space<vmem>>, vector<8x63xf32>,
    %20 = vector.extract_strided_slice %0 {offsets = [0, 64], sizes = [8, 63], strides = [1, 1]} : vector<8x128xf32> to vector<8x63xf32>
    %c16_14 = arith.constant 16 : index
    %c65 = arith.constant 65 : index
    %21 = vector.load %arg12[%c16_14, %c65] : memref<56x128xf32, #tpu.memory_space<vmem>>, vector<8x63xf32>
    tpu.vector_store %arg12[%c16_14, %c65], %20 {strides = array<i32>} : memref<56x128xf32, #tpu.memory_space<vmem>>, vector<8x63xf32>,
    %22 = vector.extract_strided_slice %0 {offsets = [0, 0], sizes = [8, 64], strides = [1, 1]} : vector<8x128xf32> to vector<8x64xf32>
    %c24 = arith.constant 24 : index
    %c0_15 = arith.constant 0 : index
    %23 = vector.load %arg12[%c24, %c0_15] : memref<56x128xf32, #tpu.memory_space<vmem>>, vector<8x64xf32>
    tpu.vector_store %arg12[%c24, %c0_15], %22 {strides = array<i32>} : memref<56x128xf32, #tpu.memory_space<vmem>>, vector<8x64xf32>,
    %24 = vector.extract_strided_slice %0 {offsets = [0, 64], sizes = [8, 64], strides = [1, 1]} : vector<8x128xf32> to vector<8x64xf32>
    %c24_16 = arith.constant 24 : index
    %c64 = arith.constant 64 : index
    %25 = vector.load %arg12[%c24_16, %c64] : memref<56x128xf32, #tpu.memory_space<vmem>>, vector<8x64xf32>
    tpu.vector_store %arg12[%c24_16, %c64], %24 {strides = array<i32>} : memref<56x128xf32, #tpu.memory_space<vmem>>, vector<8x64xf32>,
    %26 = vector.extract_strided_slice %0 {offsets = [0, 1], sizes = [8, 63], strides = [1, 1]} : vector<8x128xf32> to vector<8x63xf32>
    %c32 = arith.constant 32 : index
    %c0_17 = arith.constant 0 : index
    %27 = vector.load %arg12[%c32, %c0_17] : memref<56x128xf32, #tpu.memory_space<vmem>>, vector<8x63xf32>
    tpu.vector_store %arg12[%c32, %c0_17], %26 {strides = array<i32>} : memref<56x128xf32, #tpu.memory_space<vmem>>, vector<8x63xf32>,
    %28 = vector.extract_strided_slice %0 {offsets = [0, 65], sizes = [8, 63], strides = [1, 1]} : vector<8x128xf32> to vector<8x63xf32>
    %c32_18 = arith.constant 32 : index
    %c64_19 = arith.constant 64 : index
    %29 = vector.load %arg12[%c32_18, %c64_19] : memref<56x128xf32, #tpu.memory_space<vmem>>, vector<8x63xf32>
    tpu.vector_store %arg12[%c32_18, %c64_19], %28 {strides = array<i32>} : memref<56x128xf32, #tpu.memory_space<vmem>>, vector<8x63xf32>,
    %30 = vector.extract_strided_slice %0 {offsets = [0, 2], sizes = [8, 62], strides = [1, 1]} : vector<8x128xf32> to vector<8x62xf32>
    %c40 = arith.constant 40 : index
    %c0_20 = arith.constant 0 : index
    %31 = vector.load %arg12[%c40, %c0_20] : memref<56x128xf32, #tpu.memory_space<vmem>>, vector<8x62xf32>
    tpu.vector_store %arg12[%c40, %c0_20], %30 {strides = array<i32>} : memref<56x128xf32, #tpu.memory_space<vmem>>, vector<8x62xf32>,
    %32 = vector.extract_strided_slice %0 {offsets = [0, 66], sizes = [8, 62], strides = [1, 1]} : vector<8x128xf32> to vector<8x62xf32>
    %c40_21 = arith.constant 40 : index
    %c64_22 = arith.constant 64 : index
    %33 = vector.load %arg12[%c40_21, %c64_22] : memref<56x128xf32, #tpu.memory_space<vmem>>, vector<8x62xf32>
    tpu.vector_store %arg12[%c40_21, %c64_22], %32 {strides = array<i32>} : memref<56x128xf32, #tpu.memory_space<vmem>>, vector<8x62xf32>,
    %34 = vector.extract_strided_slice %0 {offsets = [0, 3], sizes = [8, 61], strides = [1, 1]} : vector<8x128xf32> to vector<8x61xf32>
    %c48 = arith.constant 48 : index
    %c0_23 = arith.constant 0 : index
    %35 = vector.load %arg12[%c48, %c0_23] : memref<56x128xf32, #tpu.memory_space<vmem>>, vector<8x61xf32>
    tpu.vector_store %arg12[%c48, %c0_23], %34 {strides = array<i32>} : memref<56x128xf32, #tpu.memory_space<vmem>>, vector<8x61xf32>,
    %36 = vector.extract_strided_slice %0 {offsets = [0, 67], sizes = [8, 61], strides = [1, 1]} : vector<8x128xf32> to vector<8x61xf32>
    %c48_24 = arith.constant 48 : index
    %c64_25 = arith.constant 64 : index
    %37 = vector.load %arg12[%c48_24, %c64_25] : memref<56x128xf32, #tpu.memory_space<vmem>>, vector<8x61xf32>
    tpu.vector_store %arg12[%c48_24, %c64_25], %36 {strides = array<i32>} : memref<56x128xf32, #tpu.memory_space<vmem>>, vector<8x61xf32>,
    %c0_26 = arith.constant 0 : index
    %c0_27 = arith.constant 0 : index
    %38 = vector.load %arg2[%c0_26, %c0_27] : memref<8x56xf32, #tpu.memory_space<vmem>>, vector<8x56xf32>
    %c0_28 = arith.constant 0 : index
    %c0_29 = arith.constant 0 : index
    %39 = vector.load %arg12[%c0_28, %c0_29] : memref<56x128xf32, #tpu.memory_space<vmem>>, vector<56x128xf32>
    %cst_30 = arith.constant dense<0.000000e+00> : vector<8x128xf32>
    %40 = tpu.matmul %38, %39, %cst_30 {dimension_numbers = #tpu.dot_dimension_numbers<[1], [0], [0], [1], [0, 0, 1, 1], [], []>} : vector<8x56xf32>, vector<56x128xf32>, vector<8x128xf32> -> vector<8x128xf32>
    %c0_31 = arith.constant 0 : index
    %c0_32 = arith.constant 0 : index
    %41 = vector.load %arg3[%c0_31, %c0_32] : memref<8x1xf32, #tpu.memory_space<vmem>>, vector<8x1xf32>
    %42 = vector.broadcast %41 : vector<8x1xf32> to vector<8x128xf32>
    %43 = arith.mulf %40, %42 : vector<8x128xf32>
    %c0_33 = arith.constant 0 : index
    %c0_34 = arith.constant 0 : index
    %44 = vector.load %arg4[%c0_33, %c0_34] : memref<8x1xf32, #tpu.memory_space<vmem>>, vector<8x1xf32>
    %45 = vector.broadcast %44 : vector<8x1xf32> to vector<8x128xf32>
    %46 = arith.addf %43, %45 : vector<8x128xf32>
    %cst_35 = arith.constant 0.000000e+00 : f32
    %47 = vector.broadcast %cst_35 : f32 to vector<8x128xf32>
    %48 = arith.maximumf %46, %47 : vector<8x128xf32>
    %cst_36 = arith.constant 0.000000e+00 : f32
    %49 = vector.broadcast %cst_36 : f32 to vector<56x128xf32>
    %c0_37 = arith.constant 0 : index
    %c0_38 = arith.constant 0 : index
    %50 = vector.load %arg13[%c0_37, %c0_38] : memref<56x128xf32, #tpu.memory_space<vmem>>, vector<56x128xf32>
    tpu.vector_store %arg13[%c0_37, %c0_38], %49 {strides = array<i32>} : memref<56x128xf32, #tpu.memory_space<vmem>>, vector<56x128xf32>,
    %51 = vector.extract_strided_slice %48 {offsets = [0, 0], sizes = [8, 61], strides = [1, 1]} : vector<8x128xf32> to vector<8x61xf32>
    %c0_39 = arith.constant 0 : index
    %c3_40 = arith.constant 3 : index
    %52 = vector.load %arg13[%c0_39, %c3_40] : memref<56x128xf32, #tpu.memory_space<vmem>>, vector<8x61xf32>
    tpu.vector_store %arg13[%c0_39, %c3_40], %51 {strides = array<i32>} : memref<56x128xf32, #tpu.memory_space<vmem>>, vector<8x61xf32>,
    %53 = vector.extract_strided_slice %48 {offsets = [0, 64], sizes = [8, 61], strides = [1, 1]} : vector<8x128xf32> to vector<8x61xf32>
    %c0_41 = arith.constant 0 : index
    %c67_42 = arith.constant 67 : index
    %54 = vector.load %arg13[%c0_41, %c67_42] : memref<56x128xf32, #tpu.memory_space<vmem>>, vector<8x61xf32>
    tpu.vector_store %arg13[%c0_41, %c67_42], %53 {strides = array<i32>} : memref<56x128xf32, #tpu.memory_space<vmem>>, vector<8x61xf32>,
    %55 = vector.extract_strided_slice %48 {offsets = [0, 0], sizes = [8, 62], strides = [1, 1]} : vector<8x128xf32> to vector<8x62xf32>
    %c8_43 = arith.constant 8 : index
    %c2_44 = arith.constant 2 : index
    %56 = vector.load %arg13[%c8_43, %c2_44] : memref<56x128xf32, #tpu.memory_space<vmem>>, vector<8x62xf32>
    tpu.vector_store %arg13[%c8_43, %c2_44], %55 {strides = array<i32>} : memref<56x128xf32, #tpu.memory_space<vmem>>, vector<8x62xf32>,
    %57 = vector.extract_strided_slice %48 {offsets = [0, 64], sizes = [8, 62], strides = [1, 1]} : vector<8x128xf32> to vector<8x62xf32>
    %c8_45 = arith.constant 8 : index
    %c66_46 = arith.constant 66 : index
    %58 = vector.load %arg13[%c8_45, %c66_46] : memref<56x128xf32, #tpu.memory_space<vmem>>, vector<8x62xf32>
    tpu.vector_store %arg13[%c8_45, %c66_46], %57 {strides = array<i32>} : memref<56x128xf32, #tpu.memory_space<vmem>>, vector<8x62xf32>,
    %59 = vector.extract_strided_slice %48 {offsets = [0, 0], sizes = [8, 63], strides = [1, 1]} : vector<8x128xf32> to vector<8x63xf32>
    %c16_47 = arith.constant 16 : index
    %c1_48 = arith.constant 1 : index
    %60 = vector.load %arg13[%c16_47, %c1_48] : memref<56x128xf32, #tpu.memory_space<vmem>>, vector<8x63xf32>
    tpu.vector_store %arg13[%c16_47, %c1_48], %59 {strides = array<i32>} : memref<56x128xf32, #tpu.memory_space<vmem>>, vector<8x63xf32>,
    %61 = vector.extract_strided_slice %48 {offsets = [0, 64], sizes = [8, 63], strides = [1, 1]} : vector<8x128xf32> to vector<8x63xf32>
    %c16_49 = arith.constant 16 : index
    %c65_50 = arith.constant 65 : index
    %62 = vector.load %arg13[%c16_49, %c65_50] : memref<56x128xf32, #tpu.memory_space<vmem>>, vector<8x63xf32>
    tpu.vector_store %arg13[%c16_49, %c65_50], %61 {strides = array<i32>} : memref<56x128xf32, #tpu.memory_space<vmem>>, vector<8x63xf32>,
    %63 = vector.extract_strided_slice %48 {offsets = [0, 0], sizes = [8, 64], strides = [1, 1]} : vector<8x128xf32> to vector<8x64xf32>
    %c24_51 = arith.constant 24 : index
    %c0_52 = arith.constant 0 : index
    %64 = vector.load %arg13[%c24_51, %c0_52] : memref<56x128xf32, #tpu.memory_space<vmem>>, vector<8x64xf32>
    tpu.vector_store %arg13[%c24_51, %c0_52], %63 {strides = array<i32>} : memref<56x128xf32, #tpu.memory_space<vmem>>, vector<8x64xf32>,
    %65 = vector.extract_strided_slice %48 {offsets = [0, 64], sizes = [8, 64], strides = [1, 1]} : vector<8x128xf32> to vector<8x64xf32>
    %c24_53 = arith.constant 24 : index
    %c64_54 = arith.constant 64 : index
    %66 = vector.load %arg13[%c24_53, %c64_54] : memref<56x128xf32, #tpu.memory_space<vmem>>, vector<8x64xf32>
    tpu.vector_store %arg13[%c24_53, %c64_54], %65 {strides = array<i32>} : memref<56x128xf32, #tpu.memory_space<vmem>>, vector<8x64xf32>,
    %67 = vector.extract_strided_slice %48 {offsets = [0, 1], sizes = [8, 63], strides = [1, 1]} : vector<8x128xf32> to vector<8x63xf32>
    %c32_55 = arith.constant 32 : index
    %c0_56 = arith.constant 0 : index
    %68 = vector.load %arg13[%c32_55, %c0_56] : memref<56x128xf32, #tpu.memory_space<vmem>>, vector<8x63xf32>
    tpu.vector_store %arg13[%c32_55, %c0_56], %67 {strides = array<i32>} : memref<56x128xf32, #tpu.memory_space<vmem>>, vector<8x63xf32>,
    %69 = vector.extract_strided_slice %48 {offsets = [0, 65], sizes = [8, 63], strides = [1, 1]} : vector<8x128xf32> to vector<8x63xf32>
    %c32_57 = arith.constant 32 : index
    %c64_58 = arith.constant 64 : index
    %70 = vector.load %arg13[%c32_57, %c64_58] : memref<56x128xf32, #tpu.memory_space<vmem>>, vector<8x63xf32>
    tpu.vector_store %arg13[%c32_57, %c64_58], %69 {strides = array<i32>} : memref<56x128xf32, #tpu.memory_space<vmem>>, vector<8x63xf32>,
    %71 = vector.extract_strided_slice %48 {offsets = [0, 2], sizes = [8, 62], strides = [1, 1]} : vector<8x128xf32> to vector<8x62xf32>
    %c40_59 = arith.constant 40 : index
    %c0_60 = arith.constant 0 : index
    %72 = vector.load %arg13[%c40_59, %c0_60] : memref<56x128xf32, #tpu.memory_space<vmem>>, vector<8x62xf32>
    tpu.vector_store %arg13[%c40_59, %c0_60], %71 {strides = array<i32>} : memref<56x128xf32, #tpu.memory_space<vmem>>, vector<8x62xf32>,
    %73 = vector.extract_strided_slice %48 {offsets = [0, 66], sizes = [8, 62], strides = [1, 1]} : vector<8x128xf32> to vector<8x62xf32>
    %c40_61 = arith.constant 40 : index
    %c64_62 = arith.constant 64 : index
    %74 = vector.load %arg13[%c40_61, %c64_62] : memref<56x128xf32, #tpu.memory_space<vmem>>, vector<8x62xf32>
    tpu.vector_store %arg13[%c40_61, %c64_62], %73 {strides = array<i32>} : memref<56x128xf32, #tpu.memory_space<vmem>>, vector<8x62xf32>,
    %75 = vector.extract_strided_slice %48 {offsets = [0, 3], sizes = [8, 61], strides = [1, 1]} : vector<8x128xf32> to vector<8x61xf32>
    %c48_63 = arith.constant 48 : index
    %c0_64 = arith.constant 0 : index
    %76 = vector.load %arg13[%c48_63, %c0_64] : memref<56x128xf32, #tpu.memory_space<vmem>>, vector<8x61xf32>
    tpu.vector_store %arg13[%c48_63, %c0_64], %75 {strides = array<i32>} : memref<56x128xf32, #tpu.memory_space<vmem>>, vector<8x61xf32>,
    %77 = vector.extract_strided_slice %48 {offsets = [0, 67], sizes = [8, 61], strides = [1, 1]} : vector<8x128xf32> to vector<8x61xf32>
    %c48_65 = arith.constant 48 : index
    %c64_66 = arith.constant 64 : index
    %78 = vector.load %arg13[%c48_65, %c64_66] : memref<56x128xf32, #tpu.memory_space<vmem>>, vector<8x61xf32>
    tpu.vector_store %arg13[%c48_65, %c64_66], %77 {strides = array<i32>} : memref<56x128xf32, #tpu.memory_space<vmem>>, vector<8x61xf32>,
    %c0_67 = arith.constant 0 : index
    %c0_68 = arith.constant 0 : index
    %79 = vector.load %arg5[%c0_67, %c0_68] : memref<8x56xf32, #tpu.memory_space<vmem>>, vector<8x56xf32>
    %c0_69 = arith.constant 0 : index
    %c0_70 = arith.constant 0 : index
    %80 = vector.load %arg13[%c0_69, %c0_70] : memref<56x128xf32, #tpu.memory_space<vmem>>, vector<56x128xf32>
    %cst_71 = arith.constant dense<0.000000e+00> : vector<8x128xf32>
    %81 = tpu.matmul %79, %80, %cst_71 {dimension_numbers = #tpu.dot_dimension_numbers<[1], [0], [0], [1], [0, 0, 1, 1], [], []>} : vector<8x56xf32>, vector<56x128xf32>, vector<8x128xf32> -> vector<8x128xf32>
    %c0_72 = arith.constant 0 : index
    %c0_73 = arith.constant 0 : index
    %82 = vector.load %arg10[%c0_72, %c0_73] : memref<128x64xf32, #tpu.memory_space<vmem>>, vector<128x64xf32>
    %cst_74 = arith.constant dense<0.000000e+00> : vector<8x64xf32>
    %83 = tpu.matmul %81, %82, %cst_74 {dimension_numbers = #tpu.dot_dimension_numbers<[1], [0], [0], [1], [0, 0, 1, 1], [], []>} : vector<8x128xf32>, vector<128x64xf32>, vector<8x64xf32> -> vector<8x64xf32>
    %c0_75 = arith.constant 0 : index
    %c0_76 = arith.constant 0 : index
    %84 = vector.load %arg6[%c0_75, %c0_76] : memref<8x1xf32, #tpu.memory_space<vmem>>, vector<8x1xf32>
    %85 = vector.broadcast %84 : vector<8x1xf32> to vector<8x64xf32>
    %86 = arith.addf %83, %85 : vector<8x64xf32>
    %c0_77 = arith.constant 0 : index
    %c0_78 = arith.constant 0 : index
    %87 = vector.load %arg7[%c0_77, %c0_78] : memref<2x8xf32, #tpu.memory_space<vmem>>, vector<2x8xf32>
    %c0_79 = arith.constant 0 : index
    %c0_80 = arith.constant 0 : index
    %88 = vector.load %arg8[%c0_79, %c0_80] : memref<8x2xf32, #tpu.memory_space<vmem>>, vector<8x2xf32>
    %89 = vector.extract_strided_slice %86 {offsets = [0, 0], sizes = [8, 32], strides = [1, 1]} : vector<8x64xf32> to vector<8x32xf32>
    %cst_81 = arith.constant dense<0.000000e+00> : vector<8xf32>
    %90 = vector.multi_reduction <add>, %89, %cst_81 [1] : vector<8x32xf32> to vector<8xf32>
    %91 = vector.shape_cast %90 : vector<8xf32> to vector<8x1xf32>
    %cst_82 = arith.constant 3.200000e+01 : f32
    %92 = vector.broadcast %cst_82 : f32 to vector<8x1xf32>
    %93 = arith.divf %91, %92 : vector<8x1xf32>
    %cst_83 = arith.constant dense<0.000000e+00> : vector<2x1xf32>
    %94 = tpu.matmul %87, %93, %cst_83 {dimension_numbers = #tpu.dot_dimension_numbers<[1], [0], [0], [1], [0, 0, 1, 1], [], []>} : vector<2x8xf32>, vector<8x1xf32>, vector<2x1xf32> -> vector<2x1xf32>
    %cst_84 = arith.constant 0.000000e+00 : f32
    %95 = vector.broadcast %cst_84 : f32 to vector<2x1xf32>
    %96 = arith.maximumf %94, %95 : vector<2x1xf32>
    %cst_85 = arith.constant dense<0.000000e+00> : vector<8x1xf32>
    %97 = tpu.matmul %88, %96, %cst_85 {dimension_numbers = #tpu.dot_dimension_numbers<[1], [0], [0], [1], [0, 0, 1, 1], [], []>} : vector<8x2xf32>, vector<2x1xf32>, vector<8x1xf32> -> vector<8x1xf32>
    %98 = arith.negf %97 : vector<8x1xf32>
    %99 = math.exp %98 : vector<8x1xf32>
    %cst_86 = arith.constant 1.000000e+00 : f32
    %100 = vector.broadcast %cst_86 : f32 to vector<8x1xf32>
    %101 = arith.addf %100, %99 : vector<8x1xf32>
    %102 = arith.divf %100, %101 : vector<8x1xf32>
    %103 = vector.broadcast %102 : vector<8x1xf32> to vector<8x32xf32>
    %104 = arith.mulf %89, %103 : vector<8x32xf32>
    %105 = vector.extract_strided_slice %7 {offsets = [0, 0], sizes = [8, 32], strides = [1, 1]} : vector<8x64xf32> to vector<8x32xf32>
    %106 = arith.addf %104, %105 : vector<8x32xf32>
    %c0_87 = arith.constant 0 : index
    %c0_88 = arith.constant 0 : index
    %107 = vector.load %arg11[%c0_87, %c0_88] : memref<8x64xf32, #tpu.memory_space<vmem>>, vector<8x32xf32>
    tpu.vector_store %arg11[%c0_87, %c0_88], %106 {strides = array<i32>} : memref<8x64xf32, #tpu.memory_space<vmem>>, vector<8x32xf32>,
    %108 = vector.extract_strided_slice %86 {offsets = [0, 32], sizes = [8, 32], strides = [1, 1]} : vector<8x64xf32> to vector<8x32xf32>
    %cst_89 = arith.constant dense<0.000000e+00> : vector<8xf32>
    %109 = vector.multi_reduction <add>, %108, %cst_89 [1] : vector<8x32xf32> to vector<8xf32>
    %110 = vector.shape_cast %109 : vector<8xf32> to vector<8x1xf32>
    %cst_90 = arith.constant 3.200000e+01 : f32
    %111 = vector.broadcast %cst_90 : f32 to vector<8x1xf32>
    %112 = arith.divf %110, %111 : vector<8x1xf32>
    %cst_91 = arith.constant dense<0.000000e+00> : vector<2x1xf32>
    %113 = tpu.matmul %87, %112, %cst_91 {dimension_numbers = #tpu.dot_dimension_numbers<[1], [0], [0], [1], [0, 0, 1, 1], [], []>} : vector<2x8xf32>, vector<8x1xf32>, vector<2x1xf32> -> vector<2x1xf32>
    %cst_92 = arith.constant 0.000000e+00 : f32
    %114 = vector.broadcast %cst_92 : f32 to vector<2x1xf32>
    %115 = arith.maximumf %113, %114 : vector<2x1xf32>
    %cst_93 = arith.constant dense<0.000000e+00> : vector<8x1xf32>
    %116 = tpu.matmul %88, %115, %cst_93 {dimension_numbers = #tpu.dot_dimension_numbers<[1], [0], [0], [1], [0, 0, 1, 1], [], []>} : vector<8x2xf32>, vector<2x1xf32>, vector<8x1xf32> -> vector<8x1xf32>
    %117 = arith.negf %116 : vector<8x1xf32>
    %118 = math.exp %117 : vector<8x1xf32>
    %cst_94 = arith.constant 1.000000e+00 : f32
    %119 = vector.broadcast %cst_94 : f32 to vector<8x1xf32>
    %120 = arith.addf %119, %118 : vector<8x1xf32>
    %121 = arith.divf %119, %120 : vector<8x1xf32>
    %122 = vector.broadcast %121 : vector<8x1xf32> to vector<8x32xf32>
    %123 = arith.mulf %108, %122 : vector<8x32xf32>
    %124 = vector.extract_strided_slice %7 {offsets = [0, 32], sizes = [8, 32], strides = [1, 1]} : vector<8x64xf32> to vector<8x32xf32>
    %125 = arith.addf %123, %124 : vector<8x32xf32>
    %c0_95 = arith.constant 0 : index
    %c32_96 = arith.constant 32 : index
    %126 = vector.load %arg11[%c0_95, %c32_96] : memref<8x64xf32, #tpu.memory_space<vmem>>, vector<8x32xf32>
    tpu.vector_store %arg11[%c0_95, %c32_96], %125 {strides = array<i32>} : memref<8x64xf32, #tpu.memory_space<vmem>>, vector<8x32xf32>,
    return
  }
  func.func @transform_0(%arg0: i32) -> (i32, i32) {
    %c0_i32 = arith.constant 0 : i32
    %c0_i32_0 = arith.constant 0 : i32
    %c0_i32_1 = arith.constant 0 : i32
    return %c0_i32, %c0_i32_0 : i32, i32
  }
  func.func @transform_1(%arg0: i32) -> (i32, i32) {
    %c0_i32 = arith.constant 0 : i32
    %c0_i32_0 = arith.constant 0 : i32
    %c0_i32_1 = arith.constant 0 : i32
    return %c0_i32, %c0_i32_0 : i32, i32
  }
  func.func @transform_2(%arg0: i32) -> (i32, i32) {
    %c0_i32 = arith.constant 0 : i32
    %c0_i32_0 = arith.constant 0 : i32
    %c0_i32_1 = arith.constant 0 : i32
    return %c0_i32, %c0_i32_0 : i32, i32
  }
  func.func @transform_3(%arg0: i32) -> (i32, i32) {
    %c0_i32 = arith.constant 0 : i32
    %c0_i32_0 = arith.constant 0 : i32
    %c0_i32_1 = arith.constant 0 : i32
    return %c0_i32, %c0_i32_0 : i32, i32
  }
  func.func @transform_4(%arg0: i32) -> (i32, i32) {
    %c0_i32 = arith.constant 0 : i32
    %c0_i32_0 = arith.constant 0 : i32
    %c0_i32_1 = arith.constant 0 : i32
    return %c0_i32, %c0_i32_0 : i32, i32
  }
  func.func @transform_5(%arg0: i32) -> (i32, i32) {
    %c0_i32 = arith.constant 0 : i32
    %c0_i32_0 = arith.constant 0 : i32
    %c0_i32_1 = arith.constant 0 : i32
    return %c0_i32, %c0_i32_0 : i32, i32
  }
  func.func @transform_6(%arg0: i32) -> (i32, i32) {
    %c0_i32 = arith.constant 0 : i32
    %c0_i32_0 = arith.constant 0 : i32
    %c0_i32_1 = arith.constant 0 : i32
    return %c0_i32, %c0_i32_0 : i32, i32
  }
  func.func @transform_7(%arg0: i32) -> (i32, i32) {
    %c0_i32 = arith.constant 0 : i32
    %c0_i32_0 = arith.constant 0 : i32
    %c0_i32_1 = arith.constant 0 : i32
    return %c0_i32, %c0_i32_0 : i32, i32
  }
  func.func @transform_8(%arg0: i32) -> (i32, i32, i32) {
    %c0_i32 = arith.constant 0 : i32
    %c0_i32_0 = arith.constant 0 : i32
    %c0_i32_1 = arith.constant 0 : i32
    %c0_i32_2 = arith.constant 0 : i32
    return %c0_i32, %c0_i32_0, %c0_i32_1 : i32, i32, i32
  }
  func.func @transform_9(%arg0: i32) -> (i32, i32) {
    %c0_i32 = arith.constant 0 : i32
    %c0_i32_0 = arith.constant 0 : i32
    %c0_i32_1 = arith.constant 0 : i32
    return %c0_i32, %c0_i32_0 : i32, i32
  }
  func.func @transform_10(%arg0: i32) -> (i32, i32) {
    %c0_i32 = arith.constant 0 : i32
    %c0_i32_0 = arith.constant 0 : i32
    %c0_i32_1 = arith.constant 0 : i32
    return %c0_i32, %c0_i32_0 : i32, i32
  }
}

module attributes {stable_mosaic.version = 11 : i64} {
  func.func @kernel(%arg0: i32, %arg1: memref<16x32xf32, #tpu.memory_space<vmem>>, %arg2: memref<16x1xf32, #tpu.memory_space<vmem>>, %arg3: memref<16x1xf32, #tpu.memory_space<vmem>>, %arg4: memref<16x32xf32, #tpu.memory_space<vmem>>) attributes {dimension_semantics = [#tpu.dimension_semantics<arbitrary>], iteration_bounds = array<i64: 1>, scalar_prefetch = 0 : i64, scratch_operands = 0 : i64, tpu.core_type = #tpu.core_type<tc>, window_params = [{pipeline_mode = #tpu.pipeline_mode<synchronous>, transform_indices = @transform_0, window_bounds = array<i64: 16, 32>}, {pipeline_mode = #tpu.pipeline_mode<synchronous>, transform_indices = @transform_1, window_bounds = array<i64: 16, 1>}, {pipeline_mode = #tpu.pipeline_mode<synchronous>, transform_indices = @transform_2, window_bounds = array<i64: 16, 1>}, {pipeline_mode = #tpu.pipeline_mode<synchronous>, transform_indices = @transform_3, window_bounds = array<i64: 16, 32>}]} {
    %c0 = arith.constant 0 : index
    %c0_0 = arith.constant 0 : index
    %0 = vector.load %arg1[%c0, %c0_0] : memref<16x32xf32, #tpu.memory_space<vmem>>, vector<16x32xf32>
    %c0_1 = arith.constant 0 : index
    %c0_2 = arith.constant 0 : index
    %1 = vector.load %arg2[%c0_1, %c0_2] : memref<16x1xf32, #tpu.memory_space<vmem>>, vector<16x1xf32>
    %2 = vector.broadcast %1 : vector<16x1xf32> to vector<16x32xf32>
    %3 = arith.mulf %0, %2 : vector<16x32xf32>
    %c0_3 = arith.constant 0 : index
    %c0_4 = arith.constant 0 : index
    %4 = vector.load %arg3[%c0_3, %c0_4] : memref<16x1xf32, #tpu.memory_space<vmem>>, vector<16x1xf32>
    %5 = vector.broadcast %4 : vector<16x1xf32> to vector<16x32xf32>
    %6 = arith.addf %3, %5 : vector<16x32xf32>
    %cst = arith.constant 0.000000e+00 : f32
    %7 = vector.broadcast %cst : f32 to vector<16x32xf32>
    %8 = arith.maximumf %6, %7 : vector<16x32xf32>
    %c0_5 = arith.constant 0 : index
    %c0_6 = arith.constant 0 : index
    %9 = vector.load %arg4[%c0_5, %c0_6] : memref<16x32xf32, #tpu.memory_space<vmem>>, vector<16x32xf32>
    tpu.vector_store %arg4[%c0_5, %c0_6], %8 {strides = array<i32>} : memref<16x32xf32, #tpu.memory_space<vmem>>, vector<16x32xf32>,
    return
  }
  func.func @transform_0(%arg0: i32) -> (i32, i32) {
    %c0_i32 = arith.constant 0 : i32
    %c0_i32_0 = arith.constant 0 : i32
    %c0_i32_1 = arith.constant 0 : i32
    return %c0_i32, %c0_i32_0 : i32, i32
  }
  func.func @transform_1(%arg0: i32) -> (i32, i32) {
    %c0_i32 = arith.constant 0 : i32
    %c0_i32_0 = arith.constant 0 : i32
    %c0_i32_1 = arith.constant 0 : i32
    return %c0_i32, %c0_i32_0 : i32, i32
  }
  func.func @transform_2(%arg0: i32) -> (i32, i32) {
    %c0_i32 = arith.constant 0 : i32
    %c0_i32_0 = arith.constant 0 : i32
    %c0_i32_1 = arith.constant 0 : i32
    return %c0_i32, %c0_i32_0 : i32, i32
  }
  func.func @transform_3(%arg0: i32) -> (i32, i32) {
    %c0_i32 = arith.constant 0 : i32
    %c0_i32_0 = arith.constant 0 : i32
    %c0_i32_1 = arith.constant 0 : i32
    return %c0_i32, %c0_i32_0 : i32, i32
  }
}

module attributes {stable_mosaic.version = 11 : i64} {
  func.func @kernel(%arg0: i32, %arg1: memref<8x64xf32, #tpu.memory_space<vmem>>, %arg2: memref<8x1xf32, #tpu.memory_space<vmem>>, %arg3: memref<8x1xf32, #tpu.memory_space<vmem>>, %arg4: memref<16x56xf32, #tpu.memory_space<vmem>>, %arg5: memref<16x1xf32, #tpu.memory_space<vmem>>, %arg6: memref<16x1xf32, #tpu.memory_space<vmem>>, %arg7: memref<16x112xf32, #tpu.memory_space<vmem>>, %arg8: memref<16x1xf32, #tpu.memory_space<vmem>>, %arg9: memref<4x16xf32, #tpu.memory_space<vmem>>, %arg10: memref<16x4xf32, #tpu.memory_space<vmem>>, %arg11: memref<2x64x32xf32, #tpu.memory_space<vmem>>, %arg12: memref<64x32xf32, #tpu.memory_space<vmem>>, %arg13: memref<16x8xf32, #tpu.memory_space<vmem>>, %arg14: memref<16x1xf32, #tpu.memory_space<vmem>>, %arg15: memref<16x32xf32, #tpu.memory_space<vmem>>, %arg16: memref<56x64xf32, #tpu.memory_space<vmem>>, %arg17: memref<112x64xf32, #tpu.memory_space<vmem>>) attributes {dimension_semantics = [#tpu.dimension_semantics<arbitrary>], iteration_bounds = array<i64: 1>, scalar_prefetch = 0 : i64, scratch_operands = 2 : i64, tpu.core_type = #tpu.core_type<tc>, window_params = [{pipeline_mode = #tpu.pipeline_mode<synchronous>, transform_indices = @transform_0, window_bounds = array<i64: 8, 64>}, {pipeline_mode = #tpu.pipeline_mode<synchronous>, transform_indices = @transform_1, window_bounds = array<i64: 8, 1>}, {pipeline_mode = #tpu.pipeline_mode<synchronous>, transform_indices = @transform_2, window_bounds = array<i64: 8, 1>}, {pipeline_mode = #tpu.pipeline_mode<synchronous>, transform_indices = @transform_3, window_bounds = array<i64: 16, 56>}, {pipeline_mode = #tpu.pipeline_mode<synchronous>, transform_indices = @transform_4, window_bounds = array<i64: 16, 1>}, {pipeline_mode = #tpu.pipeline_mode<synchronous>, transform_indices = @transform_5, window_bounds = array<i64: 16, 1>}, {pipeline_mode = #tpu.pipeline_mode<synchronous>, transform_indices = @transform_6, window_bounds = array<i64: 16, 112>}, {pipeline_mode = #tpu.pipeline_mode<synchronous>, transform_indices = @transform_7, window_bounds = array<i64: 16, 1>}, {pipeline_mode = #tpu.pipeline_mode<synchronous>, transform_indices = @transform_8, window_bounds = array<i64: 4, 16>}, {pipeline_mode = #tpu.pipeline_mode<synchronous>, transform_indices = @transform_9, window_bounds = array<i64: 16, 4>}, {pipeline_mode = #tpu.pipeline_mode<synchronous>, transform_indices = @transform_10, window_bounds = array<i64: 2, 64, 32>}, {pipeline_mode = #tpu.pipeline_mode<synchronous>, transform_indices = @transform_11, window_bounds = array<i64: 64, 32>}, {pipeline_mode = #tpu.pipeline_mode<synchronous>, transform_indices = @transform_12, window_bounds = array<i64: 16, 8>}, {pipeline_mode = #tpu.pipeline_mode<synchronous>, transform_indices = @transform_13, window_bounds = array<i64: 16, 1>}, {pipeline_mode = #tpu.pipeline_mode<synchronous>, transform_indices = @transform_14, window_bounds = array<i64: 16, 32>}]} {
    %c0 = arith.constant 0 : index
    %c0_0 = arith.constant 0 : index
    %0 = vector.load %arg1[%c0, %c0_0] : memref<8x64xf32, #tpu.memory_space<vmem>>, vector<8x64xf32>
    %c0_1 = arith.constant 0 : index
    %c0_2 = arith.constant 0 : index
    %c0_3 = arith.constant 0 : index
    %1 = vector.load %arg11[%c0_1, %c0_2, %c0_3] : memref<2x64x32xf32, #tpu.memory_space<vmem>>, vector<1x64x32xf32>
    %2 = vector.shape_cast %1 : vector<1x64x32xf32> to vector<64x32xf32>
    %cst = arith.constant dense<0.000000e+00> : vector<8x32xf32>
    %3 = tpu.matmul %0, %2, %cst {dimension_numbers = #tpu.dot_dimension_numbers<[1], [0], [0], [1], [0, 0, 1, 1], [], []>} : vector<8x64xf32>, vector<64x32xf32>, vector<8x32xf32> -> vector<8x32xf32>
    %c1 = arith.constant 1 : index
    %c0_4 = arith.constant 0 : index
    %c0_5 = arith.constant 0 : index
    %4 = vector.load %arg11[%c1, %c0_4, %c0_5] : memref<2x64x32xf32, #tpu.memory_space<vmem>>, vector<1x64x32xf32>
    %5 = vector.shape_cast %4 : vector<1x64x32xf32> to vector<64x32xf32>
    %cst_6 = arith.constant dense<0.000000e+00> : vector<8x32xf32>
    %6 = tpu.matmul %0, %5, %cst_6 {dimension_numbers = #tpu.dot_dimension_numbers<[1], [0], [0], [1], [0, 0, 1, 1], [], []>} : vector<8x64xf32>, vector<64x32xf32>, vector<8x32xf32> -> vector<8x32xf32>
    %7 = arith.maximumf %3, %6 : vector<8x32xf32>
    %c0_7 = arith.constant 0 : index
    %c0_8 = arith.constant 0 : index
    %8 = vector.load %arg13[%c0_7, %c0_8] : memref<16x8xf32, #tpu.memory_space<vmem>>, vector<16x8xf32>
    %cst_9 = arith.constant dense<0.000000e+00> : vector<16x32xf32>
    %9 = tpu.matmul %8, %7, %cst_9 {dimension_numbers = #tpu.dot_dimension_numbers<[1], [0], [0], [1], [0, 0, 1, 1], [], []>} : vector<16x8xf32>, vector<8x32xf32>, vector<16x32xf32> -> vector<16x32xf32>
    %c0_10 = arith.constant 0 : index
    %c0_11 = arith.constant 0 : index
    %10 = vector.load %arg14[%c0_10, %c0_11] : memref<16x1xf32, #tpu.memory_space<vmem>>, vector<16x1xf32>
    %11 = vector.broadcast %10 : vector<16x1xf32> to vector<16x32xf32>
    %12 = arith.addf %9, %11 : vector<16x32xf32>
    %c0_12 = arith.constant 0 : index
    %c0_13 = arith.constant 0 : index
    %13 = vector.load %arg2[%c0_12, %c0_13] : memref<8x1xf32, #tpu.memory_space<vmem>>, vector<8x1xf32>
    %14 = vector.broadcast %13 : vector<8x1xf32> to vector<8x64xf32>
    %15 = arith.mulf %0, %14 : vector<8x64xf32>
    %c0_14 = arith.constant 0 : index
    %c0_15 = arith.constant 0 : index
    %16 = vector.load %arg3[%c0_14, %c0_15] : memref<8x1xf32, #tpu.memory_space<vmem>>, vector<8x1xf32>
    %17 = vector.broadcast %16 : vector<8x1xf32> to vector<8x64xf32>
    %18 = arith.addf %15, %17 : vector<8x64xf32>
    %cst_16 = arith.constant 0.000000e+00 : f32
    %19 = vector.broadcast %cst_16 : f32 to vector<8x64xf32>
    %20 = arith.maximumf %18, %19 : vector<8x64xf32>
    %cst_17 = arith.constant 0.000000e+00 : f32
    %21 = vector.broadcast %cst_17 : f32 to vector<56x64xf32>
    %c0_18 = arith.constant 0 : index
    %c0_19 = arith.constant 0 : index
    %22 = vector.load %arg16[%c0_18, %c0_19] : memref<56x64xf32, #tpu.memory_space<vmem>>, vector<56x64xf32>
    tpu.vector_store %arg16[%c0_18, %c0_19], %21 {strides = array<i32>} : memref<56x64xf32, #tpu.memory_space<vmem>>, vector<56x64xf32>,
    %23 = vector.extract_strided_slice %20 {offsets = [0, 0], sizes = [8, 29], strides = [1, 1]} : vector<8x64xf32> to vector<8x29xf32>
    %c0_20 = arith.constant 0 : index
    %c3 = arith.constant 3 : index
    %24 = vector.load %arg16[%c0_20, %c3] : memref<56x64xf32, #tpu.memory_space<vmem>>, vector<8x29xf32>
    tpu.vector_store %arg16[%c0_20, %c3], %23 {strides = array<i32>} : memref<56x64xf32, #tpu.memory_space<vmem>>, vector<8x29xf32>,
    %25 = vector.extract_strided_slice %20 {offsets = [0, 32], sizes = [8, 29], strides = [1, 1]} : vector<8x64xf32> to vector<8x29xf32>
    %c0_21 = arith.constant 0 : index
    %c35 = arith.constant 35 : index
    %26 = vector.load %arg16[%c0_21, %c35] : memref<56x64xf32, #tpu.memory_space<vmem>>, vector<8x29xf32>
    tpu.vector_store %arg16[%c0_21, %c35], %25 {strides = array<i32>} : memref<56x64xf32, #tpu.memory_space<vmem>>, vector<8x29xf32>,
    %27 = vector.extract_strided_slice %20 {offsets = [0, 0], sizes = [8, 30], strides = [1, 1]} : vector<8x64xf32> to vector<8x30xf32>
    %c8 = arith.constant 8 : index
    %c2 = arith.constant 2 : index
    %28 = vector.load %arg16[%c8, %c2] : memref<56x64xf32, #tpu.memory_space<vmem>>, vector<8x30xf32>
    tpu.vector_store %arg16[%c8, %c2], %27 {strides = array<i32>} : memref<56x64xf32, #tpu.memory_space<vmem>>, vector<8x30xf32>,
    %29 = vector.extract_strided_slice %20 {offsets = [0, 32], sizes = [8, 30], strides = [1, 1]} : vector<8x64xf32> to vector<8x30xf32>
    %c8_22 = arith.constant 8 : index
    %c34 = arith.constant 34 : index
    %30 = vector.load %arg16[%c8_22, %c34] : memref<56x64xf32, #tpu.memory_space<vmem>>, vector<8x30xf32>
    tpu.vector_store %arg16[%c8_22, %c34], %29 {strides = array<i32>} : memref<56x64xf32, #tpu.memory_space<vmem>>, vector<8x30xf32>,
    %31 = vector.extract_strided_slice %20 {offsets = [0, 0], sizes = [8, 31], strides = [1, 1]} : vector<8x64xf32> to vector<8x31xf32>
    %c16 = arith.constant 16 : index
    %c1_23 = arith.constant 1 : index
    %32 = vector.load %arg16[%c16, %c1_23] : memref<56x64xf32, #tpu.memory_space<vmem>>, vector<8x31xf32>
    tpu.vector_store %arg16[%c16, %c1_23], %31 {strides = array<i32>} : memref<56x64xf32, #tpu.memory_space<vmem>>, vector<8x31xf32>,
    %33 = vector.extract_strided_slice %20 {offsets = [0, 32], sizes = [8, 31], strides = [1, 1]} : vector<8x64xf32> to vector<8x31xf32>
    %c16_24 = arith.constant 16 : index
    %c33 = arith.constant 33 : index
    %34 = vector.load %arg16[%c16_24, %c33] : memref<56x64xf32, #tpu.memory_space<vmem>>, vector<8x31xf32>
    tpu.vector_store %arg16[%c16_24, %c33], %33 {strides = array<i32>} : memref<56x64xf32, #tpu.memory_space<vmem>>, vector<8x31xf32>,
    %35 = vector.extract_strided_slice %20 {offsets = [0, 0], sizes = [8, 32], strides = [1, 1]} : vector<8x64xf32> to vector<8x32xf32>
    %c24 = arith.constant 24 : index
    %c0_25 = arith.constant 0 : index
    %36 = vector.load %arg16[%c24, %c0_25] : memref<56x64xf32, #tpu.memory_space<vmem>>, vector<8x32xf32>
    tpu.vector_store %arg16[%c24, %c0_25], %35 {strides = array<i32>} : memref<56x64xf32, #tpu.memory_space<vmem>>, vector<8x32xf32>,
    %37 = vector.extract_strided_slice %20 {offsets = [0, 32], sizes = [8, 32], strides = [1, 1]} : vector<8x64xf32> to vector<8x32xf32>
    %c24_26 = arith.constant 24 : index
    %c32 = arith.constant 32 : index
    %38 = vector.load %arg16[%c24_26, %c32] : memref<56x64xf32, #tpu.memory_space<vmem>>, vector<8x32xf32>
    tpu.vector_store %arg16[%c24_26, %c32], %37 {strides = array<i32>} : memref<56x64xf32, #tpu.memory_space<vmem>>, vector<8x32xf32>,
    %39 = vector.extract_strided_slice %20 {offsets = [0, 1], sizes = [8, 31], strides = [1, 1]} : vector<8x64xf32> to vector<8x31xf32>
    %c32_27 = arith.constant 32 : index
    %c0_28 = arith.constant 0 : index
    %40 = vector.load %arg16[%c32_27, %c0_28] : memref<56x64xf32, #tpu.memory_space<vmem>>, vector<8x31xf32>
    tpu.vector_store %arg16[%c32_27, %c0_28], %39 {strides = array<i32>} : memref<56x64xf32, #tpu.memory_space<vmem>>, vector<8x31xf32>,
    %41 = vector.extract_strided_slice %20 {offsets = [0, 33], sizes = [8, 31], strides = [1, 1]} : vector<8x64xf32> to vector<8x31xf32>
    %c32_29 = arith.constant 32 : index
    %c32_30 = arith.constant 32 : index
    %42 = vector.load %arg16[%c32_29, %c32_30] : memref<56x64xf32, #tpu.memory_space<vmem>>, vector<8x31xf32>
    tpu.vector_store %arg16[%c32_29, %c32_30], %41 {strides = array<i32>} : memref<56x64xf32, #tpu.memory_space<vmem>>, vector<8x31xf32>,
    %43 = vector.extract_strided_slice %20 {offsets = [0, 2], sizes = [8, 30], strides = [1, 1]} : vector<8x64xf32> to vector<8x30xf32>
    %c40 = arith.constant 40 : index
    %c0_31 = arith.constant 0 : index
    %44 = vector.load %arg16[%c40, %c0_31] : memref<56x64xf32, #tpu.memory_space<vmem>>, vector<8x30xf32>
    tpu.vector_store %arg16[%c40, %c0_31], %43 {strides = array<i32>} : memref<56x64xf32, #tpu.memory_space<vmem>>, vector<8x30xf32>,
    %45 = vector.extract_strided_slice %20 {offsets = [0, 34], sizes = [8, 30], strides = [1, 1]} : vector<8x64xf32> to vector<8x30xf32>
    %c40_32 = arith.constant 40 : index
    %c32_33 = arith.constant 32 : index
    %46 = vector.load %arg16[%c40_32, %c32_33] : memref<56x64xf32, #tpu.memory_space<vmem>>, vector<8x30xf32>
    tpu.vector_store %arg16[%c40_32, %c32_33], %45 {strides = array<i32>} : memref<56x64xf32, #tpu.memory_space<vmem>>, vector<8x30xf32>,
    %47 = vector.extract_strided_slice %20 {offsets = [0, 3], sizes = [8, 29], strides = [1, 1]} : vector<8x64xf32> to vector<8x29xf32>
    %c48 = arith.constant 48 : index
    %c0_34 = arith.constant 0 : index
    %48 = vector.load %arg16[%c48, %c0_34] : memref<56x64xf32, #tpu.memory_space<vmem>>, vector<8x29xf32>
    tpu.vector_store %arg16[%c48, %c0_34], %47 {strides = array<i32>} : memref<56x64xf32, #tpu.memory_space<vmem>>, vector<8x29xf32>,
    %49 = vector.extract_strided_slice %20 {offsets = [0, 35], sizes = [8, 29], strides = [1, 1]} : vector<8x64xf32> to vector<8x29xf32>
    %c48_35 = arith.constant 48 : index
    %c32_36 = arith.constant 32 : index
    %50 = vector.load %arg16[%c48_35, %c32_36] : memref<56x64xf32, #tpu.memory_space<vmem>>, vector<8x29xf32>
    tpu.vector_store %arg16[%c48_35, %c32_36], %49 {strides = array<i32>} : memref<56x64xf32, #tpu.memory_space<vmem>>, vector<8x29xf32>,
    %c0_37 = arith.constant 0 : index
    %c0_38 = arith.constant 0 : index
    %51 = vector.load %arg4[%c0_37, %c0_38] : memref<16x56xf32, #tpu.memory_space<vmem>>, vector<16x56xf32>
    %c0_39 = arith.constant 0 : index
    %c0_40 = arith.constant 0 : index
    %52 = vector.load %arg16[%c0_39, %c0_40] : memref<56x64xf32, #tpu.memory_space<vmem>>, vector<56x64xf32>
    %cst_41 = arith.constant dense<0.000000e+00> : vector<16x64xf32>
    %53 = tpu.matmul %51, %52, %cst_41 {dimension_numbers = #tpu.dot_dimension_numbers<[1], [0], [0], [1], [0, 0, 1, 1], [], []>} : vector<16x56xf32>, vector<56x64xf32>, vector<16x64xf32> -> vector<16x64xf32>
    %c0_42 = arith.constant 0 : index
    %c0_43 = arith.constant 0 : index
    %54 = vector.load %arg5[%c0_42, %c0_43] : memref<16x1xf32, #tpu.memory_space<vmem>>, vector<16x1xf32>
    %55 = vector.broadcast %54 : vector<16x1xf32> to vector<16x64xf32>
    %56 = arith.mulf %53, %55 : vector<16x64xf32>
    %c0_44 = arith.constant 0 : index
    %c0_45 = arith.constant 0 : index
    %57 = vector.load %arg6[%c0_44, %c0_45] : memref<16x1xf32, #tpu.memory_space<vmem>>, vector<16x1xf32>
    %58 = vector.broadcast %57 : vector<16x1xf32> to vector<16x64xf32>
    %59 = arith.addf %56, %58 : vector<16x64xf32>
    %cst_46 = arith.constant 0.000000e+00 : f32
    %60 = vector.broadcast %cst_46 : f32 to vector<16x64xf32>
    %61 = arith.maximumf %59, %60 : vector<16x64xf32>
    %cst_47 = arith.constant 0.000000e+00 : f32
    %62 = vector.broadcast %cst_47 : f32 to vector<112x64xf32>
    %c0_48 = arith.constant 0 : index
    %c0_49 = arith.constant 0 : index
    %63 = vector.load %arg17[%c0_48, %c0_49] : memref<112x64xf32, #tpu.memory_space<vmem>>, vector<112x64xf32>
    tpu.vector_store %arg17[%c0_48, %c0_49], %62 {strides = array<i32>} : memref<112x64xf32, #tpu.memory_space<vmem>>, vector<112x64xf32>,
    %64 = vector.extract_strided_slice %61 {offsets = [0, 0], sizes = [16, 29], strides = [1, 1]} : vector<16x64xf32> to vector<16x29xf32>
    %c0_50 = arith.constant 0 : index
    %c3_51 = arith.constant 3 : index
    %65 = vector.load %arg17[%c0_50, %c3_51] : memref<112x64xf32, #tpu.memory_space<vmem>>, vector<16x29xf32>
    tpu.vector_store %arg17[%c0_50, %c3_51], %64 {strides = array<i32>} : memref<112x64xf32, #tpu.memory_space<vmem>>, vector<16x29xf32>,
    %66 = vector.extract_strided_slice %61 {offsets = [0, 32], sizes = [16, 29], strides = [1, 1]} : vector<16x64xf32> to vector<16x29xf32>
    %c0_52 = arith.constant 0 : index
    %c35_53 = arith.constant 35 : index
    %67 = vector.load %arg17[%c0_52, %c35_53] : memref<112x64xf32, #tpu.memory_space<vmem>>, vector<16x29xf32>
    tpu.vector_store %arg17[%c0_52, %c35_53], %66 {strides = array<i32>} : memref<112x64xf32, #tpu.memory_space<vmem>>, vector<16x29xf32>,
    %68 = vector.extract_strided_slice %61 {offsets = [0, 0], sizes = [16, 30], strides = [1, 1]} : vector<16x64xf32> to vector<16x30xf32>
    %c16_54 = arith.constant 16 : index
    %c2_55 = arith.constant 2 : index
    %69 = vector.load %arg17[%c16_54, %c2_55] : memref<112x64xf32, #tpu.memory_space<vmem>>, vector<16x30xf32>
    tpu.vector_store %arg17[%c16_54, %c2_55], %68 {strides = array<i32>} : memref<112x64xf32, #tpu.memory_space<vmem>>, vector<16x30xf32>,
    %70 = vector.extract_strided_slice %61 {offsets = [0, 32], sizes = [16, 30], strides = [1, 1]} : vector<16x64xf32> to vector<16x30xf32>
    %c16_56 = arith.constant 16 : index
    %c34_57 = arith.constant 34 : index
    %71 = vector.load %arg17[%c16_56, %c34_57] : memref<112x64xf32, #tpu.memory_space<vmem>>, vector<16x30xf32>
    tpu.vector_store %arg17[%c16_56, %c34_57], %70 {strides = array<i32>} : memref<112x64xf32, #tpu.memory_space<vmem>>, vector<16x30xf32>,
    %72 = vector.extract_strided_slice %61 {offsets = [0, 0], sizes = [16, 31], strides = [1, 1]} : vector<16x64xf32> to vector<16x31xf32>
    %c32_58 = arith.constant 32 : index
    %c1_59 = arith.constant 1 : index
    %73 = vector.load %arg17[%c32_58, %c1_59] : memref<112x64xf32, #tpu.memory_space<vmem>>, vector<16x31xf32>
    tpu.vector_store %arg17[%c32_58, %c1_59], %72 {strides = array<i32>} : memref<112x64xf32, #tpu.memory_space<vmem>>, vector<16x31xf32>,
    %74 = vector.extract_strided_slice %61 {offsets = [0, 32], sizes = [16, 31], strides = [1, 1]} : vector<16x64xf32> to vector<16x31xf32>
    %c32_60 = arith.constant 32 : index
    %c33_61 = arith.constant 33 : index
    %75 = vector.load %arg17[%c32_60, %c33_61] : memref<112x64xf32, #tpu.memory_space<vmem>>, vector<16x31xf32>
    tpu.vector_store %arg17[%c32_60, %c33_61], %74 {strides = array<i32>} : memref<112x64xf32, #tpu.memory_space<vmem>>, vector<16x31xf32>,
    %76 = vector.extract_strided_slice %61 {offsets = [0, 0], sizes = [16, 32], strides = [1, 1]} : vector<16x64xf32> to vector<16x32xf32>
    %c48_62 = arith.constant 48 : index
    %c0_63 = arith.constant 0 : index
    %77 = vector.load %arg17[%c48_62, %c0_63] : memref<112x64xf32, #tpu.memory_space<vmem>>, vector<16x32xf32>
    tpu.vector_store %arg17[%c48_62, %c0_63], %76 {strides = array<i32>} : memref<112x64xf32, #tpu.memory_space<vmem>>, vector<16x32xf32>,
    %78 = vector.extract_strided_slice %61 {offsets = [0, 32], sizes = [16, 32], strides = [1, 1]} : vector<16x64xf32> to vector<16x32xf32>
    %c48_64 = arith.constant 48 : index
    %c32_65 = arith.constant 32 : index
    %79 = vector.load %arg17[%c48_64, %c32_65] : memref<112x64xf32, #tpu.memory_space<vmem>>, vector<16x32xf32>
    tpu.vector_store %arg17[%c48_64, %c32_65], %78 {strides = array<i32>} : memref<112x64xf32, #tpu.memory_space<vmem>>, vector<16x32xf32>,
    %80 = vector.extract_strided_slice %61 {offsets = [0, 1], sizes = [16, 31], strides = [1, 1]} : vector<16x64xf32> to vector<16x31xf32>
    %c64 = arith.constant 64 : index
    %c0_66 = arith.constant 0 : index
    %81 = vector.load %arg17[%c64, %c0_66] : memref<112x64xf32, #tpu.memory_space<vmem>>, vector<16x31xf32>
    tpu.vector_store %arg17[%c64, %c0_66], %80 {strides = array<i32>} : memref<112x64xf32, #tpu.memory_space<vmem>>, vector<16x31xf32>,
    %82 = vector.extract_strided_slice %61 {offsets = [0, 33], sizes = [16, 31], strides = [1, 1]} : vector<16x64xf32> to vector<16x31xf32>
    %c64_67 = arith.constant 64 : index
    %c32_68 = arith.constant 32 : index
    %83 = vector.load %arg17[%c64_67, %c32_68] : memref<112x64xf32, #tpu.memory_space<vmem>>, vector<16x31xf32>
    tpu.vector_store %arg17[%c64_67, %c32_68], %82 {strides = array<i32>} : memref<112x64xf32, #tpu.memory_space<vmem>>, vector<16x31xf32>,
    %84 = vector.extract_strided_slice %61 {offsets = [0, 2], sizes = [16, 30], strides = [1, 1]} : vector<16x64xf32> to vector<16x30xf32>
    %c80 = arith.constant 80 : index
    %c0_69 = arith.constant 0 : index
    %85 = vector.load %arg17[%c80, %c0_69] : memref<112x64xf32, #tpu.memory_space<vmem>>, vector<16x30xf32>
    tpu.vector_store %arg17[%c80, %c0_69], %84 {strides = array<i32>} : memref<112x64xf32, #tpu.memory_space<vmem>>, vector<16x30xf32>,
    %86 = vector.extract_strided_slice %61 {offsets = [0, 34], sizes = [16, 30], strides = [1, 1]} : vector<16x64xf32> to vector<16x30xf32>
    %c80_70 = arith.constant 80 : index
    %c32_71 = arith.constant 32 : index
    %87 = vector.load %arg17[%c80_70, %c32_71] : memref<112x64xf32, #tpu.memory_space<vmem>>, vector<16x30xf32>
    tpu.vector_store %arg17[%c80_70, %c32_71], %86 {strides = array<i32>} : memref<112x64xf32, #tpu.memory_space<vmem>>, vector<16x30xf32>,
    %88 = vector.extract_strided_slice %61 {offsets = [0, 3], sizes = [16, 29], strides = [1, 1]} : vector<16x64xf32> to vector<16x29xf32>
    %c96 = arith.constant 96 : index
    %c0_72 = arith.constant 0 : index
    %89 = vector.load %arg17[%c96, %c0_72] : memref<112x64xf32, #tpu.memory_space<vmem>>, vector<16x29xf32>
    tpu.vector_store %arg17[%c96, %c0_72], %88 {strides = array<i32>} : memref<112x64xf32, #tpu.memory_space<vmem>>, vector<16x29xf32>,
    %90 = vector.extract_strided_slice %61 {offsets = [0, 35], sizes = [16, 29], strides = [1, 1]} : vector<16x64xf32> to vector<16x29xf32>
    %c96_73 = arith.constant 96 : index
    %c32_74 = arith.constant 32 : index
    %91 = vector.load %arg17[%c96_73, %c32_74] : memref<112x64xf32, #tpu.memory_space<vmem>>, vector<16x29xf32>
    tpu.vector_store %arg17[%c96_73, %c32_74], %90 {strides = array<i32>} : memref<112x64xf32, #tpu.memory_space<vmem>>, vector<16x29xf32>,
    %c0_75 = arith.constant 0 : index
    %c0_76 = arith.constant 0 : index
    %92 = vector.load %arg7[%c0_75, %c0_76] : memref<16x112xf32, #tpu.memory_space<vmem>>, vector<16x112xf32>
    %c0_77 = arith.constant 0 : index
    %c0_78 = arith.constant 0 : index
    %93 = vector.load %arg17[%c0_77, %c0_78] : memref<112x64xf32, #tpu.memory_space<vmem>>, vector<112x64xf32>
    %cst_79 = arith.constant dense<0.000000e+00> : vector<16x64xf32>
    %94 = tpu.matmul %92, %93, %cst_79 {dimension_numbers = #tpu.dot_dimension_numbers<[1], [0], [0], [1], [0, 0, 1, 1], [], []>} : vector<16x112xf32>, vector<112x64xf32>, vector<16x64xf32> -> vector<16x64xf32>
    %c0_80 = arith.constant 0 : index
    %c0_81 = arith.constant 0 : index
    %95 = vector.load %arg12[%c0_80, %c0_81] : memref<64x32xf32, #tpu.memory_space<vmem>>, vector<64x32xf32>
    %cst_82 = arith.constant dense<0.000000e+00> : vector<16x32xf32>
    %96 = tpu.matmul %94, %95, %cst_82 {dimension_numbers = #tpu.dot_dimension_numbers<[1], [0], [0], [1], [0, 0, 1, 1], [], []>} : vector<16x64xf32>, vector<64x32xf32>, vector<16x32xf32> -> vector<16x32xf32>
    %c0_83 = arith.constant 0 : index
    %c0_84 = arith.constant 0 : index
    %97 = vector.load %arg8[%c0_83, %c0_84] : memref<16x1xf32, #tpu.memory_space<vmem>>, vector<16x1xf32>
    %98 = vector.broadcast %97 : vector<16x1xf32> to vector<16x32xf32>
    %99 = arith.addf %96, %98 : vector<16x32xf32>
    %c0_85 = arith.constant 0 : index
    %c0_86 = arith.constant 0 : index
    %100 = vector.load %arg9[%c0_85, %c0_86] : memref<4x16xf32, #tpu.memory_space<vmem>>, vector<4x16xf32>
    %c0_87 = arith.constant 0 : index
    %c0_88 = arith.constant 0 : index
    %101 = vector.load %arg10[%c0_87, %c0_88] : memref<16x4xf32, #tpu.memory_space<vmem>>, vector<16x4xf32>
    %102 = vector.extract_strided_slice %99 {offsets = [0, 0], sizes = [16, 16], strides = [1, 1]} : vector<16x32xf32> to vector<16x16xf32>
    %cst_89 = arith.constant dense<0.000000e+00> : vector<16xf32>
    %103 = vector.multi_reduction <add>, %102, %cst_89 [1] : vector<16x16xf32> to vector<16xf32>
    %104 = vector.shape_cast %103 : vector<16xf32> to vector<16x1xf32>
    %cst_90 = arith.constant 1.600000e+01 : f32
    %105 = vector.broadcast %cst_90 : f32 to vector<16x1xf32>
    %106 = arith.divf %104, %105 : vector<16x1xf32>
    %cst_91 = arith.constant dense<0.000000e+00> : vector<4x1xf32>
    %107 = tpu.matmul %100, %106, %cst_91 {dimension_numbers = #tpu.dot_dimension_numbers<[1], [0], [0], [1], [0, 0, 1, 1], [], []>} : vector<4x16xf32>, vector<16x1xf32>, vector<4x1xf32> -> vector<4x1xf32>
    %cst_92 = arith.constant 0.000000e+00 : f32
    %108 = vector.broadcast %cst_92 : f32 to vector<4x1xf32>
    %109 = arith.maximumf %107, %108 : vector<4x1xf32>
    %cst_93 = arith.constant dense<0.000000e+00> : vector<16x1xf32>
    %110 = tpu.matmul %101, %109, %cst_93 {dimension_numbers = #tpu.dot_dimension_numbers<[1], [0], [0], [1], [0, 0, 1, 1], [], []>} : vector<16x4xf32>, vector<4x1xf32>, vector<16x1xf32> -> vector<16x1xf32>
    %111 = arith.negf %110 : vector<16x1xf32>
    %112 = math.exp %111 : vector<16x1xf32>
    %cst_94 = arith.constant 1.000000e+00 : f32
    %113 = vector.broadcast %cst_94 : f32 to vector<16x1xf32>
    %114 = arith.addf %113, %112 : vector<16x1xf32>
    %115 = arith.divf %113, %114 : vector<16x1xf32>
    %116 = vector.broadcast %115 : vector<16x1xf32> to vector<16x16xf32>
    %117 = arith.mulf %102, %116 : vector<16x16xf32>
    %118 = vector.extract_strided_slice %12 {offsets = [0, 0], sizes = [16, 16], strides = [1, 1]} : vector<16x32xf32> to vector<16x16xf32>
    %119 = arith.addf %117, %118 : vector<16x16xf32>
    %c0_95 = arith.constant 0 : index
    %c0_96 = arith.constant 0 : index
    %120 = vector.load %arg15[%c0_95, %c0_96] : memref<16x32xf32, #tpu.memory_space<vmem>>, vector<16x16xf32>
    tpu.vector_store %arg15[%c0_95, %c0_96], %119 {strides = array<i32>} : memref<16x32xf32, #tpu.memory_space<vmem>>, vector<16x16xf32>,
    %121 = vector.extract_strided_slice %99 {offsets = [0, 16], sizes = [16, 16], strides = [1, 1]} : vector<16x32xf32> to vector<16x16xf32>
    %cst_97 = arith.constant dense<0.000000e+00> : vector<16xf32>
    %122 = vector.multi_reduction <add>, %121, %cst_97 [1] : vector<16x16xf32> to vector<16xf32>
    %123 = vector.shape_cast %122 : vector<16xf32> to vector<16x1xf32>
    %cst_98 = arith.constant 1.600000e+01 : f32
    %124 = vector.broadcast %cst_98 : f32 to vector<16x1xf32>
    %125 = arith.divf %123, %124 : vector<16x1xf32>
    %cst_99 = arith.constant dense<0.000000e+00> : vector<4x1xf32>
    %126 = tpu.matmul %100, %125, %cst_99 {dimension_numbers = #tpu.dot_dimension_numbers<[1], [0], [0], [1], [0, 0, 1, 1], [], []>} : vector<4x16xf32>, vector<16x1xf32>, vector<4x1xf32> -> vector<4x1xf32>
    %cst_100 = arith.constant 0.000000e+00 : f32
    %127 = vector.broadcast %cst_100 : f32 to vector<4x1xf32>
    %128 = arith.maximumf %126, %127 : vector<4x1xf32>
    %cst_101 = arith.constant dense<0.000000e+00> : vector<16x1xf32>
    %129 = tpu.matmul %101, %128, %cst_101 {dimension_numbers = #tpu.dot_dimension_numbers<[1], [0], [0], [1], [0, 0, 1, 1], [], []>} : vector<16x4xf32>, vector<4x1xf32>, vector<16x1xf32> -> vector<16x1xf32>
    %130 = arith.negf %129 : vector<16x1xf32>
    %131 = math.exp %130 : vector<16x1xf32>
    %cst_102 = arith.constant 1.000000e+00 : f32
    %132 = vector.broadcast %cst_102 : f32 to vector<16x1xf32>
    %133 = arith.addf %132, %131 : vector<16x1xf32>
    %134 = arith.divf %132, %133 : vector<16x1xf32>
    %135 = vector.broadcast %134 : vector<16x1xf32> to vector<16x16xf32>
    %136 = arith.mulf %121, %135 : vector<16x16xf32>
    %137 = vector.extract_strided_slice %12 {offsets = [0, 16], sizes = [16, 16], strides = [1, 1]} : vector<16x32xf32> to vector<16x16xf32>
    %138 = arith.addf %136, %137 : vector<16x16xf32>
    %c0_103 = arith.constant 0 : index
    %c16_104 = arith.constant 16 : index
    %139 = vector.load %arg15[%c0_103, %c16_104] : memref<16x32xf32, #tpu.memory_space<vmem>>, vector<16x16xf32>
    tpu.vector_store %arg15[%c0_103, %c16_104], %138 {strides = array<i32>} : memref<16x32xf32, #tpu.memory_space<vmem>>, vector<16x16xf32>,
    return
  }
  func.func @transform_0(%arg0: i32) -> (i32, i32) {
    %c0_i32 = arith.constant 0 : i32
    %c0_i32_0 = arith.constant 0 : i32
    %c0_i32_1 = arith.constant 0 : i32
    return %c0_i32, %c0_i32_0 : i32, i32
  }
  func.func @transform_1(%arg0: i32) -> (i32, i32) {
    %c0_i32 = arith.constant 0 : i32
    %c0_i32_0 = arith.constant 0 : i32
    %c0_i32_1 = arith.constant 0 : i32
    return %c0_i32, %c0_i32_0 : i32, i32
  }
  func.func @transform_2(%arg0: i32) -> (i32, i32) {
    %c0_i32 = arith.constant 0 : i32
    %c0_i32_0 = arith.constant 0 : i32
    %c0_i32_1 = arith.constant 0 : i32
    return %c0_i32, %c0_i32_0 : i32, i32
  }
  func.func @transform_3(%arg0: i32) -> (i32, i32) {
    %c0_i32 = arith.constant 0 : i32
    %c0_i32_0 = arith.constant 0 : i32
    %c0_i32_1 = arith.constant 0 : i32
    return %c0_i32, %c0_i32_0 : i32, i32
  }
  func.func @transform_4(%arg0: i32) -> (i32, i32) {
    %c0_i32 = arith.constant 0 : i32
    %c0_i32_0 = arith.constant 0 : i32
    %c0_i32_1 = arith.constant 0 : i32
    return %c0_i32, %c0_i32_0 : i32, i32
  }
  func.func @transform_5(%arg0: i32) -> (i32, i32) {
    %c0_i32 = arith.constant 0 : i32
    %c0_i32_0 = arith.constant 0 : i32
    %c0_i32_1 = arith.constant 0 : i32
    return %c0_i32, %c0_i32_0 : i32, i32
  }
  func.func @transform_6(%arg0: i32) -> (i32, i32) {
    %c0_i32 = arith.constant 0 : i32
    %c0_i32_0 = arith.constant 0 : i32
    %c0_i32_1 = arith.constant 0 : i32
    return %c0_i32, %c0_i32_0 : i32, i32
  }
  func.func @transform_7(%arg0: i32) -> (i32, i32) {
    %c0_i32 = arith.constant 0 : i32
    %c0_i32_0 = arith.constant 0 : i32
    %c0_i32_1 = arith.constant 0 : i32
    return %c0_i32, %c0_i32_0 : i32, i32
  }
  func.func @transform_8(%arg0: i32) -> (i32, i32) {
    %c0_i32 = arith.constant 0 : i32
    %c0_i32_0 = arith.constant 0 : i32
    %c0_i32_1 = arith.constant 0 : i32
    return %c0_i32, %c0_i32_0 : i32, i32
  }
  func.func @transform_9(%arg0: i32) -> (i32, i32) {
    %c0_i32 = arith.constant 0 : i32
    %c0_i32_0 = arith.constant 0 : i32
    %c0_i32_1 = arith.constant 0 : i32
    return %c0_i32, %c0_i32_0 : i32, i32
  }
  func.func @transform_10(%arg0: i32) -> (i32, i32, i32) {
    %c0_i32 = arith.constant 0 : i32
    %c0_i32_0 = arith.constant 0 : i32
    %c0_i32_1 = arith.constant 0 : i32
    %c0_i32_2 = arith.constant 0 : i32
    return %c0_i32, %c0_i32_0, %c0_i32_1 : i32, i32, i32
  }
  func.func @transform_11(%arg0: i32) -> (i32, i32) {
    %c0_i32 = arith.constant 0 : i32
    %c0_i32_0 = arith.constant 0 : i32
    %c0_i32_1 = arith.constant 0 : i32
    return %c0_i32, %c0_i32_0 : i32, i32
  }
  func.func @transform_12(%arg0: i32) -> (i32, i32) {
    %c0_i32 = arith.constant 0 : i32
    %c0_i32_0 = arith.constant 0 : i32
    %c0_i32_1 = arith.constant 0 : i32
    return %c0_i32, %c0_i32_0 : i32, i32
  }
  func.func @transform_13(%arg0: i32) -> (i32, i32) {
    %c0_i32 = arith.constant 0 : i32
    %c0_i32_0 = arith.constant 0 : i32
    %c0_i32_1 = arith.constant 0 : i32
    return %c0_i32, %c0_i32_0 : i32, i32
  }
  func.func @transform_14(%arg0: i32) -> (i32, i32) {
    %c0_i32 = arith.constant 0 : i32
    %c0_i32_0 = arith.constant 0 : i32
    %c0_i32_1 = arith.constant 0 : i32
    return %c0_i32, %c0_i32_0 : i32, i32
  }
}

</mosaic_0001>

<llo_original>
// kernel: _lambda_.7
$region0: #{_lambda_.7}
  #allocation0 [shape = 'u32[]', space=smem, size = 0x4, offset = 0x4, fixed_abs, tag = 'smem constant byte address 0x4 - core index']
  #allocation1 [shape = 'u32[144,128]{1,0:T(1,128)}', space=vmem, size = 0x12000, scoped, tag = 'internal scratch']
  %s0 = inlined_call_operand.vmem [shape: f32[16,32], index: 0, kind: input, shape index: {}]
  %s1 = inlined_call_operand.vmem [shape: f32[16,1], index: 1, kind: input, shape index: {}]
  %s2 = inlined_call_operand.vmem [shape: f32[16,1], index: 2, kind: input, shape index: {}]
  %s3 = inlined_call_operand.vmem [shape: f32[16,32], index: 3, kind: output, shape index: {}]
  %s4 = sld [smem:[#allocation0]]
  $region22: #{_lambda_.7} parent=0
    _
  %s6 = ssub.s32 1, %s4
  %s7 = scalar_select 0, %s6, %s4
  // Predicated region
  $region2: #{_lambda_.7} parent=0 // pred_check
    _
  $region3: #{_lambda_.7} parent=0 // pred_check_branch
    %9 = sbr.rel (0) target = $region5
  $region4: #{_lambda_.7} parent=0 // pred_region
    _
  $region5: #{_lambda_.7} parent=0 // pred_fallthru
    _
  // Predicated region
  $region6: #{_lambda_.7} parent=0 // pred_check
    _
  $region7: #{_lambda_.7} parent=0 // pred_check_branch
    %11 = sbr.rel (0) target = $region9
  $region8: #{_lambda_.7} parent=0 // pred_region
    _
  $region9: #{_lambda_.7} parent=0 // pred_fallthru
    _
  // Predicated region
  $region10: #{_lambda_.7} parent=0 // pred_check
    _
  $region11: #{_lambda_.7} parent=0 // pred_check_branch
    %13 = sbr.rel (0) target = $region13
  $region12: #{_lambda_.7} parent=0 // pred_region
    _
  $region13: #{_lambda_.7} parent=0 // pred_fallthru
    _
  %v14 = vld [vmem:[%s0] sm:$0xff]
  %v15 = vld [vmem:[%s0 + $0x8] sm:$0xff]
  %v16 = vld [vmem:[%s1] sm:$0xff]
  %v17 = vld [vmem:[%s1 + $0x8] sm:$0xff]
  %19 = vset.pattern.permute.xlu0 0
  %20 = vperm.xlu0 %19, %v16
  %v21 = vpop.permute.xlu0 %20
  %24 = vset.pattern.permute.xlu0 0
  %25 = vperm.xlu0 %24, %v17
  %v26 = vpop.permute.xlu0 %25
  %v28 = vmul.f32 %v14, %v21
  %v29 = vmul.f32 %v15, %v26
  %v30 = vld [vmem:[%s2] sm:$0xff]
  %v31 = vld [vmem:[%s2 + $0x8] sm:$0xff]
  %33 = vset.pattern.permute.xlu0 0
  %34 = vperm.xlu0 %33, %v30
  %v35 = vpop.permute.xlu0 %34
  %38 = vset.pattern.permute.xlu0 0
  %39 = vperm.xlu0 %38, %v31
  %v40 = vpop.permute.xlu0 %39
  %v42 = vadd.f32 %v28, %v35
  %v43 = vadd.f32 %v29, %v40
  %v44 = vmax.f32 %v42, 0.0
  %v45 = vmax.f32 %v43, 0.0
  %vm46 = vcmask 261120
  %47 = vst.msk [vmem:[%s3] sm:$0xff] %vm46, %v44
  %48 = vst.msk [vmem:[%s3 + $0x8] sm:$0xff] %vm46, %v45
  // Predicated region
  $region14: #{_lambda_.7} parent=0 // pred_check
    _
  $region15: #{_lambda_.7} parent=0 // pred_check_branch
    %50 = sbr.rel (0) target = $region17
  $region16: #{_lambda_.7} parent=0 // pred_region
    _
  $region17: #{_lambda_.7} parent=0 // pred_fallthru
    _
  // Predicated region
  $region18: #{_lambda_.7} parent=0 // pred_check
    _
  $region19: #{_lambda_.7} parent=0 // pred_check_branch
    %52 = sbr.rel (0) target = $region21
  $region20: #{_lambda_.7} parent=0 // pred_region
    _
  $region21: #{_lambda_.7} parent=0 // pred_fallthru
    _

// kernel: _lambda_.4
$region0: #{_lambda_.4}
  #allocation0 [shape = 'u32[]', space=smem, size = 0x4, offset = 0x4, fixed_abs, tag = 'smem constant byte address 0x4 - core index']
  #allocation1 [shape = 'u32[144,128]{1,0:T(1,128)}', space=vmem, size = 0x12000, scoped, tag = 'internal scratch']
  #allocation2 [shape = 'f32[56,128]{1,0:T(8,128)}', space=vmem, size = 0x7000, scoped, tag = 'scratch operand']
  %s0 = inlined_call_operand.vmem [shape: f32[4,128], index: 0, kind: input, shape index: {}]
  %s1 = inlined_call_operand.vmem [shape: f32[8,56], index: 1, kind: input, shape index: {}]
  %s2 = inlined_call_operand.vmem [shape: f32[8,1], index: 2, kind: input, shape index: {}]
  %s3 = inlined_call_operand.vmem [shape: f32[8,1], index: 3, kind: input, shape index: {}]
  %s4 = inlined_call_operand.vmem [shape: f32[8,128], index: 4, kind: output, shape index: {}]
  %s5 = sld [smem:[#allocation0]]
  $region26: #{_lambda_.4} parent=0
    _
  %s7 = ssub.s32 1, %s5
  %s8 = scalar_select 0, %s7, %s5
  // Predicated region
  $region2: #{_lambda_.4} parent=0 // pred_check
    _
  $region3: #{_lambda_.4} parent=0 // pred_check_branch
    %10 = sbr.rel (0) target = $region5
  $region4: #{_lambda_.4} parent=0 // pred_region
    _
  $region5: #{_lambda_.4} parent=0 // pred_fallthru
    _
  // Predicated region
  $region6: #{_lambda_.4} parent=0 // pred_check
    _
  $region7: #{_lambda_.4} parent=0 // pred_check_branch
    %12 = sbr.rel (0) target = $region9
  $region8: #{_lambda_.4} parent=0 // pred_region
    _
  $region9: #{_lambda_.4} parent=0 // pred_fallthru
    _
  // Predicated region
  $region10: #{_lambda_.4} parent=0 // pred_check
    _
  $region11: #{_lambda_.4} parent=0 // pred_check_branch
    %14 = sbr.rel (0) target = $region13
  $region12: #{_lambda_.4} parent=0 // pred_region
    _
  $region13: #{_lambda_.4} parent=0 // pred_fallthru
    _
  // Predicated region
  $region14: #{_lambda_.4} parent=0 // pred_check
    _
  $region15: #{_lambda_.4} parent=0 // pred_check_branch
    %16 = sbr.rel (0) target = $region17
  $region16: #{_lambda_.4} parent=0 // pred_region
    _
  $region17: #{_lambda_.4} parent=0 // pred_fallthru
    _
  %v17 = vld [vmem:[%s0] sm:$0xf]
  %18 = vst [vmem:[#allocation2] sm:$0xff] 0.0
  %19 = vst [vmem:[#allocation2 + $0x8] sm:$0xff] 0.0
  %20 = vst [vmem:[#allocation2 + $0x10] sm:$0xff] 0.0
  %21 = vst [vmem:[#allocation2 + $0x18] sm:$0xff] 0.0
  %22 = vst [vmem:[#allocation2 + $0x20] sm:$0xff] 0.0
  %23 = vst [vmem:[#allocation2 + $0x28] sm:$0xff] 0.0
  %24 = vst [vmem:[#allocation2 + $0x30] sm:$0xff] 0.0
  %26 = vrot.lane.b32.xlu0 %v17, 3
  %v27 = vpop.permute.xlu0 %26
  %vm29 = vcmask 519192
  %30 = vst.msk [vmem:[#allocation2] sm:$0xf] %vm29, %v27
  %vm31 = vcmask 1043992
  %32 = vst.msk [vmem:[#allocation2] sm:$0xf] %vm31, %v27
  %33 = vrot.lane.b32.xlu0 %v17, 2
  %v34 = vpop.permute.xlu0 %33
  %vm36 = vcmask 519184
  %37 = vst.msk [vmem:[#allocation2 + $0x8] sm:$0xf] %vm36, %v34
  %vm38 = vcmask 1043984
  %39 = vst.msk [vmem:[#allocation2 + $0x8] sm:$0xf] %vm38, %v34
  %40 = vrot.lane.b32.xlu0 %v17, 1
  %v41 = vpop.permute.xlu0 %40
  %vm43 = vcmask 519176
  %44 = vst.msk [vmem:[#allocation2 + $0x10] sm:$0xf] %vm43, %v41
  %vm45 = vcmask 1043976
  %46 = vst.msk [vmem:[#allocation2 + $0x10] sm:$0xf] %vm45, %v41
  %vm47 = vcmask 519168
  %48 = vst.msk [vmem:[#allocation2 + $0x18] sm:$0xf] %vm47, %v17
  %vm49 = vcmask 1043968
  %50 = vst.msk [vmem:[#allocation2 + $0x18] sm:$0xf] %vm49, %v17
  %51 = vrot.lane.b32.xlu0 %v17, 127
  %v52 = vpop.permute.xlu0 %51
  %vm54 = vcmask 510976
  %55 = vst.msk [vmem:[#allocation2 + $0x20] sm:$0xf] %vm54, %v52
  %vm56 = vcmask 1035776
  %57 = vst.msk [vmem:[#allocation2 + $0x20] sm:$0xf] %vm56, %v52
  %58 = vrot.lane.b32.xlu0 %v17, 126
  %v59 = vpop.permute.xlu0 %58
  %vm61 = vcmask 502784
  %62 = vst.msk [vmem:[#allocation2 + $0x28] sm:$0xf] %vm61, %v59
  %vm63 = vcmask 1027584
  %64 = vst.msk [vmem:[#allocation2 + $0x28] sm:$0xf] %vm63, %v59
  %65 = vrot.lane.b32.xlu0 %v17, 125
  %v66 = vpop.permute.xlu0 %65
  %vm68 = vcmask 494592
  %69 = vst.msk [vmem:[#allocation2 + $0x30] sm:$0xf] %vm68, %v66
  %vm70 = vcmask 1019392
  %71 = vst.msk [vmem:[#allocation2 + $0x30] sm:$0xf] %vm70, %v66
  %v72 = vld [vmem:[%s1] sm:$0xff]
  %v73 = vld [vmem:[#allocation2] sm:$0xff]
  %v74 = vld [vmem:[#allocation2 + $0x8] sm:$0xff]
  %v75 = vld [vmem:[#allocation2 + $0x10] sm:$0xff]
  %v76 = vld [vmem:[#allocation2 + $0x18] sm:$0xff]
  %v77 = vld [vmem:[#allocation2 + $0x20] sm:$0xff]
  %v78 = vld [vmem:[#allocation2 + $0x28] sm:$0xff]
  %v79 = vld [vmem:[#allocation2 + $0x30] sm:$0xff]
  %vm80 = vcmask 457728
  %v82 = vsel %vm80, %v72, 0
  %84 = vmatprep.subr.mxu0 0.0
  %85 = vmatpush1.msra.mxu0 0.0
  %86 = vmatprep.subr.mxu0 0.0
  %87 = vmatpush1.msra.mxu0 0.0
  %88 = vmatprep.subr.mxu0 0.0
  %89 = vmatpush1.msra.mxu0 0.0
  %90 = vmatprep.subr.mxu0 0.0
  %91 = vmatpush1.msra.mxu0 0.0
  %92 = vmatprep.subr.mxu0 0.0
  %93 = vmatpush1.msra.mxu0 0.0
  %94 = vmatprep.subr.mxu0 0.0
  %95 = vmatpush1.msra.mxu0 0.0
  %96 = vmatprep.subr.mxu0 0.0
  %97 = vmatpush1.msra.mxu0 0.0
  %98 = vmatprep.subr.mxu0 0.0
  %99 = vmatpush1.msra.mxu0 0.0
  %100 = vmatprep.subr.mxu0 0.0
  %101 = vmatpush1.msra.mxu0 0.0
  %102 = vmatprep.subr.mxu0 0.0
  %103 = vmatpush1.msra.mxu0 %v79
  %104 = vmatprep.subr.mxu0 0.0
  %105 = vmatpush1.msra.mxu0 %v78
  %106 = vmatprep.subr.mxu0 0.0
  %107 = vmatpush1.msra.mxu0 %v77
  %108 = vmatprep.subr.mxu0 0.0
  %109 = vmatpush1.msra.mxu0 %v76
  %110 = vmatprep.subr.mxu0 0.0
  %111 = vmatpush1.msra.mxu0 %v75
  %112 = vmatprep.subr.mxu0 0.0
  %113 = vmatpush1.msra.mxu0 %v74
  %114 = vmatprep.subr.mxu0 0.0
  %115 = vmatpush1.msra.mxu0 %v73
  %116 = vmatprep.subr.mxu0 0.0
  %117 = vmatpush2.msra.mxu0 0.0
  %118 = vmatprep.subr.mxu0 0.0
  %119 = vmatpush2.msra.mxu0 0.0
  %120 = vmatprep.subr.mxu0 0.0
  %121 = vmatpush2.msra.mxu0 0.0
  %122 = vmatprep.subr.mxu0 0.0
  %123 = vmatpush2.msra.mxu0 0.0
  %124 = vmatprep.subr.mxu0 0.0
  %125 = vmatpush2.msra.mxu0 0.0
  %126 = vmatprep.subr.mxu0 0.0
  %127 = vmatpush2.msra.mxu0 0.0
  %128 = vmatprep.subr.mxu0 0.0
  %129 = vmatpush2.msra.mxu0 0.0
  %130 = vmatprep.subr.mxu0 0.0
  %131 = vmatpush2.msra.mxu0 0.0
  %132 = vmatprep.subr.mxu0 0.0
  %133 = vmatpush2.msra.mxu0 0.0
  %134 = vmatprep.subr.mxu0 0.0
  %135 = vmatpush2.msra.mxu0 0.0
  %136 = vmatprep.subr.mxu0 0.0
  %137 = vmatpush2.msra.mxu0 0.0
  %138 = vmatprep.subr.mxu0 0.0
  %139 = vmatpush2.msra.mxu0 0.0
  %140 = vmatprep.subr.mxu0 0.0
  %141 = vmatpush2.msra.mxu0 0.0
  %142 = vmatprep.subr.mxu0 0.0
  %143 = vmatpush2.msra.mxu0 0.0
  %144 = vmatprep.subr.mxu0 0.0
  %145 = vmatpush2.msra.mxu0 0.0
  %146 = vmatprep.subr.mxu0 0.0
  %147 = vmatpush2.msra.mxu0 0.0
  %148 = vmatprep.mubr.f32.mxu0 0.0
  %149 = vmatmul.mubr.f32.gmra.mxu0 %v82
  %v150 = vpop.f32.mrf.mxu0
  %v151 = vadd.f32 0.0, %v150
  %v152 = vpop.f32.mrf.mxu0
  %153 = vdwg.mxu0
  %v154 = vld [vmem:[%s2] sm:$0xff]
  %156 = vset.pattern.permute.xlu0 0
  %157 = vperm.xlu0 %156, %v154
  %v158 = vpop.permute.xlu0 %157
  %v160 = vmul.f32 %v151, %v158
  %v161 = vld [vmem:[%s3] sm:$0xff]
  %163 = vset.pattern.permute.xlu0 0
  %164 = vperm.xlu0 %163, %v161
  %v165 = vpop.permute.xlu0 %164
  %v167 = vadd.f32 %v160, %v165
  %v168 = vmax.f32 %v167, 0.0
  %169 = vst [vmem:[%s4] sm:$0xff] %v168
  // Predicated region
  $region18: #{_lambda_.4} parent=0 // pred_check
    _
  $region19: #{_lambda_.4} parent=0 // pred_check_branch
    %171 = sbr.rel (0) target = $region21
  $region20: #{_lambda_.4} parent=0 // pred_region
    _
  $region21: #{_lambda_.4} parent=0 // pred_fallthru
    _
  // Predicated region
  $region22: #{_lambda_.4} parent=0 // pred_check
    _
  $region23: #{_lambda_.4} parent=0 // pred_check_branch
    %173 = sbr.rel (0) target = $region25
  $region24: #{_lambda_.4} parent=0 // pred_region
    _
  $region25: #{_lambda_.4} parent=0 // pred_fallthru
    _

// kernel: _lambda_.5
$region0: #{_lambda_.5}
  #allocation0 [shape = 'u32[]', space=smem, size = 0x4, offset = 0x4, fixed_abs, tag = 'smem constant byte address 0x4 - core index']
  #allocation1 [shape = 'u32[144,128]{1,0:T(1,128)}', space=vmem, size = 0x12000, scoped, tag = 'internal scratch']
  #allocation2 [shape = 'f32[56,128]{1,0:T(8,128)}', space=vmem, size = 0x7000, scoped, tag = 'scratch operand']
  #allocation3 [shape = 'f32[56,128]{1,0:T(8,128)}', space=vmem, size = 0x7000, scoped, tag = 'scratch operand']
  %s0 = inlined_call_operand.vmem [shape: f32[8,128], index: 0, kind: input, shape index: {}]
  %s1 = inlined_call_operand.vmem [shape: f32[8,56], index: 1, kind: input, shape index: {}]
  %s2 = inlined_call_operand.vmem [shape: f32[8,1], index: 2, kind: input, shape index: {}]
  %s3 = inlined_call_operand.vmem [shape: f32[8,1], index: 3, kind: input, shape index: {}]
  %s4 = inlined_call_operand.vmem [shape: f32[8,56], index: 4, kind: input, shape index: {}]
  %s5 = inlined_call_operand.vmem [shape: f32[8,1], index: 5, kind: input, shape index: {}]
  %s6 = inlined_call_operand.vmem [shape: f32[2,8], index: 6, kind: input, shape index: {}]
  %s7 = inlined_call_operand.vmem [shape: f32[8,2], index: 7, kind: input, shape index: {}]
  %s8 = inlined_call_operand.vmem [shape: f32[2,128,64], index: 8, kind: input, shape index: {}]
  %s9 = inlined_call_operand.vmem [shape: f32[128,64], index: 9, kind: input, shape index: {}]
  %s10 = inlined_call_operand.vmem [shape: f32[8,64], index: 10, kind: output, shape index: {}]
  %s11 = sld [smem:[#allocation0]]
  $region50: #{_lambda_.5} parent=0
    _
  %s13 = ssub.s32 1, %s11
  %s14 = scalar_select 0, %s13, %s11
  // Predicated region
  $region2: #{_lambda_.5} parent=0 // pred_check
    _
  $region3: #{_lambda_.5} parent=0 // pred_check_branch
    %16 = sbr.rel (0) target = $region5
  $region4: #{_lambda_.5} parent=0 // pred_region
    _
  $region5: #{_lambda_.5} parent=0 // pred_fallthru
    _
  // Predicated region
  $region6: #{_lambda_.5} parent=0 // pred_check
    _
  $region7: #{_lambda_.5} parent=0 // pred_check_branch
    %18 = sbr.rel (0) target = $region9
  $region8: #{_lambda_.5} parent=0 // pred_region
    _
  $region9: #{_lambda_.5} parent=0 // pred_fallthru
    _
  // Predicated region
  $region10: #{_lambda_.5} parent=0 // pred_check
    _
  $region11: #{_lambda_.5} parent=0 // pred_check_branch
    %20 = sbr.rel (0) target = $region13
  $region12: #{_lambda_.5} parent=0 // pred_region
    _
  $region13: #{_lambda_.5} parent=0 // pred_fallthru
    _
  // Predicated region
  $region14: #{_lambda_.5} parent=0 // pred_check
    _
  $region15: #{_lambda_.5} parent=0 // pred_check_branch
    %22 = sbr.rel (0) target = $region17
  $region16: #{_lambda_.5} parent=0 // pred_region
    _
  $region17: #{_lambda_.5} parent=0 // pred_fallthru
    _
  // Predicated region
  $region18: #{_lambda_.5} parent=0 // pred_check
    _
  $region19: #{_lambda_.5} parent=0 // pred_check_branch
    %24 = sbr.rel (0) target = $region21
  $region20: #{_lambda_.5} parent=0 // pred_region
    _
  $region21: #{_lambda_.5} parent=0 // pred_fallthru
    _
  // Predicated region
  $region22: #{_lambda_.5} parent=0 // pred_check
    _
  $region23: #{_lambda_.5} parent=0 // pred_check_branch
    %26 = sbr.rel (0) target = $region25
  $region24: #{_lambda_.5} parent=0 // pred_region
    _
  $region25: #{_lambda_.5} parent=0 // pred_fallthru
    _
  // Predicated region
  $region26: #{_lambda_.5} parent=0 // pred_check
    _
  $region27: #{_lambda_.5} parent=0 // pred_check_branch
    %28 = sbr.rel (0) target = $region29
  $region28: #{_lambda_.5} parent=0 // pred_region
    _
  $region29: #{_lambda_.5} parent=0 // pred_fallthru
    _
  // Predicated region
  $region30: #{_lambda_.5} parent=0 // pred_check
    _
  $region31: #{_lambda_.5} parent=0 // pred_check_branch
    %30 = sbr.rel (0) target = $region33
  $region32: #{_lambda_.5} parent=0 // pred_region
    _
  $region33: #{_lambda_.5} parent=0 // pred_fallthru
    _
  // Predicated region
  $region34: #{_lambda_.5} parent=0 // pred_check
    _
  $region35: #{_lambda_.5} parent=0 // pred_check_branch
    %32 = sbr.rel (0) target = $region37
  $region36: #{_lambda_.5} parent=0 // pred_region
    _
  $region37: #{_lambda_.5} parent=0 // pred_fallthru
    _
  // Predicated region
  $region38: #{_lambda_.5} parent=0 // pred_check
    _
  $region39: #{_lambda_.5} parent=0 // pred_check_branch
    %34 = sbr.rel (0) target = $region41
  $region40: #{_lambda_.5} parent=0 // pred_region
    _
  $region41: #{_lambda_.5} parent=0 // pred_fallthru
    _
  %v35 = vld [vmem:[%s0] sm:$0xff]
  %v36 = vld [vmem:[%s8] sm:$0xff]
  %v37 = vld [vmem:[%s8 + $0x8] sm:$0xff]
  %v38 = vld [vmem:[%s8 + $0x10] sm:$0xff]
  %v39 = vld [vmem:[%s8 + $0x18] sm:$0xff]
  %v40 = vld [vmem:[%s8 + $0x20] sm:$0xff]
  %v41 = vld [vmem:[%s8 + $0x28] sm:$0xff]
  %v42 = vld [vmem:[%s8 + $0x30] sm:$0xff]
  %v43 = vld [vmem:[%s8 + $0x38] sm:$0xff]
  %v44 = vld [vmem:[%s8 + $0x40] sm:$0xff]
  %v45 = vld [vmem:[%s8 + $0x48] sm:$0xff]
  %v46 = vld [vmem:[%s8 + $0x50] sm:$0xff]
  %v47 = vld [vmem:[%s8 + $0x58] sm:$0xff]
  %v48 = vld [vmem:[%s8 + $0x60] sm:$0xff]
  %v49 = vld [vmem:[%s8 + $0x68] sm:$0xff]
  %v50 = vld [vmem:[%s8 + $0x70] sm:$0xff]
  %v51 = vld [vmem:[%s8 + $0x78] sm:$0xff]
  %52 = vmatprep.subr.mxu0 0.0
  %53 = vmatpush1.msra.mxu0 %v51
  %54 = vmatprep.subr.mxu0 0.0
  %55 = vmatpush1.msra.mxu0 %v50
  %56 = vmatprep.subr.mxu0 0.0
  %57 = vmatpush1.msra.mxu0 %v49
  %58 = vmatprep.subr.mxu0 0.0
  %59 = vmatpush1.msra.mxu0 %v48
  %60 = vmatprep.subr.mxu0 0.0
  %61 = vmatpush1.msra.mxu0 %v47
  %62 = vmatprep.subr.mxu0 0.0
  %63 = vmatpush1.msra.mxu0 %v46
  %64 = vmatprep.subr.mxu0 0.0
  %65 = vmatpush1.msra.mxu0 %v45
  %66 = vmatprep.subr.mxu0 0.0
  %67 = vmatpush1.msra.mxu0 %v44
  %68 = vmatprep.subr.mxu0 0.0
  %69 = vmatpush1.msra.mxu0 %v43
  %70 = vmatprep.subr.mxu0 0.0
  %71 = vmatpush1.msra.mxu0 %v42
  %72 = vmatprep.subr.mxu0 0.0
  %73 = vmatpush1.msra.mxu0 %v41
  %74 = vmatprep.subr.mxu0 0.0
  %75 = vmatpush1.msra.mxu0 %v40
  %76 = vmatprep.subr.mxu0 0.0
  %77 = vmatpush1.msra.mxu0 %v39
  %78 = vmatprep.subr.mxu0 0.0
  %79 = vmatpush1.msra.mxu0 %v38
  %80 = vmatprep.subr.mxu0 0.0
  %81 = vmatpush1.msra.mxu0 %v37
  %82 = vmatprep.subr.mxu0 0.0
  %83 = vmatpush1.msra.mxu0 %v36
  %84 = vmatprep.subr.mxu0 0.0
  %85 = vmatpush2.msra.mxu0 0.0
  %86 = vmatprep.subr.mxu0 0.0
  %87 = vmatpush2.msra.mxu0 0.0
  %88 = vmatprep.subr.mxu0 0.0
  %89 = vmatpush2.msra.mxu0 0.0
  %90 = vmatprep.subr.mxu0 0.0
  %91 = vmatpush2.msra.mxu0 0.0
  %92 = vmatprep.subr.mxu0 0.0
  %93 = vmatpush2.msra.mxu0 0.0
  %94 = vmatprep.subr.mxu0 0.0
  %95 = vmatpush2.msra.mxu0 0.0
  %96 = vmatprep.subr.mxu0 0.0
  %97 = vmatpush2.msra.mxu0 0.0
  %98 = vmatprep.subr.mxu0 0.0
  %99 = vmatpush2.msra.mxu0 0.0
  %100 = vmatprep.subr.mxu0 0.0
  %101 = vmatpush2.msra.mxu0 0.0
  %102 = vmatprep.subr.mxu0 0.0
  %103 = vmatpush2.msra.mxu0 0.0
  %104 = vmatprep.subr.mxu0 0.0
  %105 = vmatpush2.msra.mxu0 0.0
  %106 = vmatprep.subr.mxu0 0.0
  %107 = vmatpush2.msra.mxu0 0.0
  %108 = vmatprep.subr.mxu0 0.0
  %109 = vmatpush2.msra.mxu0 0.0
  %110 = vmatprep.subr.mxu0 0.0
  %111 = vmatpush2.msra.mxu0 0.0
  %112 = vmatprep.subr.mxu0 0.0
  %113 = vmatpush2.msra.mxu0 0.0
  %114 = vmatprep.subr.mxu0 0.0
  %115 = vmatpush2.msra.mxu0 0.0
  %116 = vmatprep.mubr.f32.mxu0 0.0
  %117 = vmatmul.mubr.f32.gmra.mxu0 %v35
  %v118 = vpop.f32.mrf.mxu0
  %v119 = vadd.f32 0.0, %v118
  %v120 = vpop.f32.mrf.mxu0
  %121 = vdwg.mxu0
  %s122 = scalar_lea.vmem %s8, 128
  %v123 = vld [vmem:[%s122] sm:$0xff]
  %v124 = vld [vmem:[%s122 + $0x8] sm:$0xff]
  %v125 = vld [vmem:[%s122 + $0x10] sm:$0xff]
  %v126 = vld [vmem:[%s122 + $0x18] sm:$0xff]
  %v127 = vld [vmem:[%s122 + $0x20] sm:$0xff]
  %v128 = vld [vmem:[%s122 + $0x28] sm:$0xff]
  %v129 = vld [vmem:[%s122 + $0x30] sm:$0xff]
  %v130 = vld [vmem:[%s122 + $0x38] sm:$0xff]
  %v131 = vld [vmem:[%s122 + $0x40] sm:$0xff]
  %v132 = vld [vmem:[%s122 + $0x48] sm:$0xff]
  %v133 = vld [vmem:[%s122 + $0x50] sm:$0xff]
  %v134 = vld [vmem:[%s122 + $0x58] sm:$0xff]
  %v135 = vld [vmem:[%s122 + $0x60] sm:$0xff]
  %v136 = vld [vmem:[%s122 + $0x68] sm:$0xff]
  %v137 = vld [vmem:[%s122 + $0x70] sm:$0xff]
  %v138 = vld [vmem:[%s122 + $0x78] sm:$0xff]
  %139 = vmatprep.subr.mxu0 0.0
  %140 = vmatpush1.msra.mxu0 %v138
  %141 = vmatprep.subr.mxu0 0.0
  %142 = vmatpush1.msra.mxu0 %v137
  %143 = vmatprep.subr.mxu0 0.0
  %144 = vmatpush1.msra.mxu0 %v136
  %145 = vmatprep.subr.mxu0 0.0
  %146 = vmatpush1.msra.mxu0 %v135
  %147 = vmatprep.subr.mxu0 0.0
  %148 = vmatpush1.msra.mxu0 %v134
  %149 = vmatprep.subr.mxu0 0.0
  %150 = vmatpush1.msra.mxu0 %v133
  %151 = vmatprep.subr.mxu0 0.0
  %152 = vmatpush1.msra.mxu0 %v132
  %153 = vmatprep.subr.mxu0 0.0
  %154 = vmatpush1.msra.mxu0 %v131
  %155 = vmatprep.subr.mxu0 0.0
  %156 = vmatpush1.msra.mxu0 %v130
  %157 = vmatprep.subr.mxu0 0.0
  %158 = vmatpush1.msra.mxu0 %v129
  %159 = vmatprep.subr.mxu0 0.0
  %160 = vmatpush1.msra.mxu0 %v128
  %161 = vmatprep.subr.mxu0 0.0
  %162 = vmatpush1.msra.mxu0 %v127
  %163 = vmatprep.subr.mxu0 0.0
  %164 = vmatpush1.msra.mxu0 %v126
  %165 = vmatprep.subr.mxu0 0.0
  %166 = vmatpush1.msra.mxu0 %v125
  %167 = vmatprep.subr.mxu0 0.0
  %168 = vmatpush1.msra.mxu0 %v124
  %169 = vmatprep.subr.mxu0 0.0
  %170 = vmatpush1.msra.mxu0 %v123
  %171 = vmatprep.subr.mxu0 0.0
  %172 = vmatpush2.msra.mxu0 0.0
  %173 = vmatprep.subr.mxu0 0.0
  %174 = vmatpush2.msra.mxu0 0.0
  %175 = vmatprep.subr.mxu0 0.0
  %176 = vmatpush2.msra.mxu0 0.0
  %177 = vmatprep.subr.mxu0 0.0
  %178 = vmatpush2.msra.mxu0 0.0
  %179 = vmatprep.subr.mxu0 0.0
  %180 = vmatpush2.msra.mxu0 0.0
  %181 = vmatprep.subr.mxu0 0.0
  %182 = vmatpush2.msra.mxu0 0.0
  %183 = vmatprep.subr.mxu0 0.0
  %184 = vmatpush2.msra.mxu0 0.0
  %185 = vmatprep.subr.mxu0 0.0
  %186 = vmatpush2.msra.mxu0 0.0
  %187 = vmatprep.subr.mxu0 0.0
  %188 = vmatpush2.msra.mxu0 0.0
  %189 = vmatprep.subr.mxu0 0.0
  %190 = vmatpush2.msra.mxu0 0.0
  %191 = vmatprep.subr.mxu0 0.0
  %192 = vmatpush2.msra.mxu0 0.0
  %193 = vmatprep.subr.mxu0 0.0
  %194 = vmatpush2.msra.mxu0 0.0
  %195 = vmatprep.subr.mxu0 0.0
  %196 = vmatpush2.msra.mxu0 0.0
  %197 = vmatprep.subr.mxu0 0.0
  %198 = vmatpush2.msra.mxu0 0.0
  %199 = vmatprep.subr.mxu0 0.0
  %200 = vmatpush2.msra.mxu0 0.0
  %201 = vmatprep.subr.mxu0 0.0
  %202 = vmatpush2.msra.mxu0 0.0
  %203 = vmatprep.mubr.f32.mxu0 0.0
  %204 = vmatmul.mubr.f32.gmra.mxu0 %v35
  %v205 = vpop.f32.mrf.mxu0
  %v206 = vadd.f32 0.0, %v205
  %v207 = vpop.f32.mrf.mxu0
  %208 = vdwg.mxu0
  %v209 = vmax.f32 %v119, %v206
  %210 = vst [vmem:[#allocation2] sm:$0xff] 0.0
  %211 = vst [vmem:[#allocation2 + $0x8] sm:$0xff] 0.0
  %212 = vst [vmem:[#allocation2 + $0x10] sm:$0xff] 0.0
  %213 = vst [vmem:[#allocation2 + $0x18] sm:$0xff] 0.0
  %214 = vst [vmem:[#allocation2 + $0x20] sm:$0xff] 0.0
  %215 = vst [vmem:[#allocation2 + $0x28] sm:$0xff] 0.0
  %216 = vst [vmem:[#allocation2 + $0x30] sm:$0xff] 0.0
  %218 = vrot.lane.b32.xlu0 %v35, 3
  %v219 = vpop.permute.xlu0 %218
  %vm221 = vcmask 523288
  %222 = vst.msk [vmem:[#allocation2] sm:$0xff] %vm221, %v219
  %vm223 = vcmask 1048088
  %224 = vst.msk [vmem:[#allocation2] sm:$0xff] %vm223, %v219
  %225 = vrot.lane.b32.xlu0 %v35, 2
  %v226 = vpop.permute.xlu0 %225
  %vm228 = vcmask 523280
  %229 = vst.msk [vmem:[#allocation2 + $0x8] sm:$0xff] %vm228, %v226
  %vm230 = vcmask 1048080
  %231 = vst.msk [vmem:[#allocation2 + $0x8] sm:$0xff] %vm230, %v226
  %232 = vrot.lane.b32.xlu0 %v35, 1
  %v233 = vpop.permute.xlu0 %232
  %vm235 = vcmask 523272
  %236 = vst.msk [vmem:[#allocation2 + $0x10] sm:$0xff] %vm235, %v233
  %vm237 = vcmask 1048072
  %238 = vst.msk [vmem:[#allocation2 + $0x10] sm:$0xff] %vm237, %v233
  %vm239 = vcmask 523264
  %240 = vst.msk [vmem:[#allocation2 + $0x18] sm:$0xff] %vm239, %v35
  %vm241 = vcmask 1048064
  %242 = vst.msk [vmem:[#allocation2 + $0x18] sm:$0xff] %vm241, %v35
  %243 = vrot.lane.b32.xlu0 %v35, 127
  %v244 = vpop.permute.xlu0 %243
  %vm246 = vcmask 515072
  %247 = vst.msk [vmem:[#allocation2 + $0x20] sm:$0xff] %vm246, %v244
  %vm248 = vcmask 1039872
  %249 = vst.msk [vmem:[#allocation2 + $0x20] sm:$0xff] %vm248, %v244
  %250 = vrot.lane.b32.xlu0 %v35, 126
  %v251 = vpop.permute.xlu0 %250
  %vm253 = vcmask 506880
  %254 = vst.msk [vmem:[#allocation2 + $0x28] sm:$0xff] %vm253, %v251
  %vm255 = vcmask 1031680
  %256 = vst.msk [vmem:[#allocation2 + $0x28] sm:$0xff] %vm255, %v251
  %257 = vrot.lane.b32.xlu0 %v35, 125
  %v258 = vpop.permute.xlu0 %257
  %vm260 = vcmask 498688
  %261 = vst.msk [vmem:[#allocation2 + $0x30] sm:$0xff] %vm260, %v258
  %vm262 = vcmask 1023488
  %263 = vst.msk [vmem:[#allocation2 + $0x30] sm:$0xff] %vm262, %v258
  %v264 = vld [vmem:[%s1] sm:$0xff]
  %v265 = vld [vmem:[#allocation2] sm:$0xff]
  %v266 = vld [vmem:[#allocation2 + $0x8] sm:$0xff]
  %v267 = vld [vmem:[#allocation2 + $0x10] sm:$0xff]
  %v268 = vld [vmem:[#allocation2 + $0x18] sm:$0xff]
  %v269 = vld [vmem:[#allocation2 + $0x20] sm:$0xff]
  %v270 = vld [vmem:[#allocation2 + $0x28] sm:$0xff]
  %v271 = vld [vmem:[#allocation2 + $0x30] sm:$0xff]
  %vm272 = vcmask 457728
  %v274 = vsel %vm272, %v264, 0
  %276 = vmatprep.subr.mxu0 0.0
  %277 = vmatpush1.msra.mxu0 0.0
  %278 = vmatprep.subr.mxu0 0.0
  %279 = vmatpush1.msra.mxu0 0.0
  %280 = vmatprep.subr.mxu0 0.0
  %281 = vmatpush1.msra.mxu0 0.0
  %282 = vmatprep.subr.mxu0 0.0
  %283 = vmatpush1.msra.mxu0 0.0
  %284 = vmatprep.subr.mxu0 0.0
  %285 = vmatpush1.msra.mxu0 0.0
  %286 = vmatprep.subr.mxu0 0.0
  %287 = vmatpush1.msra.mxu0 0.0
  %288 = vmatprep.subr.mxu0 0.0
  %289 = vmatpush1.msra.mxu0 0.0
  %290 = vmatprep.subr.mxu0 0.0
  %291 = vmatpush1.msra.mxu0 0.0
  %292 = vmatprep.subr.mxu0 0.0
  %293 = vmatpush1.msra.mxu0 0.0
  %294 = vmatprep.subr.mxu0 0.0
  %295 = vmatpush1.msra.mxu0 %v271
  %296 = vmatprep.subr.mxu0 0.0
  %297 = vmatpush1.msra.mxu0 %v270
  %298 = vmatprep.subr.mxu0 0.0
  %299 = vmatpush1.msra.mxu0 %v269
  %300 = vmatprep.subr.mxu0 0.0
  %301 = vmatpush1.msra.mxu0 %v268
  %302 = vmatprep.subr.mxu0 0.0
  %303 = vmatpush1.msra.mxu0 %v267
  %304 = vmatprep.subr.mxu0 0.0
  %305 = vmatpush1.msra.mxu0 %v266
  %306 = vmatprep.subr.mxu0 0.0
  %307 = vmatpush1.msra.mxu0 %v265
  %308 = vmatprep.subr.mxu0 0.0
  %309 = vmatpush2.msra.mxu0 0.0
  %310 = vmatprep.subr.mxu0 0.0
  %311 = vmatpush2.msra.mxu0 0.0
  %312 = vmatprep.subr.mxu0 0.0
  %313 = vmatpush2.msra.mxu0 0.0
  %314 = vmatprep.subr.mxu0 0.0
  %315 = vmatpush2.msra.mxu0 0.0
  %316 = vmatprep.subr.mxu0 0.0
  %317 = vmatpush2.msra.mxu0 0.0
  %318 = vmatprep.subr.mxu0 0.0
  %319 = vmatpush2.msra.mxu0 0.0
  %320 = vmatprep.subr.mxu0 0.0
  %321 = vmatpush2.msra.mxu0 0.0
  %322 = vmatprep.subr.mxu0 0.0
  %323 = vmatpush2.msra.mxu0 0.0
  %324 = vmatprep.subr.mxu0 0.0
  %325 = vmatpush2.msra.mxu0 0.0
  %326 = vmatprep.subr.mxu0 0.0
  %327 = vmatpush2.msra.mxu0 0.0
  %328 = vmatprep.subr.mxu0 0.0
  %329 = vmatpush2.msra.mxu0 0.0
  %330 = vmatprep.subr.mxu0 0.0
  %331 = vmatpush2.msra.mxu0 0.0
  %332 = vmatprep.subr.mxu0 0.0
  %333 = vmatpush2.msra.mxu0 0.0
  %334 = vmatprep.subr.mxu0 0.0
  %335 = vmatpush2.msra.mxu0 0.0
  %336 = vmatprep.subr.mxu0 0.0
  %337 = vmatpush2.msra.mxu0 0.0
  %338 = vmatprep.subr.mxu0 0.0
  %339 = vmatpush2.msra.mxu0 0.0
  %340 = vmatprep.mubr.f32.mxu0 0.0
  %341 = vmatmul.mubr.f32.gmra.mxu0 %v274
  %v342 = vpop.f32.mrf.mxu0
  %v343 = vadd.f32 0.0, %v342
  %v344 = vpop.f32.mrf.mxu0
  %345 = vdwg.mxu0
  %v346 = vld [vmem:[%s2] sm:$0xff]
  %348 = vset.pattern.permute.xlu0 0
  %349 = vperm.xlu0 %348, %v346
  %v350 = vpop.permute.xlu0 %349
  %v352 = vmul.f32 %v343, %v350
  %v353 = vld [vmem:[%s3] sm:$0xff]
  %355 = vset.pattern.permute.xlu0 0
  %356 = vperm.xlu0 %355, %v353
  %v357 = vpop.permute.xlu0 %356
  %v359 = vadd.f32 %v352, %v357
  %v360 = vmax.f32 %v359, 0.0
  %361 = vst [vmem:[#allocation3] sm:$0xff] 0.0
  %362 = vst [vmem:[#allocation3 + $0x8] sm:$0xff] 0.0
  %363 = vst [vmem:[#allocation3 + $0x10] sm:$0xff] 0.0
  %364 = vst [vmem:[#allocation3 + $0x18] sm:$0xff] 0.0
  %365 = vst [vmem:[#allocation3 + $0x20] sm:$0xff] 0.0
  %366 = vst [vmem:[#allocation3 + $0x28] sm:$0xff] 0.0
  %367 = vst [vmem:[#allocation3 + $0x30] sm:$0xff] 0.0
  %369 = vrot.lane.b32.xlu0 %v360, 3
  %v370 = vpop.permute.xlu0 %369
  %372 = vst.msk [vmem:[#allocation3] sm:$0xff] %vm221, %v370
  %373 = vst.msk [vmem:[#allocation3] sm:$0xff] %vm223, %v370
  %374 = vrot.lane.b32.xlu0 %v360, 2
  %v375 = vpop.permute.xlu0 %374
  %377 = vst.msk [vmem:[#allocation3 + $0x8] sm:$0xff] %vm228, %v375
  %378 = vst.msk [vmem:[#allocation3 + $0x8] sm:$0xff] %vm230, %v375
  %379 = vrot.lane.b32.xlu0 %v360, 1
  %v380 = vpop.permute.xlu0 %379
  %382 = vst.msk [vmem:[#allocation3 + $0x10] sm:$0xff] %vm235, %v380
  %383 = vst.msk [vmem:[#allocation3 + $0x10] sm:$0xff] %vm237, %v380
  %384 = vst.msk [vmem:[#allocation3 + $0x18] sm:$0xff] %vm239, %v360
  %385 = vst.msk [vmem:[#allocation3 + $0x18] sm:$0xff] %vm241, %v360
  %386 = vrot.lane.b32.xlu0 %v360, 127
  %v387 = vpop.permute.xlu0 %386
  %389 = vst.msk [vmem:[#allocation3 + $0x20] sm:$0xff] %vm246, %v387
  %390 = vst.msk [vmem:[#allocation3 + $0x20] sm:$0xff] %vm248, %v387
  %391 = vrot.lane.b32.xlu0 %v360, 126
  %v392 = vpop.permute.xlu0 %391
  %394 = vst.msk [vmem:[#allocation3 + $0x28] sm:$0xff] %vm253, %v392
  %395 = vst.msk [vmem:[#allocation3 + $0x28] sm:$0xff] %vm255, %v392
  %396 = vrot.lane.b32.xlu0 %v360, 125
  %v397 = vpop.permute.xlu0 %396
  %399 = vst.msk [vmem:[#allocation3 + $0x30] sm:$0xff] %vm260, %v397
  %400 = vst.msk [vmem:[#allocation3 + $0x30] sm:$0xff] %vm262, %v397
  %v401 = vld [vmem:[%s4] sm:$0xff]
  %v402 = vld [vmem:[#allocation3] sm:$0xff]
  %v403 = vld [vmem:[#allocation3 + $0x8] sm:$0xff]
  %v404 = vld [vmem:[#allocation3 + $0x10] sm:$0xff]
  %v405 = vld [vmem:[#allocation3 + $0x18] sm:$0xff]
  %v406 = vld [vmem:[#allocation3 + $0x20] sm:$0xff]
  %v407 = vld [vmem:[#allocation3 + $0x28] sm:$0xff]
  %v408 = vld [vmem:[#allocation3 + $0x30] sm:$0xff]
  %v410 = vsel %vm272, %v401, 0
  %412 = vmatprep.subr.mxu0 0.0
  %413 = vmatpush1.msra.mxu0 0.0
  %414 = vmatprep.subr.mxu0 0.0
  %415 = vmatpush1.msra.mxu0 0.0
  %416 = vmatprep.subr.mxu0 0.0
  %417 = vmatpush1.msra.mxu0 0.0
  %418 = vmatprep.subr.mxu0 0.0
  %419 = vmatpush1.msra.mxu0 0.0
  %420 = vmatprep.subr.mxu0 0.0
  %421 = vmatpush1.msra.mxu0 0.0
  %422 = vmatprep.subr.mxu0 0.0
  %423 = vmatpush1.msra.mxu0 0.0
  %424 = vmatprep.subr.mxu0 0.0
  %425 = vmatpush1.msra.mxu0 0.0
  %426 = vmatprep.subr.mxu0 0.0
  %427 = vmatpush1.msra.mxu0 0.0
  %428 = vmatprep.subr.mxu0 0.0
  %429 = vmatpush1.msra.mxu0 0.0
  %430 = vmatprep.subr.mxu0 0.0
  %431 = vmatpush1.msra.mxu0 %v408
  %432 = vmatprep.subr.mxu0 0.0
  %433 = vmatpush1.msra.mxu0 %v407
  %434 = vmatprep.subr.mxu0 0.0
  %435 = vmatpush1.msra.mxu0 %v406
  %436 = vmatprep.subr.mxu0 0.0
  %437 = vmatpush1.msra.mxu0 %v405
  %438 = vmatprep.subr.mxu0 0.0
  %439 = vmatpush1.msra.mxu0 %v404
  %440 = vmatprep.subr.mxu0 0.0
  %441 = vmatpush1.msra.mxu0 %v403
  %442 = vmatprep.subr.mxu0 0.0
  %443 = vmatpush1.msra.mxu0 %v402
  %444 = vmatprep.subr.mxu0 0.0
  %445 = vmatpush2.msra.mxu0 0.0
  %446 = vmatprep.subr.mxu0 0.0
  %447 = vmatpush2.msra.mxu0 0.0
  %448 = vmatprep.subr.mxu0 0.0
  %449 = vmatpush2.msra.mxu0 0.0
  %450 = vmatprep.subr.mxu0 0.0
  %451 = vmatpush2.msra.mxu0 0.0
  %452 = vmatprep.subr.mxu0 0.0
  %453 = vmatpush2.msra.mxu0 0.0
  %454 = vmatprep.subr.mxu0 0.0
  %455 = vmatpush2.msra.mxu0 0.0
  %456 = vmatprep.subr.mxu0 0.0
  %457 = vmatpush2.msra.mxu0 0.0
  %458 = vmatprep.subr.mxu0 0.0
  %459 = vmatpush2.msra.mxu0 0.0
  %460 = vmatprep.subr.mxu0 0.0
  %461 = vmatpush2.msra.mxu0 0.0
  %462 = vmatprep.subr.mxu0 0.0
  %463 = vmatpush2.msra.mxu0 0.0
  %464 = vmatprep.subr.mxu0 0.0
  %465 = vmatpush2.msra.mxu0 0.0
  %466 = vmatprep.subr.mxu0 0.0
  %467 = vmatpush2.msra.mxu0 0.0
  %468 = vmatprep.subr.mxu0 0.0
  %469 = vmatpush2.msra.mxu0 0.0
  %470 = vmatprep.subr.mxu0 0.0
  %471 = vmatpush2.msra.mxu0 0.0
  %472 = vmatprep.subr.mxu0 0.0
  %473 = vmatpush2.msra.mxu0 0.0
  %474 = vmatprep.subr.mxu0 0.0
  %475 = vmatpush2.msra.mxu0 0.0
  %476 = vmatprep.mubr.f32.mxu0 0.0
  %477 = vmatmul.mubr.f32.gmra.mxu0 %v410
  %v478 = vpop.f32.mrf.mxu0
  %v479 = vadd.f32 0.0, %v478
  %v480 = vpop.f32.mrf.mxu0
  %481 = vdwg.mxu0
  %v482 = vld [vmem:[%s9] sm:$0xff]
  %v483 = vld [vmem:[%s9 + $0x8] sm:$0xff]
  %v484 = vld [vmem:[%s9 + $0x10] sm:$0xff]
  %v485 = vld [vmem:[%s9 + $0x18] sm:$0xff]
  %v486 = vld [vmem:[%s9 + $0x20] sm:$0xff]
  %v487 = vld [vmem:[%s9 + $0x28] sm:$0xff]
  %v488 = vld [vmem:[%s9 + $0x30] sm:$0xff]
  %v489 = vld [vmem:[%s9 + $0x38] sm:$0xff]
  %v490 = vld [vmem:[%s9 + $0x40] sm:$0xff]
  %v491 = vld [vmem:[%s9 + $0x48] sm:$0xff]
  %v492 = vld [vmem:[%s9 + $0x50] sm:$0xff]
  %v493 = vld [vmem:[%s9 + $0x58] sm:$0xff]
  %v494 = vld [vmem:[%s9 + $0x60] sm:$0xff]
  %v495 = vld [vmem:[%s9 + $0x68] sm:$0xff]
  %v496 = vld [vmem:[%s9 + $0x70] sm:$0xff]
  %v497 = vld [vmem:[%s9 + $0x78] sm:$0xff]
  %v498 = vld [vmem:[%s5] sm:$0xff]
  %500 = vset.pattern.permute.xlu0 0
  %501 = vperm.xlu0 %500, %v498
  %v502 = vpop.permute.xlu0 %501
  %504 = vmatprep.subr.mxu0 0.0
  %505 = vmatpush1.msra.mxu0 %v497
  %506 = vmatprep.subr.mxu0 0.0
  %507 = vmatpush1.msra.mxu0 %v496
  %508 = vmatprep.subr.mxu0 0.0
  %509 = vmatpush1.msra.mxu0 %v495
  %510 = vmatprep.subr.mxu0 0.0
  %511 = vmatpush1.msra.mxu0 %v494
  %512 = vmatprep.subr.mxu0 0.0
  %513 = vmatpush1.msra.mxu0 %v493
  %514 = vmatprep.subr.mxu0 0.0
  %515 = vmatpush1.msra.mxu0 %v492
  %516 = vmatprep.subr.mxu0 0.0
  %517 = vmatpush1.msra.mxu0 %v491
  %518 = vmatprep.subr.mxu0 0.0
  %519 = vmatpush1.msra.mxu0 %v490
  %520 = vmatprep.subr.mxu0 0.0
  %521 = vmatpush1.msra.mxu0 %v489
  %522 = vmatprep.subr.mxu0 0.0
  %523 = vmatpush1.msra.mxu0 %v488
  %524 = vmatprep.subr.mxu0 0.0
  %525 = vmatpush1.msra.mxu0 %v487
  %526 = vmatprep.subr.mxu0 0.0
  %527 = vmatpush1.msra.mxu0 %v486
  %528 = vmatprep.subr.mxu0 0.0
  %529 = vmatpush1.msra.mxu0 %v485
  %530 = vmatprep.subr.mxu0 0.0
  %531 = vmatpush1.msra.mxu0 %v484
  %532 = vmatprep.subr.mxu0 0.0
  %533 = vmatpush1.msra.mxu0 %v483
  %534 = vmatprep.subr.mxu0 0.0
  %535 = vmatpush1.msra.mxu0 %v482
  %536 = vmatprep.subr.mxu0 0.0
  %537 = vmatpush2.msra.mxu0 0.0
  %538 = vmatprep.subr.mxu0 0.0
  %539 = vmatpush2.msra.mxu0 0.0
  %540 = vmatprep.subr.mxu0 0.0
  %541 = vmatpush2.msra.mxu0 0.0
  %542 = vmatprep.subr.mxu0 0.0
  %543 = vmatpush2.msra.mxu0 0.0
  %544 = vmatprep.subr.mxu0 0.0
  %545 = vmatpush2.msra.mxu0 0.0
  %546 = vmatprep.subr.mxu0 0.0
  %547 = vmatpush2.msra.mxu0 0.0
  %548 = vmatprep.subr.mxu0 0.0
  %549 = vmatpush2.msra.mxu0 0.0
  %550 = vmatprep.subr.mxu0 0.0
  %551 = vmatpush2.msra.mxu0 0.0
  %552 = vmatprep.subr.mxu0 0.0
  %553 = vmatpush2.msra.mxu0 0.0
  %554 = vmatprep.subr.mxu0 0.0
  %555 = vmatpush2.msra.mxu0 0.0
  %556 = vmatprep.subr.mxu0 0.0
  %557 = vmatpush2.msra.mxu0 0.0
  %558 = vmatprep.subr.mxu0 0.0
  %559 = vmatpush2.msra.mxu0 0.0
  %560 = vmatprep.subr.mxu0 0.0
  %561 = vmatpush2.msra.mxu0 0.0
  %562 = vmatprep.subr.mxu0 0.0
  %563 = vmatpush2.msra.mxu0 0.0
  %564 = vmatprep.subr.mxu0 0.0
  %565 = vmatpush2.msra.mxu0 0.0
  %566 = vmatprep.subr.mxu0 0.0
  %567 = vmatpush2.msra.mxu0 0.0
  %568 = vmatprep.mubr.f32.mxu0 0.0
  %569 = vmatmul.mubr.f32.gmra.mxu0 %v479
  %v570 = vpop.f32.mrf.mxu0
  %v571 = vadd.f32 %v502, %v570
  %v572 = vpop.f32.mrf.mxu0
  %573 = vdwg.mxu0
  %v574 = vld [vmem:[%s6] sm:$0x3]
  %v575 = vld [vmem:[%s7] sm:$0xff]
  %vm576 = vcmask 261120
  %v577 = vsel %vm576, %v571, 0.0
  %578 = vadd.xlane.f32.xlu0 %v577
  %v579 = vpop.xlane.xlu0 %578
  %v580 = vrcp.pop 32.0
  %v581 = vmul.f32 %v579, %v580
  %vm582 = vcmask 64512
  %v584 = vsel %vm582, %v574, 0
  %586 = vmatprep.subr.mxu0 0.0
  %587 = vmatpush1.msra.mxu0 0.0
  %588 = vmatprep.subr.mxu0 0.0
  %589 = vmatpush1.msra.mxu0 0.0
  %590 = vmatprep.subr.mxu0 0.0
  %591 = vmatpush1.msra.mxu0 0.0
  %592 = vmatprep.subr.mxu0 0.0
  %593 = vmatpush1.msra.mxu0 0.0
  %594 = vmatprep.subr.mxu0 0.0
  %595 = vmatpush1.msra.mxu0 0.0
  %596 = vmatprep.subr.mxu0 0.0
  %597 = vmatpush1.msra.mxu0 0.0
  %598 = vmatprep.subr.mxu0 0.0
  %599 = vmatpush1.msra.mxu0 0.0
  %600 = vmatprep.subr.mxu0 0.0
  %601 = vmatpush1.msra.mxu0 0.0
  %602 = vmatprep.subr.mxu0 0.0
  %603 = vmatpush1.msra.mxu0 0.0
  %604 = vmatprep.subr.mxu0 0.0
  %605 = vmatpush1.msra.mxu0 0.0
  %606 = vmatprep.subr.mxu0 0.0
  %607 = vmatpush1.msra.mxu0 0.0
  %608 = vmatprep.subr.mxu0 0.0
  %609 = vmatpush1.msra.mxu0 0.0
  %610 = vmatprep.subr.mxu0 0.0
  %611 = vmatpush1.msra.mxu0 0.0
  %612 = vmatprep.subr.mxu0 0.0
  %613 = vmatpush1.msra.mxu0 0.0
  %614 = vmatprep.subr.mxu0 0.0
  %615 = vmatpush1.msra.mxu0 0.0
  %616 = vmatprep.subr.mxu0 0.0
  %617 = vmatpush1.msra.mxu0 %v581
  %618 = vmatprep.subr.mxu0 0.0
  %619 = vmatpush2.msra.mxu0 0.0
  %620 = vmatprep.subr.mxu0 0.0
  %621 = vmatpush2.msra.mxu0 0.0
  %622 = vmatprep.subr.mxu0 0.0
  %623 = vmatpush2.msra.mxu0 0.0
  %624 = vmatprep.subr.mxu0 0.0
  %625 = vmatpush2.msra.mxu0 0.0
  %626 = vmatprep.subr.mxu0 0.0
  %627 = vmatpush2.msra.mxu0 0.0
  %628 = vmatprep.subr.mxu0 0.0
  %629 = vmatpush2.msra.mxu0 0.0
  %630 = vmatprep.subr.mxu0 0.0
  %631 = vmatpush2.msra.mxu0 0.0
  %632 = vmatprep.subr.mxu0 0.0
  %633 = vmatpush2.msra.mxu0 0.0
  %634 = vmatprep.subr.mxu0 0.0
  %635 = vmatpush2.msra.mxu0 0.0
  %636 = vmatprep.subr.mxu0 0.0
  %637 = vmatpush2.msra.mxu0 0.0
  %638 = vmatprep.subr.mxu0 0.0
  %639 = vmatpush2.msra.mxu0 0.0
  %640 = vmatprep.subr.mxu0 0.0
  %641 = vmatpush2.msra.mxu0 0.0
  %642 = vmatprep.subr.mxu0 0.0
  %643 = vmatpush2.msra.mxu0 0.0
  %644 = vmatprep.subr.mxu0 0.0
  %645 = vmatpush2.msra.mxu0 0.0
  %646 = vmatprep.subr.mxu0 0.0
  %647 = vmatpush2.msra.mxu0 0.0
  %648 = vmatprep.subr.mxu0 0.0
  %649 = vmatpush2.msra.mxu0 0.0
  %650 = vmatprep.mubr.f32.mxu0 0.0
  %651 = vmatmul.mubr.f32.gmra.mxu0 %v584
  %v652 = vpop.f32.mrf.mxu0
  %v653 = vadd.f32 0.0, %v652
  %v654 = vpop.f32.mrf.mxu0
  %655 = vdwg.mxu0
  %v656 = vmax.f32 %v653, 0.0
  %vm657 = vcmask 15360
  %v659 = vsel %vm657, %v575, 0
  %vm661 = vcmask 1041408
  %v663 = vsel %vm661, %v656, 0
  %665 = vmatprep.subr.mxu0 0.0
  %666 = vmatpush1.msra.mxu0 0.0
  %667 = vmatprep.subr.mxu0 0.0
  %668 = vmatpush1.msra.mxu0 0.0
  %669 = vmatprep.subr.mxu0 0.0
  %670 = vmatpush1.msra.mxu0 0.0
  %671 = vmatprep.subr.mxu0 0.0
  %672 = vmatpush1.msra.mxu0 0.0
  %673 = vmatprep.subr.mxu0 0.0
  %674 = vmatpush1.msra.mxu0 0.0
  %675 = vmatprep.subr.mxu0 0.0
  %676 = vmatpush1.msra.mxu0 0.0
  %677 = vmatprep.subr.mxu0 0.0
  %678 = vmatpush1.msra.mxu0 0.0
  %679 = vmatprep.subr.mxu0 0.0
  %680 = vmatpush1.msra.mxu0 0.0
  %681 = vmatprep.subr.mxu0 0.0
  %682 = vmatpush1.msra.mxu0 0.0
  %683 = vmatprep.subr.mxu0 0.0
  %684 = vmatpush1.msra.mxu0 0.0
  %685 = vmatprep.subr.mxu0 0.0
  %686 = vmatpush1.msra.mxu0 0.0
  %687 = vmatprep.subr.mxu0 0.0
  %688 = vmatpush1.msra.mxu0 0.0
  %689 = vmatprep.subr.mxu0 0.0
  %690 = vmatpush1.msra.mxu0 0.0
  %691 = vmatprep.subr.mxu0 0.0
  %692 = vmatpush1.msra.mxu0 0.0
  %693 = vmatprep.subr.mxu0 0.0
  %694 = vmatpush1.msra.mxu0 0.0
  %695 = vmatprep.subr.mxu0 0.0
  %696 = vmatpush1.msra.mxu0 %v663
  %697 = vmatprep.subr.mxu0 0.0
  %698 = vmatpush2.msra.mxu0 0.0
  %699 = vmatprep.subr.mxu0 0.0
  %700 = vmatpush2.msra.mxu0 0.0
  %701 = vmatprep.subr.mxu0 0.0
  %702 = vmatpush2.msra.mxu0 0.0
  %703 = vmatprep.subr.mxu0 0.0
  %704 = vmatpush2.msra.mxu0 0.0
  %705 = vmatprep.subr.mxu0 0.0
  %706 = vmatpush2.msra.mxu0 0.0
  %707 = vmatprep.subr.mxu0 0.0
  %708 = vmatpush2.msra.mxu0 0.0
  %709 = vmatprep.subr.mxu0 0.0
  %710 = vmatpush2.msra.mxu0 0.0
  %711 = vmatprep.subr.mxu0 0.0
  %712 = vmatpush2.msra.mxu0 0.0
  %713 = vmatprep.subr.mxu0 0.0
  %714 = vmatpush2.msra.mxu0 0.0
  %715 = vmatprep.subr.mxu0 0.0
  %716 = vmatpush2.msra.mxu0 0.0
  %717 = vmatprep.subr.mxu0 0.0
  %718 = vmatpush2.msra.mxu0 0.0
  %719 = vmatprep.subr.mxu0 0.0
  %720 = vmatpush2.msra.mxu0 0.0
  %721 = vmatprep.subr.mxu0 0.0
  %722 = vmatpush2.msra.mxu0 0.0
  %723 = vmatprep.subr.mxu0 0.0
  %724 = vmatpush2.msra.mxu0 0.0
  %725 = vmatprep.subr.mxu0 0.0
  %726 = vmatpush2.msra.mxu0 0.0
  %727 = vmatprep.subr.mxu0 0.0
  %728 = vmatpush2.msra.mxu0 0.0
  %729 = vmatprep.mubr.f32.mxu0 0.0
  %730 = vmatmul.mubr.f32.gmra.mxu0 %v659
  %v731 = vpop.f32.mrf.mxu0
  %v732 = vadd.f32 0.0, %v731
  %v733 = vpop.f32.mrf.mxu0
  %734 = vdwg.mxu0
  %v735 = vxor.u32 %v732, 2147483648
  %v736 = vmul.f32 %v735, 1.442695
  %v737 = vpow.pop %v736
  %v738 = vadd.f32 %v737, 1.0
  %v739 = vrcp.pop %v738
  %v740 = vmul.f32 1.0, %v739
  %742 = vset.pattern.permute.xlu0 0
  %743 = vperm.xlu0 %742, %v740
  %v744 = vpop.permute.xlu0 %743
  %v746 = vmul.f32 %v571, %v744
  %v747 = vadd.f32 %v746, %v209
  %748 = vst.msk [vmem:[%s10] sm:$0xff] %vm576, %v747
  %750 = vrot.lane.b32.xlu0 %v571, 96
  %v751 = vpop.permute.xlu0 %750
  %v753 = vsel %vm576, %v751, 0.0
  %754 = vadd.xlane.f32.xlu0 %v753
  %v755 = vpop.xlane.xlu0 %754
  %v756 = vmul.f32 %v755, %v580
  %757 = vmatprep.subr.mxu0 0.0
  %758 = vmatpush1.msra.mxu0 0.0
  %759 = vmatprep.subr.mxu0 0.0
  %760 = vmatpush1.msra.mxu0 0.0
  %761 = vmatprep.subr.mxu0 0.0
  %762 = vmatpush1.msra.mxu0 0.0
  %763 = vmatprep.subr.mxu0 0.0
  %764 = vmatpush1.msra.mxu0 0.0
  %765 = vmatprep.subr.mxu0 0.0
  %766 = vmatpush1.msra.mxu0 0.0
  %767 = vmatprep.subr.mxu0 0.0
  %768 = vmatpush1.msra.mxu0 0.0
  %769 = vmatprep.subr.mxu0 0.0
  %770 = vmatpush1.msra.mxu0 0.0
  %771 = vmatprep.subr.mxu0 0.0
  %772 = vmatpush1.msra.mxu0 0.0
  %773 = vmatprep.subr.mxu0 0.0
  %774 = vmatpush1.msra.mxu0 0.0
  %775 = vmatprep.subr.mxu0 0.0
  %776 = vmatpush1.msra.mxu0 0.0
  %777 = vmatprep.subr.mxu0 0.0
  %778 = vmatpush1.msra.mxu0 0.0
  %779 = vmatprep.subr.mxu0 0.0
  %780 = vmatpush1.msra.mxu0 0.0
  %781 = vmatprep.subr.mxu0 0.0
  %782 = vmatpush1.msra.mxu0 0.0
  %783 = vmatprep.subr.mxu0 0.0
  %784 = vmatpush1.msra.mxu0 0.0
  %785 = vmatprep.subr.mxu0 0.0
  %786 = vmatpush1.msra.mxu0 0.0
  %787 = vmatprep.subr.mxu0 0.0
  %788 = vmatpush1.msra.mxu0 %v756
  %789 = vmatprep.subr.mxu0 0.0
  %790 = vmatpush2.msra.mxu0 0.0
  %791 = vmatprep.subr.mxu0 0.0
  %792 = vmatpush2.msra.mxu0 0.0
  %793 = vmatprep.subr.mxu0 0.0
  %794 = vmatpush2.msra.mxu0 0.0
  %795 = vmatprep.subr.mxu0 0.0
  %796 = vmatpush2.msra.mxu0 0.0
  %797 = vmatprep.subr.mxu0 0.0
  %798 = vmatpush2.msra.mxu0 0.0
  %799 = vmatprep.subr.mxu0 0.0
  %800 = vmatpush2.msra.mxu0 0.0
  %801 = vmatprep.subr.mxu0 0.0
  %802 = vmatpush2.msra.mxu0 0.0
  %803 = vmatprep.subr.mxu0 0.0
  %804 = vmatpush2.msra.mxu0 0.0
  %805 = vmatprep.subr.mxu0 0.0
  %806 = vmatpush2.msra.mxu0 0.0
  %807 = vmatprep.subr.mxu0 0.0
  %808 = vmatpush2.msra.mxu0 0.0
  %809 = vmatprep.subr.mxu0 0.0
  %810 = vmatpush2.msra.mxu0 0.0
  %811 = vmatprep.subr.mxu0 0.0
  %812 = vmatpush2.msra.mxu0 0.0
  %813 = vmatprep.subr.mxu0 0.0
  %814 = vmatpush2.msra.mxu0 0.0
  %815 = vmatprep.subr.mxu0 0.0
  %816 = vmatpush2.msra.mxu0 0.0
  %817 = vmatprep.subr.mxu0 0.0
  %818 = vmatpush2.msra.mxu0 0.0
  %819 = vmatprep.subr.mxu0 0.0
  %820 = vmatpush2.msra.mxu0 0.0
  %821 = vmatprep.mubr.f32.mxu0 0.0
  %822 = vmatmul.mubr.f32.gmra.mxu0 %v584
  %v823 = vpop.f32.mrf.mxu0
  %v824 = vadd.f32 0.0, %v823
  %v825 = vpop.f32.mrf.mxu0
  %826 = vdwg.mxu0
  %v827 = vmax.f32 %v824, 0.0
  %v829 = vsel %vm661, %v827, 0
  %831 = vmatprep.subr.mxu0 0.0
  %832 = vmatpush1.msra.mxu0 0.0
  %833 = vmatprep.subr.mxu0 0.0
  %834 = vmatpush1.msra.mxu0 0.0
  %835 = vmatprep.subr.mxu0 0.0
  %836 = vmatpush1.msra.mxu0 0.0
  %837 = vmatprep.subr.mxu0 0.0
  %838 = vmatpush1.msra.mxu0 0.0
  %839 = vmatprep.subr.mxu0 0.0
  %840 = vmatpush1.msra.mxu0 0.0
  %841 = vmatprep.subr.mxu0 0.0
  %842 = vmatpush1.msra.mxu0 0.0
  %843 = vmatprep.subr.mxu0 0.0
  %844 = vmatpush1.msra.mxu0 0.0
  %845 = vmatprep.subr.mxu0 0.0
  %846 = vmatpush1.msra.mxu0 0.0
  %847 = vmatprep.subr.mxu0 0.0
  %848 = vmatpush1.msra.mxu0 0.0
  %849 = vmatprep.subr.mxu0 0.0
  %850 = vmatpush1.msra.mxu0 0.0
  %851 = vmatprep.subr.mxu0 0.0
  %852 = vmatpush1.msra.mxu0 0.0
  %853 = vmatprep.subr.mxu0 0.0
  %854 = vmatpush1.msra.mxu0 0.0
  %855 = vmatprep.subr.mxu0 0.0
  %856 = vmatpush1.msra.mxu0 0.0
  %857 = vmatprep.subr.mxu0 0.0
  %858 = vmatpush1.msra.mxu0 0.0
  %859 = vmatprep.subr.mxu0 0.0
  %860 = vmatpush1.msra.mxu0 0.0
  %861 = vmatprep.subr.mxu0 0.0
  %862 = vmatpush1.msra.mxu0 %v829
  %863 = vmatprep.subr.mxu0 0.0
  %864 = vmatpush2.msra.mxu0 0.0
  %865 = vmatprep.subr.mxu0 0.0
  %866 = vmatpush2.msra.mxu0 0.0
  %867 = vmatprep.subr.mxu0 0.0
  %868 = vmatpush2.msra.mxu0 0.0
  %869 = vmatprep.subr.mxu0 0.0
  %870 = vmatpush2.msra.mxu0 0.0
  %871 = vmatprep.subr.mxu0 0.0
  %872 = vmatpush2.msra.mxu0 0.0
  %873 = vmatprep.subr.mxu0 0.0
  %874 = vmatpush2.msra.mxu0 0.0
  %875 = vmatprep.subr.mxu0 0.0
  %876 = vmatpush2.msra.mxu0 0.0
  %877 = vmatprep.subr.mxu0 0.0
  %878 = vmatpush2.msra.mxu0 0.0
  %879 = vmatprep.subr.mxu0 0.0
  %880 = vmatpush2.msra.mxu0 0.0
  %881 = vmatprep.subr.mxu0 0.0
  %882 = vmatpush2.msra.mxu0 0.0
  %883 = vmatprep.subr.mxu0 0.0
  %884 = vmatpush2.msra.mxu0 0.0
  %885 = vmatprep.subr.mxu0 0.0
  %886 = vmatpush2.msra.mxu0 0.0
  %887 = vmatprep.subr.mxu0 0.0
  %888 = vmatpush2.msra.mxu0 0.0
  %889 = vmatprep.subr.mxu0 0.0
  %890 = vmatpush2.msra.mxu0 0.0
  %891 = vmatprep.subr.mxu0 0.0
  %892 = vmatpush2.msra.mxu0 0.0
  %893 = vmatprep.subr.mxu0 0.0
  %894 = vmatpush2.msra.mxu0 0.0
  %895 = vmatprep.mubr.f32.mxu0 0.0
  %896 = vmatmul.mubr.f32.gmra.mxu0 %v659
  %v897 = vpop.f32.mrf.mxu0
  %v898 = vadd.f32 0.0, %v897
  %v899 = vpop.f32.mrf.mxu0
  %900 = vdwg.mxu0
  %v901 = vxor.u32 %v898, 2147483648
  %v902 = vmul.f32 %v901, 1.442695
  %v903 = vpow.pop %v902
  %v904 = vadd.f32 %v903, 1.0
  %v905 = vrcp.pop %v904
  %v906 = vmul.f32 1.0, %v905
  %908 = vset.pattern.permute.xlu0 0
  %909 = vperm.xlu0 %908, %v906
  %v910 = vpop.permute.xlu0 %909
  %v912 = vmul.f32 %v571, %v910
  %v913 = vadd.f32 %v912, %v209
  %vm914 = vcmask 523520
  %915 = vst.msk [vmem:[%s10] sm:$0xff] %vm914, %v913
  // Predicated region
  $region42: #{_lambda_.5} parent=0 // pred_check
    _
  $region43: #{_lambda_.5} parent=0 // pred_check_branch
    %917 = sbr.rel (0) target = $region45
  $region44: #{_lambda_.5} parent=0 // pred_region
    _
  $region45: #{_lambda_.5} parent=0 // pred_fallthru
    _
  // Predicated region
  $region46: #{_lambda_.5} parent=0 // pred_check
    _
  $region47: #{_lambda_.5} parent=0 // pred_check_branch
    %919 = sbr.rel (0) target = $region49
  $region48: #{_lambda_.5} parent=0 // pred_region
    _
  $region49: #{_lambda_.5} parent=0 // pred_fallthru
    _

// kernel: _lambda_.6
$region0: #{_lambda_.6}
  #allocation0 [shape = 'u32[]', space=smem, size = 0x4, offset = 0x4, fixed_abs, tag = 'smem constant byte address 0x4 - core index']
  #allocation1 [shape = 'u32[144,128]{1,0:T(1,128)}', space=vmem, size = 0x12000, scoped, tag = 'internal scratch']
  #allocation2 [shape = 'f32[56,64]{1,0:T(8,128)}', space=vmem, size = 0x7000, scoped, tag = 'scratch operand']
  #allocation3 [shape = 'f32[112,64]{1,0:T(8,128)}', space=vmem, size = 0xe000, scoped, tag = 'scratch operand']
  %s0 = inlined_call_operand.vmem [shape: f32[8,64], index: 0, kind: input, shape index: {}]
  %s1 = inlined_call_operand.vmem [shape: f32[8,1], index: 1, kind: input, shape index: {}]
  %s2 = inlined_call_operand.vmem [shape: f32[8,1], index: 2, kind: input, shape index: {}]
  %s3 = inlined_call_operand.vmem [shape: f32[16,56], index: 3, kind: input, shape index: {}]
  %s4 = inlined_call_operand.vmem [shape: f32[16,1], index: 4, kind: input, shape index: {}]
  %s5 = inlined_call_operand.vmem [shape: f32[16,1], index: 5, kind: input, shape index: {}]
  %s6 = inlined_call_operand.vmem [shape: f32[16,112], index: 6, kind: input, shape index: {}]
  %s7 = inlined_call_operand.vmem [shape: f32[16,1], index: 7, kind: input, shape index: {}]
  %s8 = inlined_call_operand.vmem [shape: f32[4,16], index: 8, kind: input, shape index: {}]
  %s9 = inlined_call_operand.vmem [shape: f32[16,4], index: 9, kind: input, shape index: {}]
  %s10 = inlined_call_operand.vmem [shape: f32[2,64,32], index: 10, kind: input, shape index: {}]
  %s11 = inlined_call_operand.vmem [shape: f32[64,32], index: 11, kind: input, shape index: {}]
  %s12 = inlined_call_operand.vmem [shape: f32[16,8], index: 12, kind: input, shape index: {}]
  %s13 = inlined_call_operand.vmem [shape: f32[16,1], index: 13, kind: input, shape index: {}]
  %s14 = inlined_call_operand.vmem [shape: f32[16,32], index: 14, kind: output, shape index: {}]
  %s15 = sld [smem:[#allocation0]]
  $region66: #{_lambda_.6} parent=0
    _
  %s17 = ssub.s32 1, %s15
  %s18 = scalar_select 0, %s17, %s15
  // Predicated region
  $region2: #{_lambda_.6} parent=0 // pred_check
    _
  $region3: #{_lambda_.6} parent=0 // pred_check_branch
    %20 = sbr.rel (0) target = $region5
  $region4: #{_lambda_.6} parent=0 // pred_region
    _
  $region5: #{_lambda_.6} parent=0 // pred_fallthru
    _
  // Predicated region
  $region6: #{_lambda_.6} parent=0 // pred_check
    _
  $region7: #{_lambda_.6} parent=0 // pred_check_branch
    %22 = sbr.rel (0) target = $region9
  $region8: #{_lambda_.6} parent=0 // pred_region
    _
  $region9: #{_lambda_.6} parent=0 // pred_fallthru
    _
  // Predicated region
  $region10: #{_lambda_.6} parent=0 // pred_check
    _
  $region11: #{_lambda_.6} parent=0 // pred_check_branch
    %24 = sbr.rel (0) target = $region13
  $region12: #{_lambda_.6} parent=0 // pred_region
    _
  $region13: #{_lambda_.6} parent=0 // pred_fallthru
    _
  // Predicated region
  $region14: #{_lambda_.6} parent=0 // pred_check
    _
  $region15: #{_lambda_.6} parent=0 // pred_check_branch
    %26 = sbr.rel (0) target = $region17
  $region16: #{_lambda_.6} parent=0 // pred_region
    _
  $region17: #{_lambda_.6} parent=0 // pred_fallthru
    _
  // Predicated region
  $region18: #{_lambda_.6} parent=0 // pred_check
    _
  $region19: #{_lambda_.6} parent=0 // pred_check_branch
    %28 = sbr.rel (0) target = $region21
  $region20: #{_lambda_.6} parent=0 // pred_region
    _
  $region21: #{_lambda_.6} parent=0 // pred_fallthru
    _
  // Predicated region
  $region22: #{_lambda_.6} parent=0 // pred_check
    _
  $region23: #{_lambda_.6} parent=0 // pred_check_branch
    %30 = sbr.rel (0) target = $region25
  $region24: #{_lambda_.6} parent=0 // pred_region
    _
  $region25: #{_lambda_.6} parent=0 // pred_fallthru
    _
  // Predicated region
  $region26: #{_lambda_.6} parent=0 // pred_check
    _
  $region27: #{_lambda_.6} parent=0 // pred_check_branch
    %32 = sbr.rel (0) target = $region29
  $region28: #{_lambda_.6} parent=0 // pred_region
    _
  $region29: #{_lambda_.6} parent=0 // pred_fallthru
    _
  // Predicated region
  $region30: #{_lambda_.6} parent=0 // pred_check
    _
  $region31: #{_lambda_.6} parent=0 // pred_check_branch
    %34 = sbr.rel (0) target = $region33
  $region32: #{_lambda_.6} parent=0 // pred_region
    _
  $region33: #{_lambda_.6} parent=0 // pred_fallthru
    _
  // Predicated region
  $region34: #{_lambda_.6} parent=0 // pred_check
    _
  $region35: #{_lambda_.6} parent=0 // pred_check_branch
    %36 = sbr.rel (0) target = $region37
  $region36: #{_lambda_.6} parent=0 // pred_region
    _
  $region37: #{_lambda_.6} parent=0 // pred_fallthru
    _
  // Predicated region
  $region38: #{_lambda_.6} parent=0 // pred_check
    _
  $region39: #{_lambda_.6} parent=0 // pred_check_branch
    %38 = sbr.rel (0) target = $region41
  $region40: #{_lambda_.6} parent=0 // pred_region
    _
  $region41: #{_lambda_.6} parent=0 // pred_fallthru
    _
  // Predicated region
  $region42: #{_lambda_.6} parent=0 // pred_check
    _
  $region43: #{_lambda_.6} parent=0 // pred_check_branch
    %40 = sbr.rel (0) target = $region45
  $region44: #{_lambda_.6} parent=0 // pred_region
    _
  $region45: #{_lambda_.6} parent=0 // pred_fallthru
    _
  // Predicated region
  $region46: #{_lambda_.6} parent=0 // pred_check
    _
  $region47: #{_lambda_.6} parent=0 // pred_check_branch
    %42 = sbr.rel (0) target = $region49
  $region48: #{_lambda_.6} parent=0 // pred_region
    _
  $region49: #{_lambda_.6} parent=0 // pred_fallthru
    _
  // Predicated region
  $region50: #{_lambda_.6} parent=0 // pred_check
    _
  $region51: #{_lambda_.6} parent=0 // pred_check_branch
    %44 = sbr.rel (0) target = $region53
  $region52: #{_lambda_.6} parent=0 // pred_region
    _
  $region53: #{_lambda_.6} parent=0 // pred_fallthru
    _
  // Predicated region
  $region54: #{_lambda_.6} parent=0 // pred_check
    _
  $region55: #{_lambda_.6} parent=0 // pred_check_branch
    %46 = sbr.rel (0) target = $region57
  $region56: #{_lambda_.6} parent=0 // pred_region
    _
  $region57: #{_lambda_.6} parent=0 // pred_fallthru
    _
  %v47 = vld [vmem:[%s0] sm:$0xff]
  %v48 = vld [vmem:[%s10] sm:$0xff]
  %v49 = vld [vmem:[%s10 + $0x8] sm:$0xff]
  %v50 = vld [vmem:[%s10 + $0x10] sm:$0xff]
  %v51 = vld [vmem:[%s10 + $0x18] sm:$0xff]
  %v52 = vld [vmem:[%s10 + $0x20] sm:$0xff]
  %v53 = vld [vmem:[%s10 + $0x28] sm:$0xff]
  %v54 = vld [vmem:[%s10 + $0x30] sm:$0xff]
  %v55 = vld [vmem:[%s10 + $0x38] sm:$0xff]
  %vm56 = vcmask 523264
  %v58 = vsel %vm56, %v47, 0
  %60 = vmatprep.subr.mxu0 0.0
  %61 = vmatpush1.msra.mxu0 0.0
  %62 = vmatprep.subr.mxu0 0.0
  %63 = vmatpush1.msra.mxu0 0.0
  %64 = vmatprep.subr.mxu0 0.0
  %65 = vmatpush1.msra.mxu0 0.0
  %66 = vmatprep.subr.mxu0 0.0
  %67 = vmatpush1.msra.mxu0 0.0
  %68 = vmatprep.subr.mxu0 0.0
  %69 = vmatpush1.msra.mxu0 0.0
  %70 = vmatprep.subr.mxu0 0.0
  %71 = vmatpush1.msra.mxu0 0.0
  %72 = vmatprep.subr.mxu0 0.0
  %73 = vmatpush1.msra.mxu0 0.0
  %74 = vmatprep.subr.mxu0 0.0
  %75 = vmatpush1.msra.mxu0 0.0
  %76 = vmatprep.subr.mxu0 0.0
  %77 = vmatpush1.msra.mxu0 %v55
  %78 = vmatprep.subr.mxu0 0.0
  %79 = vmatpush1.msra.mxu0 %v54
  %80 = vmatprep.subr.mxu0 0.0
  %81 = vmatpush1.msra.mxu0 %v53
  %82 = vmatprep.subr.mxu0 0.0
  %83 = vmatpush1.msra.mxu0 %v52
  %84 = vmatprep.subr.mxu0 0.0
  %85 = vmatpush1.msra.mxu0 %v51
  %86 = vmatprep.subr.mxu0 0.0
  %87 = vmatpush1.msra.mxu0 %v50
  %88 = vmatprep.subr.mxu0 0.0
  %89 = vmatpush1.msra.mxu0 %v49
  %90 = vmatprep.subr.mxu0 0.0
  %91 = vmatpush1.msra.mxu0 %v48
  %92 = vmatprep.subr.mxu0 0.0
  %93 = vmatpush2.msra.mxu0 0.0
  %94 = vmatprep.subr.mxu0 0.0
  %95 = vmatpush2.msra.mxu0 0.0
  %96 = vmatprep.subr.mxu0 0.0
  %97 = vmatpush2.msra.mxu0 0.0
  %98 = vmatprep.subr.mxu0 0.0
  %99 = vmatpush2.msra.mxu0 0.0
  %100 = vmatprep.subr.mxu0 0.0
  %101 = vmatpush2.msra.mxu0 0.0
  %102 = vmatprep.subr.mxu0 0.0
  %103 = vmatpush2.msra.mxu0 0.0
  %104 = vmatprep.subr.mxu0 0.0
  %105 = vmatpush2.msra.mxu0 0.0
  %106 = vmatprep.subr.mxu0 0.0
  %107 = vmatpush2.msra.mxu0 0.0
  %108 = vmatprep.subr.mxu0 0.0
  %109 = vmatpush2.msra.mxu0 0.0
  %110 = vmatprep.subr.mxu0 0.0
  %111 = vmatpush2.msra.mxu0 0.0
  %112 = vmatprep.subr.mxu0 0.0
  %113 = vmatpush2.msra.mxu0 0.0
  %114 = vmatprep.subr.mxu0 0.0
  %115 = vmatpush2.msra.mxu0 0.0
  %116 = vmatprep.subr.mxu0 0.0
  %117 = vmatpush2.msra.mxu0 0.0
  %118 = vmatprep.subr.mxu0 0.0
  %119 = vmatpush2.msra.mxu0 0.0
  %120 = vmatprep.subr.mxu0 0.0
  %121 = vmatpush2.msra.mxu0 0.0
  %122 = vmatprep.subr.mxu0 0.0
  %123 = vmatpush2.msra.mxu0 0.0
  %124 = vmatprep.mubr.f32.mxu0 0.0
  %125 = vmatmul.mubr.f32.gmra.mxu0 %v58
  %v126 = vpop.f32.mrf.mxu0
  %v127 = vadd.f32 0.0, %v126
  %v128 = vpop.f32.mrf.mxu0
  %129 = vdwg.mxu0
  %s130 = scalar_lea.vmem %s10, 64
  %v131 = vld [vmem:[%s130] sm:$0xff]
  %v132 = vld [vmem:[%s130 + $0x8] sm:$0xff]
  %v133 = vld [vmem:[%s130 + $0x10] sm:$0xff]
  %v134 = vld [vmem:[%s130 + $0x18] sm:$0xff]
  %v135 = vld [vmem:[%s130 + $0x20] sm:$0xff]
  %v136 = vld [vmem:[%s130 + $0x28] sm:$0xff]
  %v137 = vld [vmem:[%s130 + $0x30] sm:$0xff]
  %v138 = vld [vmem:[%s130 + $0x38] sm:$0xff]
  %139 = vmatprep.subr.mxu0 0.0
  %140 = vmatpush1.msra.mxu0 0.0
  %141 = vmatprep.subr.mxu0 0.0
  %142 = vmatpush1.msra.mxu0 0.0
  %143 = vmatprep.subr.mxu0 0.0
  %144 = vmatpush1.msra.mxu0 0.0
  %145 = vmatprep.subr.mxu0 0.0
  %146 = vmatpush1.msra.mxu0 0.0
  %147 = vmatprep.subr.mxu0 0.0
  %148 = vmatpush1.msra.mxu0 0.0
  %149 = vmatprep.subr.mxu0 0.0
  %150 = vmatpush1.msra.mxu0 0.0
  %151 = vmatprep.subr.mxu0 0.0
  %152 = vmatpush1.msra.mxu0 0.0
  %153 = vmatprep.subr.mxu0 0.0
  %154 = vmatpush1.msra.mxu0 0.0
  %155 = vmatprep.subr.mxu0 0.0
  %156 = vmatpush1.msra.mxu0 %v138
  %157 = vmatprep.subr.mxu0 0.0
  %158 = vmatpush1.msra.mxu0 %v137
  %159 = vmatprep.subr.mxu0 0.0
  %160 = vmatpush1.msra.mxu0 %v136
  %161 = vmatprep.subr.mxu0 0.0
  %162 = vmatpush1.msra.mxu0 %v135
  %163 = vmatprep.subr.mxu0 0.0
  %164 = vmatpush1.msra.mxu0 %v134
  %165 = vmatprep.subr.mxu0 0.0
  %166 = vmatpush1.msra.mxu0 %v133
  %167 = vmatprep.subr.mxu0 0.0
  %168 = vmatpush1.msra.mxu0 %v132
  %169 = vmatprep.subr.mxu0 0.0
  %170 = vmatpush1.msra.mxu0 %v131
  %171 = vmatprep.subr.mxu0 0.0
  %172 = vmatpush2.msra.mxu0 0.0
  %173 = vmatprep.subr.mxu0 0.0
  %174 = vmatpush2.msra.mxu0 0.0
  %175 = vmatprep.subr.mxu0 0.0
  %176 = vmatpush2.msra.mxu0 0.0
  %177 = vmatprep.subr.mxu0 0.0
  %178 = vmatpush2.msra.mxu0 0.0
  %179 = vmatprep.subr.mxu0 0.0
  %180 = vmatpush2.msra.mxu0 0.0
  %181 = vmatprep.subr.mxu0 0.0
  %182 = vmatpush2.msra.mxu0 0.0
  %183 = vmatprep.subr.mxu0 0.0
  %184 = vmatpush2.msra.mxu0 0.0
  %185 = vmatprep.subr.mxu0 0.0
  %186 = vmatpush2.msra.mxu0 0.0
  %187 = vmatprep.subr.mxu0 0.0
  %188 = vmatpush2.msra.mxu0 0.0
  %189 = vmatprep.subr.mxu0 0.0
  %190 = vmatpush2.msra.mxu0 0.0
  %191 = vmatprep.subr.mxu0 0.0
  %192 = vmatpush2.msra.mxu0 0.0
  %193 = vmatprep.subr.mxu0 0.0
  %194 = vmatpush2.msra.mxu0 0.0
  %195 = vmatprep.subr.mxu0 0.0
  %196 = vmatpush2.msra.mxu0 0.0
  %197 = vmatprep.subr.mxu0 0.0
  %198 = vmatpush2.msra.mxu0 0.0
  %199 = vmatprep.subr.mxu0 0.0
  %200 = vmatpush2.msra.mxu0 0.0
  %201 = vmatprep.subr.mxu0 0.0
  %202 = vmatpush2.msra.mxu0 0.0
  %203 = vmatprep.mubr.f32.mxu0 0.0
  %204 = vmatmul.mubr.f32.gmra.mxu0 %v58
  %v205 = vpop.f32.mrf.mxu0
  %v206 = vadd.f32 0.0, %v205
  %v207 = vpop.f32.mrf.mxu0
  %208 = vdwg.mxu0
  %v209 = vmax.f32 %v127, %v206
  %v210 = vld [vmem:[%s12] sm:$0xff]
  %v211 = vld [vmem:[%s12 + $0x8] sm:$0xff]
  %v212 = vld [vmem:[%s13] sm:$0xff]
  %v213 = vld [vmem:[%s13 + $0x8] sm:$0xff]
  %215 = vset.pattern.permute.xlu0 0
  %216 = vperm.xlu0 %215, %v212
  %v217 = vpop.permute.xlu0 %216
  %220 = vset.pattern.permute.xlu0 0
  %221 = vperm.xlu0 %220, %v213
  %v222 = vpop.permute.xlu0 %221
  %vm224 = vcmask 64512
  %v226 = vsel %vm224, %v210, 0
  %v229 = vsel %vm224, %v211, 0
  %231 = vmatprep.subr.mxu0 0.0
  %232 = vmatpush1.msra.mxu0 0.0
  %233 = vmatprep.subr.mxu0 0.0
  %234 = vmatpush1.msra.mxu0 0.0
  %235 = vmatprep.subr.mxu0 0.0
  %236 = vmatpush1.msra.mxu0 0.0
  %237 = vmatprep.subr.mxu0 0.0
  %238 = vmatpush1.msra.mxu0 0.0
  %239 = vmatprep.subr.mxu0 0.0
  %240 = vmatpush1.msra.mxu0 0.0
  %241 = vmatprep.subr.mxu0 0.0
  %242 = vmatpush1.msra.mxu0 0.0
  %243 = vmatprep.subr.mxu0 0.0
  %244 = vmatpush1.msra.mxu0 0.0
  %245 = vmatprep.subr.mxu0 0.0
  %246 = vmatpush1.msra.mxu0 0.0
  %247 = vmatprep.subr.mxu0 0.0
  %248 = vmatpush1.msra.mxu0 0.0
  %249 = vmatprep.subr.mxu0 0.0
  %250 = vmatpush1.msra.mxu0 0.0
  %251 = vmatprep.subr.mxu0 0.0
  %252 = vmatpush1.msra.mxu0 0.0
  %253 = vmatprep.subr.mxu0 0.0
  %254 = vmatpush1.msra.mxu0 0.0
  %255 = vmatprep.subr.mxu0 0.0
  %256 = vmatpush1.msra.mxu0 0.0
  %257 = vmatprep.subr.mxu0 0.0
  %258 = vmatpush1.msra.mxu0 0.0
  %259 = vmatprep.subr.mxu0 0.0
  %260 = vmatpush1.msra.mxu0 0.0
  %261 = vmatprep.subr.mxu0 0.0
  %262 = vmatpush1.msra.mxu0 %v209
  %263 = vmatprep.subr.mxu0 0.0
  %264 = vmatpush2.msra.mxu0 0.0
  %265 = vmatprep.subr.mxu0 0.0
  %266 = vmatpush2.msra.mxu0 0.0
  %267 = vmatprep.subr.mxu0 0.0
  %268 = vmatpush2.msra.mxu0 0.0
  %269 = vmatprep.subr.mxu0 0.0
  %270 = vmatpush2.msra.mxu0 0.0
  %271 = vmatprep.subr.mxu0 0.0
  %272 = vmatpush2.msra.mxu0 0.0
  %273 = vmatprep.subr.mxu0 0.0
  %274 = vmatpush2.msra.mxu0 0.0
  %275 = vmatprep.subr.mxu0 0.0
  %276 = vmatpush2.msra.mxu0 0.0
  %277 = vmatprep.subr.mxu0 0.0
  %278 = vmatpush2.msra.mxu0 0.0
  %279 = vmatprep.subr.mxu0 0.0
  %280 = vmatpush2.msra.mxu0 0.0
  %281 = vmatprep.subr.mxu0 0.0
  %282 = vmatpush2.msra.mxu0 0.0
  %283 = vmatprep.subr.mxu0 0.0
  %284 = vmatpush2.msra.mxu0 0.0
  %285 = vmatprep.subr.mxu0 0.0
  %286 = vmatpush2.msra.mxu0 0.0
  %287 = vmatprep.subr.mxu0 0.0
  %288 = vmatpush2.msra.mxu0 0.0
  %289 = vmatprep.subr.mxu0 0.0
  %290 = vmatpush2.msra.mxu0 0.0
  %291 = vmatprep.subr.mxu0 0.0
  %292 = vmatpush2.msra.mxu0 0.0
  %293 = vmatprep.subr.mxu0 0.0
  %294 = vmatpush2.msra.mxu0 0.0
  %295 = vmatprep.mubr.f32.mxu0 0.0
  %296 = vmatmul.mubr.f32.gmra.mxu0 %v226
  %v297 = vpop.f32.mrf.mxu0
  %v298 = vadd.f32 %v217, %v297
  %v299 = vpop.f32.mrf.mxu0
  %300 = vmatprep.mubr.f32.mxu0 0.0
  %301 = vmatmul.mubr.f32.gmra.mxu0 %v229
  %v302 = vpop.f32.mrf.mxu0
  %v303 = vadd.f32 %v222, %v302
  %v304 = vpop.f32.mrf.mxu0
  %305 = vdwg.mxu0
  %v306 = vld [vmem:[%s1] sm:$0xff]
  %308 = vset.pattern.permute.xlu0 0
  %309 = vperm.xlu0 %308, %v306
  %v310 = vpop.permute.xlu0 %309
  %v312 = vmul.f32 %v47, %v310
  %v313 = vld [vmem:[%s2] sm:$0xff]
  %315 = vset.pattern.permute.xlu0 0
  %316 = vperm.xlu0 %315, %v313
  %v317 = vpop.permute.xlu0 %316
  %v319 = vadd.f32 %v312, %v317
  %v320 = vmax.f32 %v319, 0.0
  %321 = vst.msk [vmem:[#allocation2] sm:$0xff] %vm56, 0.0
  %322 = vst.msk [vmem:[#allocation2 + $0x8] sm:$0xff] %vm56, 0.0
  %323 = vst.msk [vmem:[#allocation2 + $0x10] sm:$0xff] %vm56, 0.0
  %324 = vst.msk [vmem:[#allocation2 + $0x18] sm:$0xff] %vm56, 0.0
  %325 = vst.msk [vmem:[#allocation2 + $0x20] sm:$0xff] %vm56, 0.0
  %326 = vst.msk [vmem:[#allocation2 + $0x28] sm:$0xff] %vm56, 0.0
  %327 = vst.msk [vmem:[#allocation2 + $0x30] sm:$0xff] %vm56, 0.0
  %329 = vrot.lane.b32.xlu0 %v320, 3
  %v330 = vpop.permute.xlu0 %329
  %vm332 = vcmask 261144
  %333 = vst.msk [vmem:[#allocation2] sm:$0xff] %vm332, %v330
  %vm334 = vcmask 523544
  %335 = vst.msk [vmem:[#allocation2] sm:$0xff] %vm334, %v330
  %336 = vrot.lane.b32.xlu0 %v320, 2
  %v337 = vpop.permute.xlu0 %336
  %vm339 = vcmask 261136
  %340 = vst.msk [vmem:[#allocation2 + $0x8] sm:$0xff] %vm339, %v337
  %vm341 = vcmask 523536
  %342 = vst.msk [vmem:[#allocation2 + $0x8] sm:$0xff] %vm341, %v337
  %343 = vrot.lane.b32.xlu0 %v320, 1
  %v344 = vpop.permute.xlu0 %343
  %vm346 = vcmask 261128
  %347 = vst.msk [vmem:[#allocation2 + $0x10] sm:$0xff] %vm346, %v344
  %vm348 = vcmask 523528
  %349 = vst.msk [vmem:[#allocation2 + $0x10] sm:$0xff] %vm348, %v344
  %vm350 = vcmask 261120
  %351 = vst.msk [vmem:[#allocation2 + $0x18] sm:$0xff] %vm350, %v320
  %vm352 = vcmask 523520
  %353 = vst.msk [vmem:[#allocation2 + $0x18] sm:$0xff] %vm352, %v320
  %354 = vrot.lane.b32.xlu0 %v320, 127
  %v355 = vpop.permute.xlu0 %354
  %vm357 = vcmask 252928
  %358 = vst.msk [vmem:[#allocation2 + $0x20] sm:$0xff] %vm357, %v355
  %vm359 = vcmask 515328
  %360 = vst.msk [vmem:[#allocation2 + $0x20] sm:$0xff] %vm359, %v355
  %361 = vrot.lane.b32.xlu0 %v320, 126
  %v362 = vpop.permute.xlu0 %361
  %vm364 = vcmask 244736
  %365 = vst.msk [vmem:[#allocation2 + $0x28] sm:$0xff] %vm364, %v362
  %vm366 = vcmask 507136
  %367 = vst.msk [vmem:[#allocation2 + $0x28] sm:$0xff] %vm366, %v362
  %368 = vrot.lane.b32.xlu0 %v320, 125
  %v369 = vpop.permute.xlu0 %368
  %vm371 = vcmask 236544
  %372 = vst.msk [vmem:[#allocation2 + $0x30] sm:$0xff] %vm371, %v369
  %vm373 = vcmask 498944
  %374 = vst.msk [vmem:[#allocation2 + $0x30] sm:$0xff] %vm373, %v369
  %v375 = vld [vmem:[%s3] sm:$0xff]
  %v376 = vld [vmem:[%s3 + $0x8] sm:$0xff]
  %v377 = vld [vmem:[#allocation2] sm:$0xff]
  %v378 = vld [vmem:[#allocation2 + $0x8] sm:$0xff]
  %v379 = vld [vmem:[#allocation2 + $0x10] sm:$0xff]
  %v380 = vld [vmem:[#allocation2 + $0x18] sm:$0xff]
  %v381 = vld [vmem:[#allocation2 + $0x20] sm:$0xff]
  %v382 = vld [vmem:[#allocation2 + $0x28] sm:$0xff]
  %v383 = vld [vmem:[#allocation2 + $0x30] sm:$0xff]
  %vm384 = vcmask 457728
  %v386 = vsel %vm384, %v375, 0
  %v389 = vsel %vm384, %v376, 0
  %391 = vmatprep.subr.mxu0 0.0
  %392 = vmatpush1.msra.mxu0 0.0
  %393 = vmatprep.subr.mxu0 0.0
  %394 = vmatpush1.msra.mxu0 0.0
  %395 = vmatprep.subr.mxu0 0.0
  %396 = vmatpush1.msra.mxu0 0.0
  %397 = vmatprep.subr.mxu0 0.0
  %398 = vmatpush1.msra.mxu0 0.0
  %399 = vmatprep.subr.mxu0 0.0
  %400 = vmatpush1.msra.mxu0 0.0
  %401 = vmatprep.subr.mxu0 0.0
  %402 = vmatpush1.msra.mxu0 0.0
  %403 = vmatprep.subr.mxu0 0.0
  %404 = vmatpush1.msra.mxu0 0.0
  %405 = vmatprep.subr.mxu0 0.0
  %406 = vmatpush1.msra.mxu0 0.0
  %407 = vmatprep.subr.mxu0 0.0
  %408 = vmatpush1.msra.mxu0 0.0
  %409 = vmatprep.subr.mxu0 0.0
  %410 = vmatpush1.msra.mxu0 %v383
  %411 = vmatprep.subr.mxu0 0.0
  %412 = vmatpush1.msra.mxu0 %v382
  %413 = vmatprep.subr.mxu0 0.0
  %414 = vmatpush1.msra.mxu0 %v381
  %415 = vmatprep.subr.mxu0 0.0
  %416 = vmatpush1.msra.mxu0 %v380
  %417 = vmatprep.subr.mxu0 0.0
  %418 = vmatpush1.msra.mxu0 %v379
  %419 = vmatprep.subr.mxu0 0.0
  %420 = vmatpush1.msra.mxu0 %v378
  %421 = vmatprep.subr.mxu0 0.0
  %422 = vmatpush1.msra.mxu0 %v377
  %423 = vmatprep.subr.mxu0 0.0
  %424 = vmatpush2.msra.mxu0 0.0
  %425 = vmatprep.subr.mxu0 0.0
  %426 = vmatpush2.msra.mxu0 0.0
  %427 = vmatprep.subr.mxu0 0.0
  %428 = vmatpush2.msra.mxu0 0.0
  %429 = vmatprep.subr.mxu0 0.0
  %430 = vmatpush2.msra.mxu0 0.0
  %431 = vmatprep.subr.mxu0 0.0
  %432 = vmatpush2.msra.mxu0 0.0
  %433 = vmatprep.subr.mxu0 0.0
  %434 = vmatpush2.msra.mxu0 0.0
  %435 = vmatprep.subr.mxu0 0.0
  %436 = vmatpush2.msra.mxu0 0.0
  %437 = vmatprep.subr.mxu0 0.0
  %438 = vmatpush2.msra.mxu0 0.0
  %439 = vmatprep.subr.mxu0 0.0
  %440 = vmatpush2.msra.mxu0 0.0
  %441 = vmatprep.subr.mxu0 0.0
  %442 = vmatpush2.msra.mxu0 0.0
  %443 = vmatprep.subr.mxu0 0.0
  %444 = vmatpush2.msra.mxu0 0.0
  %445 = vmatprep.subr.mxu0 0.0
  %446 = vmatpush2.msra.mxu0 0.0
  %447 = vmatprep.subr.mxu0 0.0
  %448 = vmatpush2.msra.mxu0 0.0
  %449 = vmatprep.subr.mxu0 0.0
  %450 = vmatpush2.msra.mxu0 0.0
  %451 = vmatprep.subr.mxu0 0.0
  %452 = vmatpush2.msra.mxu0 0.0
  %453 = vmatprep.subr.mxu0 0.0
  %454 = vmatpush2.msra.mxu0 0.0
  %455 = vmatprep.mubr.f32.mxu0 0.0
  %456 = vmatmul.mubr.f32.gmra.mxu0 %v386
  %v457 = vpop.f32.mrf.mxu0
  %v458 = vadd.f32 0.0, %v457
  %v459 = vpop.f32.mrf.mxu0
  %460 = vmatprep.mubr.f32.mxu0 0.0
  %461 = vmatmul.mubr.f32.gmra.mxu0 %v389
  %v462 = vpop.f32.mrf.mxu0
  %v463 = vadd.f32 0.0, %v462
  %v464 = vpop.f32.mrf.mxu0
  %465 = vdwg.mxu0
  %v466 = vld [vmem:[%s4] sm:$0xff]
  %v467 = vld [vmem:[%s4 + $0x8] sm:$0xff]
  %469 = vset.pattern.permute.xlu0 0
  %470 = vperm.xlu0 %469, %v466
  %v471 = vpop.permute.xlu0 %470
  %474 = vset.pattern.permute.xlu0 0
  %475 = vperm.xlu0 %474, %v467
  %v476 = vpop.permute.xlu0 %475
  %v478 = vmul.f32 %v458, %v471
  %v479 = vmul.f32 %v463, %v476
  %v480 = vld [vmem:[%s5] sm:$0xff]
  %v481 = vld [vmem:[%s5 + $0x8] sm:$0xff]
  %483 = vset.pattern.permute.xlu0 0
  %484 = vperm.xlu0 %483, %v480
  %v485 = vpop.permute.xlu0 %484
  %488 = vset.pattern.permute.xlu0 0
  %489 = vperm.xlu0 %488, %v481
  %v490 = vpop.permute.xlu0 %489
  %v492 = vadd.f32 %v478, %v485
  %v493 = vadd.f32 %v479, %v490
  %v494 = vmax.f32 %v492, 0.0
  %v495 = vmax.f32 %v493, 0.0
  %496 = vst.msk [vmem:[#allocation3] sm:$0xff] %vm56, 0.0
  %497 = vst.msk [vmem:[#allocation3 + $0x8] sm:$0xff] %vm56, 0.0
  %498 = vst.msk [vmem:[#allocation3 + $0x10] sm:$0xff] %vm56, 0.0
  %499 = vst.msk [vmem:[#allocation3 + $0x18] sm:$0xff] %vm56, 0.0
  %500 = vst.msk [vmem:[#allocation3 + $0x20] sm:$0xff] %vm56, 0.0
  %501 = vst.msk [vmem:[#allocation3 + $0x28] sm:$0xff] %vm56, 0.0
  %502 = vst.msk [vmem:[#allocation3 + $0x30] sm:$0xff] %vm56, 0.0
  %503 = vst.msk [vmem:[#allocation3 + $0x38] sm:$0xff] %vm56, 0.0
  %504 = vst.msk [vmem:[#allocation3 + $0x40] sm:$0xff] %vm56, 0.0
  %505 = vst.msk [vmem:[#allocation3 + $0x48] sm:$0xff] %vm56, 0.0
  %506 = vst.msk [vmem:[#allocation3 + $0x50] sm:$0xff] %vm56, 0.0
  %507 = vst.msk [vmem:[#allocation3 + $0x58] sm:$0xff] %vm56, 0.0
  %508 = vst.msk [vmem:[#allocation3 + $0x60] sm:$0xff] %vm56, 0.0
  %509 = vst.msk [vmem:[#allocation3 + $0x68] sm:$0xff] %vm56, 0.0
  %512 = vrot.lane.b32.xlu0 %v494, 3
  %v513 = vpop.permute.xlu0 %512
  %514 = vrot.lane.b32.xlu0 %v495, 3
  %v515 = vpop.permute.xlu0 %514
  %518 = vst.msk [vmem:[#allocation3] sm:$0xff] %vm332, %v513
  %519 = vst.msk [vmem:[#allocation3 + $0x8] sm:$0xff] %vm332, %v515
  %520 = vst.msk [vmem:[#allocation3] sm:$0xff] %vm334, %v513
  %521 = vst.msk [vmem:[#allocation3 + $0x8] sm:$0xff] %vm334, %v515
  %522 = vrot.lane.b32.xlu0 %v494, 2
  %v523 = vpop.permute.xlu0 %522
  %524 = vrot.lane.b32.xlu0 %v495, 2
  %v525 = vpop.permute.xlu0 %524
  %528 = vst.msk [vmem:[#allocation3 + $0x10] sm:$0xff] %vm339, %v523
  %529 = vst.msk [vmem:[#allocation3 + $0x18] sm:$0xff] %vm339, %v525
  %530 = vst.msk [vmem:[#allocation3 + $0x10] sm:$0xff] %vm341, %v523
  %531 = vst.msk [vmem:[#allocation3 + $0x18] sm:$0xff] %vm341, %v525
  %532 = vrot.lane.b32.xlu0 %v494, 1
  %v533 = vpop.permute.xlu0 %532
  %534 = vrot.lane.b32.xlu0 %v495, 1
  %v535 = vpop.permute.xlu0 %534
  %538 = vst.msk [vmem:[#allocation3 + $0x20] sm:$0xff] %vm346, %v533
  %539 = vst.msk [vmem:[#allocation3 + $0x28] sm:$0xff] %vm346, %v535
  %540 = vst.msk [vmem:[#allocation3 + $0x20] sm:$0xff] %vm348, %v533
  %541 = vst.msk [vmem:[#allocation3 + $0x28] sm:$0xff] %vm348, %v535
  %542 = vst.msk [vmem:[#allocation3 + $0x30] sm:$0xff] %vm350, %v494
  %543 = vst.msk [vmem:[#allocation3 + $0x38] sm:$0xff] %vm350, %v495
  %544 = vst.msk [vmem:[#allocation3 + $0x30] sm:$0xff] %vm352, %v494
  %545 = vst.msk [vmem:[#allocation3 + $0x38] sm:$0xff] %vm352, %v495
  %546 = vrot.lane.b32.xlu0 %v494, 127
  %v547 = vpop.permute.xlu0 %546
  %548 = vrot.lane.b32.xlu0 %v495, 127
  %v549 = vpop.permute.xlu0 %548
  %552 = vst.msk [vmem:[#allocation3 + $0x40] sm:$0xff] %vm357, %v547
  %553 = vst.msk [vmem:[#allocation3 + $0x48] sm:$0xff] %vm357, %v549
  %554 = vst.msk [vmem:[#allocation3 + $0x40] sm:$0xff] %vm359, %v547
  %555 = vst.msk [vmem:[#allocation3 + $0x48] sm:$0xff] %vm359, %v549
  %556 = vrot.lane.b32.xlu0 %v494, 126
  %v557 = vpop.permute.xlu0 %556
  %558 = vrot.lane.b32.xlu0 %v495, 126
  %v559 = vpop.permute.xlu0 %558
  %562 = vst.msk [vmem:[#allocation3 + $0x50] sm:$0xff] %vm364, %v557
  %563 = vst.msk [vmem:[#allocation3 + $0x58] sm:$0xff] %vm364, %v559
  %564 = vst.msk [vmem:[#allocation3 + $0x50] sm:$0xff] %vm366, %v557
  %565 = vst.msk [vmem:[#allocation3 + $0x58] sm:$0xff] %vm366, %v559
  %566 = vrot.lane.b32.xlu0 %v494, 125
  %v567 = vpop.permute.xlu0 %566
  %568 = vrot.lane.b32.xlu0 %v495, 125
  %v569 = vpop.permute.xlu0 %568
  %572 = vst.msk [vmem:[#allocation3 + $0x60] sm:$0xff] %vm371, %v567
  %573 = vst.msk [vmem:[#allocation3 + $0x68] sm:$0xff] %vm371, %v569
  %574 = vst.msk [vmem:[#allocation3 + $0x60] sm:$0xff] %vm373, %v567
  %575 = vst.msk [vmem:[#allocation3 + $0x68] sm:$0xff] %vm373, %v569
  %v576 = vld [vmem:[%s6] sm:$0xff]
  %v577 = vld [vmem:[%s6 + $0x8] sm:$0xff]
  %v578 = vld [vmem:[#allocation3] sm:$0xff]
  %v579 = vld [vmem:[#allocation3 + $0x8] sm:$0xff]
  %v580 = vld [vmem:[#allocation3 + $0x10] sm:$0xff]
  %v581 = vld [vmem:[#allocation3 + $0x18] sm:$0xff]
  %v582 = vld [vmem:[#allocation3 + $0x20] sm:$0xff]
  %v583 = vld [vmem:[#allocation3 + $0x28] sm:$0xff]
  %v584 = vld [vmem:[#allocation3 + $0x30] sm:$0xff]
  %v585 = vld [vmem:[#allocation3 + $0x38] sm:$0xff]
  %v586 = vld [vmem:[#allocation3 + $0x40] sm:$0xff]
  %v587 = vld [vmem:[#allocation3 + $0x48] sm:$0xff]
  %v588 = vld [vmem:[#allocation3 + $0x50] sm:$0xff]
  %v589 = vld [vmem:[#allocation3 + $0x58] sm:$0xff]
  %v590 = vld [vmem:[#allocation3 + $0x60] sm:$0xff]
  %v591 = vld [vmem:[#allocation3 + $0x68] sm:$0xff]
  %vm592 = vcmask 916480
  %v594 = vsel %vm592, %v576, 0
  %v597 = vsel %vm592, %v577, 0
  %599 = vmatprep.subr.mxu0 0.0
  %600 = vmatpush1.msra.mxu0 0.0
  %601 = vmatprep.subr.mxu0 0.0
  %602 = vmatpush1.msra.mxu0 0.0
  %603 = vmatprep.subr.mxu0 0.0
  %604 = vmatpush1.msra.mxu0 %v591
  %605 = vmatprep.subr.mxu0 0.0
  %606 = vmatpush1.msra.mxu0 %v590
  %607 = vmatprep.subr.mxu0 0.0
  %608 = vmatpush1.msra.mxu0 %v589
  %609 = vmatprep.subr.mxu0 0.0
  %610 = vmatpush1.msra.mxu0 %v588
  %611 = vmatprep.subr.mxu0 0.0
  %612 = vmatpush1.msra.mxu0 %v587
  %613 = vmatprep.subr.mxu0 0.0
  %614 = vmatpush1.msra.mxu0 %v586
  %615 = vmatprep.subr.mxu0 0.0
  %616 = vmatpush1.msra.mxu0 %v585
  %617 = vmatprep.subr.mxu0 0.0
  %618 = vmatpush1.msra.mxu0 %v584
  %619 = vmatprep.subr.mxu0 0.0
  %620 = vmatpush1.msra.mxu0 %v583
  %621 = vmatprep.subr.mxu0 0.0
  %622 = vmatpush1.msra.mxu0 %v582
  %623 = vmatprep.subr.mxu0 0.0
  %624 = vmatpush1.msra.mxu0 %v581
  %625 = vmatprep.subr.mxu0 0.0
  %626 = vmatpush1.msra.mxu0 %v580
  %627 = vmatprep.subr.mxu0 0.0
  %628 = vmatpush1.msra.mxu0 %v579
  %629 = vmatprep.subr.mxu0 0.0
  %630 = vmatpush1.msra.mxu0 %v578
  %631 = vmatprep.subr.mxu0 0.0
  %632 = vmatpush2.msra.mxu0 0.0
  %633 = vmatprep.subr.mxu0 0.0
  %634 = vmatpush2.msra.mxu0 0.0
  %635 = vmatprep.subr.mxu0 0.0
  %636 = vmatpush2.msra.mxu0 0.0
  %637 = vmatprep.subr.mxu0 0.0
  %638 = vmatpush2.msra.mxu0 0.0
  %639 = vmatprep.subr.mxu0 0.0
  %640 = vmatpush2.msra.mxu0 0.0
  %641 = vmatprep.subr.mxu0 0.0
  %642 = vmatpush2.msra.mxu0 0.0
  %643 = vmatprep.subr.mxu0 0.0
  %644 = vmatpush2.msra.mxu0 0.0
  %645 = vmatprep.subr.mxu0 0.0
  %646 = vmatpush2.msra.mxu0 0.0
  %647 = vmatprep.subr.mxu0 0.0
  %648 = vmatpush2.msra.mxu0 0.0
  %649 = vmatprep.subr.mxu0 0.0
  %650 = vmatpush2.msra.mxu0 0.0
  %651 = vmatprep.subr.mxu0 0.0
  %652 = vmatpush2.msra.mxu0 0.0
  %653 = vmatprep.subr.mxu0 0.0
  %654 = vmatpush2.msra.mxu0 0.0
  %655 = vmatprep.subr.mxu0 0.0
  %656 = vmatpush2.msra.mxu0 0.0
  %657 = vmatprep.subr.mxu0 0.0
  %658 = vmatpush2.msra.mxu0 0.0
  %659 = vmatprep.subr.mxu0 0.0
  %660 = vmatpush2.msra.mxu0 0.0
  %661 = vmatprep.subr.mxu0 0.0
  %662 = vmatpush2.msra.mxu0 0.0
  %663 = vmatprep.mubr.f32.mxu0 0.0
  %664 = vmatmul.mubr.f32.gmra.mxu0 %v594
  %v665 = vpop.f32.mrf.mxu0
  %v666 = vadd.f32 0.0, %v665
  %v667 = vpop.f32.mrf.mxu0
  %668 = vmatprep.mubr.f32.mxu0 0.0
  %669 = vmatmul.mubr.f32.gmra.mxu0 %v597
  %v670 = vpop.f32.mrf.mxu0
  %v671 = vadd.f32 0.0, %v670
  %v672 = vpop.f32.mrf.mxu0
  %673 = vdwg.mxu0
  %v674 = vld [vmem:[%s11] sm:$0xff]
  %v675 = vld [vmem:[%s11 + $0x8] sm:$0xff]
  %v676 = vld [vmem:[%s11 + $0x10] sm:$0xff]
  %v677 = vld [vmem:[%s11 + $0x18] sm:$0xff]
  %v678 = vld [vmem:[%s11 + $0x20] sm:$0xff]
  %v679 = vld [vmem:[%s11 + $0x28] sm:$0xff]
  %v680 = vld [vmem:[%s11 + $0x30] sm:$0xff]
  %v681 = vld [vmem:[%s11 + $0x38] sm:$0xff]
  %v682 = vld [vmem:[%s7] sm:$0xff]
  %v683 = vld [vmem:[%s7 + $0x8] sm:$0xff]
  %685 = vset.pattern.permute.xlu0 0
  %686 = vperm.xlu0 %685, %v682
  %v687 = vpop.permute.xlu0 %686
  %690 = vset.pattern.permute.xlu0 0
  %691 = vperm.xlu0 %690, %v683
  %v692 = vpop.permute.xlu0 %691
  %v695 = vsel %vm56, %v666, 0
  %v698 = vsel %vm56, %v671, 0
  %700 = vmatprep.subr.mxu0 0.0
  %701 = vmatpush1.msra.mxu0 0.0
  %702 = vmatprep.subr.mxu0 0.0
  %703 = vmatpush1.msra.mxu0 0.0
  %704 = vmatprep.subr.mxu0 0.0
  %705 = vmatpush1.msra.mxu0 0.0
  %706 = vmatprep.subr.mxu0 0.0
  %707 = vmatpush1.msra.mxu0 0.0
  %708 = vmatprep.subr.mxu0 0.0
  %709 = vmatpush1.msra.mxu0 0.0
  %710 = vmatprep.subr.mxu0 0.0
  %711 = vmatpush1.msra.mxu0 0.0
  %712 = vmatprep.subr.mxu0 0.0
  %713 = vmatpush1.msra.mxu0 0.0
  %714 = vmatprep.subr.mxu0 0.0
  %715 = vmatpush1.msra.mxu0 0.0
  %716 = vmatprep.subr.mxu0 0.0
  %717 = vmatpush1.msra.mxu0 %v681
  %718 = vmatprep.subr.mxu0 0.0
  %719 = vmatpush1.msra.mxu0 %v680
  %720 = vmatprep.subr.mxu0 0.0
  %721 = vmatpush1.msra.mxu0 %v679
  %722 = vmatprep.subr.mxu0 0.0
  %723 = vmatpush1.msra.mxu0 %v678
  %724 = vmatprep.subr.mxu0 0.0
  %725 = vmatpush1.msra.mxu0 %v677
  %726 = vmatprep.subr.mxu0 0.0
  %727 = vmatpush1.msra.mxu0 %v676
  %728 = vmatprep.subr.mxu0 0.0
  %729 = vmatpush1.msra.mxu0 %v675
  %730 = vmatprep.subr.mxu0 0.0
  %731 = vmatpush1.msra.mxu0 %v674
  %732 = vmatprep.subr.mxu0 0.0
  %733 = vmatpush2.msra.mxu0 0.0
  %734 = vmatprep.subr.mxu0 0.0
  %735 = vmatpush2.msra.mxu0 0.0
  %736 = vmatprep.subr.mxu0 0.0
  %737 = vmatpush2.msra.mxu0 0.0
  %738 = vmatprep.subr.mxu0 0.0
  %739 = vmatpush2.msra.mxu0 0.0
  %740 = vmatprep.subr.mxu0 0.0
  %741 = vmatpush2.msra.mxu0 0.0
  %742 = vmatprep.subr.mxu0 0.0
  %743 = vmatpush2.msra.mxu0 0.0
  %744 = vmatprep.subr.mxu0 0.0
  %745 = vmatpush2.msra.mxu0 0.0
  %746 = vmatprep.subr.mxu0 0.0
  %747 = vmatpush2.msra.mxu0 0.0
  %748 = vmatprep.subr.mxu0 0.0
  %749 = vmatpush2.msra.mxu0 0.0
  %750 = vmatprep.subr.mxu0 0.0
  %751 = vmatpush2.msra.mxu0 0.0
  %752 = vmatprep.subr.mxu0 0.0
  %753 = vmatpush2.msra.mxu0 0.0
  %754 = vmatprep.subr.mxu0 0.0
  %755 = vmatpush2.msra.mxu0 0.0
  %756 = vmatprep.subr.mxu0 0.0
  %757 = vmatpush2.msra.mxu0 0.0
  %758 = vmatprep.subr.mxu0 0.0
  %759 = vmatpush2.msra.mxu0 0.0
  %760 = vmatprep.subr.mxu0 0.0
  %761 = vmatpush2.msra.mxu0 0.0
  %762 = vmatprep.subr.mxu0 0.0
  %763 = vmatpush2.msra.mxu0 0.0
  %764 = vmatprep.mubr.f32.mxu0 0.0
  %765 = vmatmul.mubr.f32.gmra.mxu0 %v695
  %v766 = vpop.f32.mrf.mxu0
  %v767 = vadd.f32 %v687, %v766
  %v768 = vpop.f32.mrf.mxu0
  %769 = vmatprep.mubr.f32.mxu0 0.0
  %770 = vmatmul.mubr.f32.gmra.mxu0 %v698
  %v771 = vpop.f32.mrf.mxu0
  %v772 = vadd.f32 %v692, %v771
  %v773 = vpop.f32.mrf.mxu0
  %774 = vdwg.mxu0
  %v775 = vld [vmem:[%s8] sm:$0xf]
  %v776 = vld [vmem:[%s9] sm:$0xff]
  %v777 = vld [vmem:[%s9 + $0x8] sm:$0xff]
  %vm778 = vcmask 130048
  %v779 = vsel %vm778, %v767, 0.0
  %780 = vadd.xlane.f32.xlu0 %v779
  %v781 = vpop.xlane.xlu0 %780
  %v782 = vsel %vm778, %v772, 0.0
  %783 = vadd.xlane.f32.xlu0 %v782
  %v784 = vpop.xlane.xlu0 %783
  %v785 = vrcp.pop 16.0
  %v786 = vmul.f32 %v781, %v785
  %v787 = vmul.f32 %v784, %v785
  %v789 = vsel %vm778, %v775, 0
  %791 = vmatprep.subr.mxu0 0.0
  %792 = vmatpush1.msra.mxu0 0.0
  %793 = vmatprep.subr.mxu0 0.0
  %794 = vmatpush1.msra.mxu0 0.0
  %795 = vmatprep.subr.mxu0 0.0
  %796 = vmatpush1.msra.mxu0 0.0
  %797 = vmatprep.subr.mxu0 0.0
  %798 = vmatpush1.msra.mxu0 0.0
  %799 = vmatprep.subr.mxu0 0.0
  %800 = vmatpush1.msra.mxu0 0.0
  %801 = vmatprep.subr.mxu0 0.0
  %802 = vmatpush1.msra.mxu0 0.0
  %803 = vmatprep.subr.mxu0 0.0
  %804 = vmatpush1.msra.mxu0 0.0
  %805 = vmatprep.subr.mxu0 0.0
  %806 = vmatpush1.msra.mxu0 0.0
  %807 = vmatprep.subr.mxu0 0.0
  %808 = vmatpush1.msra.mxu0 0.0
  %809 = vmatprep.subr.mxu0 0.0
  %810 = vmatpush1.msra.mxu0 0.0
  %811 = vmatprep.subr.mxu0 0.0
  %812 = vmatpush1.msra.mxu0 0.0
  %813 = vmatprep.subr.mxu0 0.0
  %814 = vmatpush1.msra.mxu0 0.0
  %815 = vmatprep.subr.mxu0 0.0
  %816 = vmatpush1.msra.mxu0 0.0
  %817 = vmatprep.subr.mxu0 0.0
  %818 = vmatpush1.msra.mxu0 0.0
  %819 = vmatprep.subr.mxu0 0.0
  %820 = vmatpush1.msra.mxu0 %v787
  %821 = vmatprep.subr.mxu0 0.0
  %822 = vmatpush1.msra.mxu0 %v786
  %823 = vmatprep.subr.mxu0 0.0
  %824 = vmatpush2.msra.mxu0 0.0
  %825 = vmatprep.subr.mxu0 0.0
  %826 = vmatpush2.msra.mxu0 0.0
  %827 = vmatprep.subr.mxu0 0.0
  %828 = vmatpush2.msra.mxu0 0.0
  %829 = vmatprep.subr.mxu0 0.0
  %830 = vmatpush2.msra.mxu0 0.0
  %831 = vmatprep.subr.mxu0 0.0
  %832 = vmatpush2.msra.mxu0 0.0
  %833 = vmatprep.subr.mxu0 0.0
  %834 = vmatpush2.msra.mxu0 0.0
  %835 = vmatprep.subr.mxu0 0.0
  %836 = vmatpush2.msra.mxu0 0.0
  %837 = vmatprep.subr.mxu0 0.0
  %838 = vmatpush2.msra.mxu0 0.0
  %839 = vmatprep.subr.mxu0 0.0
  %840 = vmatpush2.msra.mxu0 0.0
  %841 = vmatprep.subr.mxu0 0.0
  %842 = vmatpush2.msra.mxu0 0.0
  %843 = vmatprep.subr.mxu0 0.0
  %844 = vmatpush2.msra.mxu0 0.0
  %845 = vmatprep.subr.mxu0 0.0
  %846 = vmatpush2.msra.mxu0 0.0
  %847 = vmatprep.subr.mxu0 0.0
  %848 = vmatpush2.msra.mxu0 0.0
  %849 = vmatprep.subr.mxu0 0.0
  %850 = vmatpush2.msra.mxu0 0.0
  %851 = vmatprep.subr.mxu0 0.0
  %852 = vmatpush2.msra.mxu0 0.0
  %853 = vmatprep.subr.mxu0 0.0
  %854 = vmatpush2.msra.mxu0 0.0
  %855 = vmatprep.mubr.f32.mxu0 0.0
  %856 = vmatmul.mubr.f32.gmra.mxu0 %v789
  %v857 = vpop.f32.mrf.mxu0
  %v858 = vadd.f32 0.0, %v857
  %v859 = vpop.f32.mrf.mxu0
  %860 = vdwg.mxu0
  %v861 = vmax.f32 %v858, 0.0
  %vm862 = vcmask 31744
  %v864 = vsel %vm862, %v776, 0
  %v867 = vsel %vm862, %v777, 0
  %vm869 = vcmask 1043456
  %v871 = vsel %vm869, %v861, 0
  %873 = vmatprep.subr.mxu0 0.0
  %874 = vmatpush1.msra.mxu0 0.0
  %875 = vmatprep.subr.mxu0 0.0
  %876 = vmatpush1.msra.mxu0 0.0
  %877 = vmatprep.subr.mxu0 0.0
  %878 = vmatpush1.msra.mxu0 0.0
  %879 = vmatprep.subr.mxu0 0.0
  %880 = vmatpush1.msra.mxu0 0.0
  %881 = vmatprep.subr.mxu0 0.0
  %882 = vmatpush1.msra.mxu0 0.0
  %883 = vmatprep.subr.mxu0 0.0
  %884 = vmatpush1.msra.mxu0 0.0
  %885 = vmatprep.subr.mxu0 0.0
  %886 = vmatpush1.msra.mxu0 0.0
  %887 = vmatprep.subr.mxu0 0.0
  %888 = vmatpush1.msra.mxu0 0.0
  %889 = vmatprep.subr.mxu0 0.0
  %890 = vmatpush1.msra.mxu0 0.0
  %891 = vmatprep.subr.mxu0 0.0
  %892 = vmatpush1.msra.mxu0 0.0
  %893 = vmatprep.subr.mxu0 0.0
  %894 = vmatpush1.msra.mxu0 0.0
  %895 = vmatprep.subr.mxu0 0.0
  %896 = vmatpush1.msra.mxu0 0.0
  %897 = vmatprep.subr.mxu0 0.0
  %898 = vmatpush1.msra.mxu0 0.0
  %899 = vmatprep.subr.mxu0 0.0
  %900 = vmatpush1.msra.mxu0 0.0
  %901 = vmatprep.subr.mxu0 0.0
  %902 = vmatpush1.msra.mxu0 0.0
  %903 = vmatprep.subr.mxu0 0.0
  %904 = vmatpush1.msra.mxu0 %v871
  %905 = vmatprep.subr.mxu0 0.0
  %906 = vmatpush2.msra.mxu0 0.0
  %907 = vmatprep.subr.mxu0 0.0
  %908 = vmatpush2.msra.mxu0 0.0
  %909 = vmatprep.subr.mxu0 0.0
  %910 = vmatpush2.msra.mxu0 0.0
  %911 = vmatprep.subr.mxu0 0.0
  %912 = vmatpush2.msra.mxu0 0.0
  %913 = vmatprep.subr.mxu0 0.0
  %914 = vmatpush2.msra.mxu0 0.0
  %915 = vmatprep.subr.mxu0 0.0
  %916 = vmatpush2.msra.mxu0 0.0
  %917 = vmatprep.subr.mxu0 0.0
  %918 = vmatpush2.msra.mxu0 0.0
  %919 = vmatprep.subr.mxu0 0.0
  %920 = vmatpush2.msra.mxu0 0.0
  %921 = vmatprep.subr.mxu0 0.0
  %922 = vmatpush2.msra.mxu0 0.0
  %923 = vmatprep.subr.mxu0 0.0
  %924 = vmatpush2.msra.mxu0 0.0
  %925 = vmatprep.subr.mxu0 0.0
  %926 = vmatpush2.msra.mxu0 0.0
  %927 = vmatprep.subr.mxu0 0.0
  %928 = vmatpush2.msra.mxu0 0.0
  %929 = vmatprep.subr.mxu0 0.0
  %930 = vmatpush2.msra.mxu0 0.0
  %931 = vmatprep.subr.mxu0 0.0
  %932 = vmatpush2.msra.mxu0 0.0
  %933 = vmatprep.subr.mxu0 0.0
  %934 = vmatpush2.msra.mxu0 0.0
  %935 = vmatprep.subr.mxu0 0.0
  %936 = vmatpush2.msra.mxu0 0.0
  %937 = vmatprep.mubr.f32.mxu0 0.0
  %938 = vmatmul.mubr.f32.gmra.mxu0 %v864
  %v939 = vpop.f32.mrf.mxu0
  %v940 = vadd.f32 0.0, %v939
  %v941 = vpop.f32.mrf.mxu0
  %942 = vmatprep.mubr.f32.mxu0 0.0
  %943 = vmatmul.mubr.f32.gmra.mxu0 %v867
  %v944 = vpop.f32.mrf.mxu0
  %v945 = vadd.f32 0.0, %v944
  %v946 = vpop.f32.mrf.mxu0
  %947 = vdwg.mxu0
  %v948 = vxor.u32 %v940, 2147483648
  %v949 = vxor.u32 %v945, 2147483648
  %v950 = vmul.f32 %v948, 1.442695
  %v951 = vpow.pop %v950
  %v952 = vmul.f32 %v949, 1.442695
  %v953 = vpow.pop %v952
  %v954 = vadd.f32 %v951, 1.0
  %v955 = vadd.f32 %v953, 1.0
  %v956 = vrcp.pop %v954
  %v957 = vmul.f32 1.0, %v956
  %v958 = vrcp.pop %v955
  %v959 = vmul.f32 1.0, %v958
  %961 = vset.pattern.permute.xlu0 0
  %962 = vperm.xlu0 %961, %v957
  %v963 = vpop.permute.xlu0 %962
  %966 = vset.pattern.permute.xlu0 0
  %967 = vperm.xlu0 %966, %v959
  %v968 = vpop.permute.xlu0 %967
  %v970 = vmul.f32 %v767, %v963
  %v971 = vmul.f32 %v772, %v968
  %v972 = vadd.f32 %v970, %v298
  %v973 = vadd.f32 %v971, %v303
  %974 = vst.msk [vmem:[%s14] sm:$0xff] %vm778, %v972
  %975 = vst.msk [vmem:[%s14 + $0x8] sm:$0xff] %vm778, %v973
  %978 = vrot.lane.b32.xlu0 %v767, 112
  %v979 = vpop.permute.xlu0 %978
  %980 = vrot.lane.b32.xlu0 %v772, 112
  %v981 = vpop.permute.xlu0 %980
  %v984 = vsel %vm778, %v979, 0.0
  %985 = vadd.xlane.f32.xlu0 %v984
  %v986 = vpop.xlane.xlu0 %985
  %v987 = vsel %vm778, %v981, 0.0
  %988 = vadd.xlane.f32.xlu0 %v987
  %v989 = vpop.xlane.xlu0 %988
  %v990 = vmul.f32 %v986, %v785
  %v991 = vmul.f32 %v989, %v785
  %992 = vmatprep.subr.mxu0 0.0
  %993 = vmatpush1.msra.mxu0 0.0
  %994 = vmatprep.subr.mxu0 0.0
  %995 = vmatpush1.msra.mxu0 0.0
  %996 = vmatprep.subr.mxu0 0.0
  %997 = vmatpush1.msra.mxu0 0.0
  %998 = vmatprep.subr.mxu0 0.0
  %999 = vmatpush1.msra.mxu0 0.0
  %1000 = vmatprep.subr.mxu0 0.0
  %1001 = vmatpush1.msra.mxu0 0.0
  %1002 = vmatprep.subr.mxu0 0.0
  %1003 = vmatpush1.msra.mxu0 0.0
  %1004 = vmatprep.subr.mxu0 0.0
  %1005 = vmatpush1.msra.mxu0 0.0
  %1006 = vmatprep.subr.mxu0 0.0
  %1007 = vmatpush1.msra.mxu0 0.0
  %1008 = vmatprep.subr.mxu0 0.0
  %1009 = vmatpush1.msra.mxu0 0.0
  %1010 = vmatprep.subr.mxu0 0.0
  %1011 = vmatpush1.msra.mxu0 0.0
  %1012 = vmatprep.subr.mxu0 0.0
  %1013 = vmatpush1.msra.mxu0 0.0
  %1014 = vmatprep.subr.mxu0 0.0
  %1015 = vmatpush1.msra.mxu0 0.0
  %1016 = vmatprep.subr.mxu0 0.0
  %1017 = vmatpush1.msra.mxu0 0.0
  %1018 = vmatprep.subr.mxu0 0.0
  %1019 = vmatpush1.msra.mxu0 0.0
  %1020 = vmatprep.subr.mxu0 0.0
  %1021 = vmatpush1.msra.mxu0 %v991
  %1022 = vmatprep.subr.mxu0 0.0
  %1023 = vmatpush1.msra.mxu0 %v990
  %1024 = vmatprep.subr.mxu0 0.0
  %1025 = vmatpush2.msra.mxu0 0.0
  %1026 = vmatprep.subr.mxu0 0.0
  %1027 = vmatpush2.msra.mxu0 0.0
  %1028 = vmatprep.subr.mxu0 0.0
  %1029 = vmatpush2.msra.mxu0 0.0
  %1030 = vmatprep.subr.mxu0 0.0
  %1031 = vmatpush2.msra.mxu0 0.0
  %1032 = vmatprep.subr.mxu0 0.0
  %1033 = vmatpush2.msra.mxu0 0.0
  %1034 = vmatprep.subr.mxu0 0.0
  %1035 = vmatpush2.msra.mxu0 0.0
  %1036 = vmatprep.subr.mxu0 0.0
  %1037 = vmatpush2.msra.mxu0 0.0
  %1038 = vmatprep.subr.mxu0 0.0
  %1039 = vmatpush2.msra.mxu0 0.0
  %1040 = vmatprep.subr.mxu0 0.0
  %1041 = vmatpush2.msra.mxu0 0.0
  %1042 = vmatprep.subr.mxu0 0.0
  %1043 = vmatpush2.msra.mxu0 0.0
  %1044 = vmatprep.subr.mxu0 0.0
  %1045 = vmatpush2.msra.mxu0 0.0
  %1046 = vmatprep.subr.mxu0 0.0
  %1047 = vmatpush2.msra.mxu0 0.0
  %1048 = vmatprep.subr.mxu0 0.0
  %1049 = vmatpush2.msra.mxu0 0.0
  %1050 = vmatprep.subr.mxu0 0.0
  %1051 = vmatpush2.msra.mxu0 0.0
  %1052 = vmatprep.subr.mxu0 0.0
  %1053 = vmatpush2.msra.mxu0 0.0
  %1054 = vmatprep.subr.mxu0 0.0
  %1055 = vmatpush2.msra.mxu0 0.0
  %1056 = vmatprep.mubr.f32.mxu0 0.0
  %1057 = vmatmul.mubr.f32.gmra.mxu0 %v789
  %v1058 = vpop.f32.mrf.mxu0
  %v1059 = vadd.f32 0.0, %v1058
  %v1060 = vpop.f32.mrf.mxu0
  %1061 = vdwg.mxu0
  %v1062 = vmax.f32 %v1059, 0.0
  %v1064 = vsel %vm869, %v1062, 0
  %1066 = vmatprep.subr.mxu0 0.0
  %1067 = vmatpush1.msra.mxu0 0.0
  %1068 = vmatprep.subr.mxu0 0.0
  %1069 = vmatpush1.msra.mxu0 0.0
  %1070 = vmatprep.subr.mxu0 0.0
  %1071 = vmatpush1.msra.mxu0 0.0
  %1072 = vmatprep.subr.mxu0 0.0
  %1073 = vmatpush1.msra.mxu0 0.0
  %1074 = vmatprep.subr.mxu0 0.0
  %1075 = vmatpush1.msra.mxu0 0.0
  %1076 = vmatprep.subr.mxu0 0.0
  %1077 = vmatpush1.msra.mxu0 0.0
  %1078 = vmatprep.subr.mxu0 0.0
  %1079 = vmatpush1.msra.mxu0 0.0
  %1080 = vmatprep.subr.mxu0 0.0
  %1081 = vmatpush1.msra.mxu0 0.0
  %1082 = vmatprep.subr.mxu0 0.0
  %1083 = vmatpush1.msra.mxu0 0.0
  %1084 = vmatprep.subr.mxu0 0.0
  %1085 = vmatpush1.msra.mxu0 0.0
  %1086 = vmatprep.subr.mxu0 0.0
  %1087 = vmatpush1.msra.mxu0 0.0
  %1088 = vmatprep.subr.mxu0 0.0
  %1089 = vmatpush1.msra.mxu0 0.0
  %1090 = vmatprep.subr.mxu0 0.0
  %1091 = vmatpush1.msra.mxu0 0.0
  %1092 = vmatprep.subr.mxu0 0.0
  %1093 = vmatpush1.msra.mxu0 0.0
  %1094 = vmatprep.subr.mxu0 0.0
  %1095 = vmatpush1.msra.mxu0 0.0
  %1096 = vmatprep.subr.mxu0 0.0
  %1097 = vmatpush1.msra.mxu0 %v1064
  %1098 = vmatprep.subr.mxu0 0.0
  %1099 = vmatpush2.msra.mxu0 0.0
  %1100 = vmatprep.subr.mxu0 0.0
  %1101 = vmatpush2.msra.mxu0 0.0
  %1102 = vmatprep.subr.mxu0 0.0
  %1103 = vmatpush2.msra.mxu0 0.0
  %1104 = vmatprep.subr.mxu0 0.0
  %1105 = vmatpush2.msra.mxu0 0.0
  %1106 = vmatprep.subr.mxu0 0.0
  %1107 = vmatpush2.msra.mxu0 0.0
  %1108 = vmatprep.subr.mxu0 0.0
  %1109 = vmatpush2.msra.mxu0 0.0
  %1110 = vmatprep.subr.mxu0 0.0
  %1111 = vmatpush2.msra.mxu0 0.0
  %1112 = vmatprep.subr.mxu0 0.0
  %1113 = vmatpush2.msra.mxu0 0.0
  %1114 = vmatprep.subr.mxu0 0.0
  %1115 = vmatpush2.msra.mxu0 0.0
  %1116 = vmatprep.subr.mxu0 0.0
  %1117 = vmatpush2.msra.mxu0 0.0
  %1118 = vmatprep.subr.mxu0 0.0
  %1119 = vmatpush2.msra.mxu0 0.0
  %1120 = vmatprep.subr.mxu0 0.0
  %1121 = vmatpush2.msra.mxu0 0.0
  %1122 = vmatprep.subr.mxu0 0.0
  %1123 = vmatpush2.msra.mxu0 0.0
  %1124 = vmatprep.subr.mxu0 0.0
  %1125 = vmatpush2.msra.mxu0 0.0
  %1126 = vmatprep.subr.mxu0 0.0
  %1127 = vmatpush2.msra.mxu0 0.0
  %1128 = vmatprep.subr.mxu0 0.0
  %1129 = vmatpush2.msra.mxu0 0.0
  %1130 = vmatprep.mubr.f32.mxu0 0.0
  %1131 = vmatmul.mubr.f32.gmra.mxu0 %v864
  %v1132 = vpop.f32.mrf.mxu0
  %v1133 = vadd.f32 0.0, %v1132
  %v1134 = vpop.f32.mrf.mxu0
  %1135 = vmatprep.mubr.f32.mxu0 0.0
  %1136 = vmatmul.mubr.f32.gmra.mxu0 %v867
  %v1137 = vpop.f32.mrf.mxu0
  %v1138 = vadd.f32 0.0, %v1137
  %v1139 = vpop.f32.mrf.mxu0
  %1140 = vdwg.mxu0
  %v1141 = vxor.u32 %v1133, 2147483648
  %v1142 = vxor.u32 %v1138, 2147483648
  %v1143 = vmul.f32 %v1141, 1.442695
  %v1144 = vpow.pop %v1143
  %v1145 = vmul.f32 %v1142, 1.442695
  %v1146 = vpow.pop %v1145
  %v1147 = vadd.f32 %v1144, 1.0
  %v1148 = vadd.f32 %v1146, 1.0
  %v1149 = vrcp.pop %v1147
  %v1150 = vmul.f32 1.0, %v1149
  %v1151 = vrcp.pop %v1148
  %v1152 = vmul.f32 1.0, %v1151
  %1154 = vset.pattern.permute.xlu0 0
  %1155 = vperm.xlu0 %1154, %v1150
  %v1156 = vpop.permute.xlu0 %1155
  %1159 = vset.pattern.permute.xlu0 0
  %1160 = vperm.xlu0 %1159, %v1152
  %v1161 = vpop.permute.xlu0 %1160
  %v1163 = vmul.f32 %v767, %v1156
  %v1164 = vmul.f32 %v772, %v1161
  %v1165 = vadd.f32 %v1163, %v298
  %v1166 = vadd.f32 %v1164, %v303
  %vm1167 = vcmask 261248
  %1168 = vst.msk [vmem:[%s14] sm:$0xff] %vm1167, %v1165
  %1169 = vst.msk [vmem:[%s14 + $0x8] sm:$0xff] %vm1167, %v1166
  // Predicated region
  $region58: #{_lambda_.6} parent=0 // pred_check
    _
  $region59: #{_lambda_.6} parent=0 // pred_check_branch
    %1171 = sbr.rel (0) target = $region61
  $region60: #{_lambda_.6} parent=0 // pred_region
    _
  $region61: #{_lambda_.6} parent=0 // pred_fallthru
    _
  // Predicated region
  $region62: #{_lambda_.6} parent=0 // pred_check
    _
  $region63: #{_lambda_.6} parent=0 // pred_check_branch
    %1173 = sbr.rel (0) target = $region65
  $region64: #{_lambda_.6} parent=0 // pred_region
    _
  $region65: #{_lambda_.6} parent=0 // pred_fallthru
    _

</llo_original>
